<compile_context>
chip_gen: v7x
topology: tpu7x:2x2x1
jax: 0.10.0
libtpu: 0.0.40
codegen_flags: <defaults>
</compile_context>

<pallas_src>
import functools

import jax
import jax.numpy as jnp
from jax import lax
from jax.experimental import pallas as pl
from jax.experimental.pallas import tpu as pltpu

VMEM_SPEC = pl.BlockSpec(memory_space=pltpu.MemorySpace.VMEM)

N_BRANCH_ARGS = 16  # number of per-branch inputs fed to the kernel


# ----------------------------------------------------------------------------
# Fused Pallas kernel (hot path: everything)
# ----------------------------------------------------------------------------
def _branch_compute(refs, *, heads):
    """One branch, fully in-register/VMEM: GCN1 -> GAT -> GCN2 -> conv readout."""
    (x_ref, a_ref, ew_ref, m_ref, g1w_ref, g1b_ref, gatw_ref, adst_ref,
     asrc_ref, gatc_ref, gatb_ref, g2w_ref, g2b_ref, cnnw1_ref, cnnw2_ref,
     cnnb_ref) = refs
    f32 = jnp.float32

    x = x_ref[...]                      # (N, Fin)
    a_norm = a_ref[...]                 # (N, N) gcn-normalized adjacency
    ew = ew_ref[...]                    # (N, N) dense edge attribute
    mask = m_ref[...]                   # (N, N) edge mask (incl. self loops)
    n, fin = x.shape

    # --- GCNConv 1 + relu: relu(A_norm @ (X @ W1) + b1)
    xw = jnp.dot(x, g1w_ref[...], preferred_element_type=f32)
    x_f1 = jnp.maximum(
        jnp.dot(a_norm, xw, preferred_element_type=f32) + g1b_ref[...], 0.0)

    # --- GATConv (H heads, concat=False -> head mean) + bias + relu, batched.
    # Head-major projections: (H, N, F) via batched matmul, no lane slicing.
    x_b = jnp.broadcast_to(x_f1[None, :, :], (heads, n, fin))        # hoisted once
    h_all = jnp.einsum('hnd,hdf->hnf', x_b, gatw_ref[...],
                       preferred_element_type=f32)                    # (H, N, F)
    # Per-node attention terms, all heads at once:
    a_d = jnp.einsum('hnf,hkf->hnk', h_all, adst_ref[...],
                     preferred_element_type=f32)                      # (H, N, 1)
    a_s = jnp.einsum('hkf,hjf->hkj', asrc_ref[...], h_all,
                     preferred_element_type=f32)                      # (H, 1, N)

    # score[h,i,j] = a_dst_h.h_i + a_src_h.h_j + c_h * edge_w[i,j]
    score = a_d + a_s + gatc_ref[...] * ew[None, :, :]                # (H, N, N)
    score = jnp.where(score > 0, score, 0.2 * score)                  # LeakyReLU(0.2)
    score = jnp.where(mask[None, :, :] > 0, score, f32(-1e30))
    score = score - jnp.max(score, axis=-1, keepdims=True)
    p = jnp.exp(score)                                                # masked ~ 0
    # softmax denominator, with the mean-over-heads folded in:
    inv = pl.reciprocal(jnp.sum(p, axis=-1, keepdims=True) * f32(heads),
                        approx=False)
    p = p * inv
    ctx = jnp.einsum('hij,hjf->hif', p, h_all,
                     preferred_element_type=f32)                      # (H, N, F)
    x_att = jnp.maximum(jnp.sum(ctx, axis=0) + gatb_ref[...], 0.0)    # (N, F)

    # --- GCNConv 2 + relu
    xw2 = jnp.dot(x_att, g2w_ref[...], preferred_element_type=f32)
    x_f2 = jnp.maximum(
        jnp.dot(a_norm, xw2, preferred_element_type=f32) + g2b_ref[...], 0.0)

    # --- Conv1d(kernel=(F,1)) readout: two matmuls summed (no lane concat)
    fea = (jnp.dot(x_f1, cnnw1_ref[...], preferred_element_type=f32)
           + jnp.dot(x_f2, cnnw2_ref[...], preferred_element_type=f32)
           + cnnb_ref[...])                                           # (N, OC)
    return fea


def _fused_forward_kernel(*refs, heads):
    cir_refs = refs[:N_BRANCH_ARGS]
    dis_refs = refs[N_BRANCH_ARGS:2 * N_BRANCH_ARGS]
    scores_ref, cir_fea_ref, dis_fea_ref = refs[2 * N_BRANCH_ARGS:]

    cir_fea = _branch_compute(cir_refs, heads=heads)
    dis_fea = _branch_compute(dis_refs, heads=heads)

    # Association scores: cir_fea @ dis_fea.T (contract last dims, no transpose).
    scores_ref[...] = lax.dot_general(
        cir_fea, dis_fea, (((1,), (1,)), ((), ())),
        preferred_element_type=jnp.float32)
    cir_fea_ref[...] = cir_fea
    dis_fea_ref[...] = dis_fea


def gcn_model_forward(prep_cir, prep_dis, *, heads, nc, nd, oc):
    """Single fused pallas_call for the whole forward pass."""
    kernel = functools.partial(_fused_forward_kernel, heads=heads)
    n_in = len(prep_cir) + len(prep_dis)
    return pl.pallas_call(
        kernel,
        out_shape=(jax.ShapeDtypeStruct((nc, nd), jnp.float32),
                   jax.ShapeDtypeStruct((nc, oc), jnp.float32),
                   jax.ShapeDtypeStruct((nd, oc), jnp.float32)),
        in_specs=[VMEM_SPEC] * n_in,
        out_specs=(VMEM_SPEC, VMEM_SPEC, VMEM_SPEC),
    )(*prep_cir, *prep_dis)


# ----------------------------------------------------------------------------
# Plain-JAX glue (computed ONCE per graph / per parameter set)
# ----------------------------------------------------------------------------
def gcn_normalize(w_adj):
    """PyG gcn_norm: add unit self loops, symmetric deg^-1/2 normalization."""
    n = w_adj.shape[0]
    adj = w_adj + jnp.eye(n, dtype=jnp.float32)
    deg = jnp.sum(adj, axis=1)
    dinv = jnp.where(deg > 0, deg ** -0.5, 0.0)
    return dinv[:, None] * adj * dinv[None, :]


def gat_dense_graph(w_adj, mask):
    """Dense edge-attr + mask with PyG 'mean' fill for self-loop edge attrs."""
    n = w_adj.shape[0]
    num_e = jnp.maximum(jnp.sum(mask), 1.0)
    mean_w = jnp.sum(w_adj) / num_e
    ew = w_adj + mean_w * jnp.eye(n, dtype=jnp.float32)
    m = mask + jnp.eye(n, dtype=jnp.float32)
    return ew, m


def prepare_graph(w_adj, mask):
    a_norm = gcn_normalize(w_adj)
    ew, m = gat_dense_graph(w_adj, mask)
    return a_norm, ew, m


def prepare_branch_inputs(x, graph, params, heads, feat):
    """Hoisted pre-processing: head-major GAT weights, split conv weights, biases."""
    a_norm, ew, m = graph
    # (Fin, H*F) -> (H, Fin, F): head-major projection weights.
    gatw_heads = jnp.transpose(params["gat_w"].reshape(feat, heads, feat), (1, 0, 2))
    adst3 = params["gat_adst"].reshape(heads, 1, feat)
    asrc3 = params["gat_asrc"].reshape(heads, 1, feat)
    gatc3 = params["gat_c"].reshape(heads, 1, 1)
    cnnw1 = jnp.transpose(params["cnn_w"][:, 0, :])   # (F, OC), applies to x_f1
    cnnw2 = jnp.transpose(params["cnn_w"][:, 1, :])   # (F, OC), applies to x_f2
    return (x, a_norm, ew, m,
            params["gcn1_w"], params["gcn1_b"].reshape(1, -1),
            gatw_heads, adst3, asrc3, gatc3,
            params["gat_b"].reshape(1, -1),
            params["gcn2_w"], params["gcn2_b"].reshape(1, -1),
            cnnw1, cnnw2, params["cnn_b"].reshape(1, -1))


def make_graph(key, n, density=0.3):
    sim = jax.random.uniform(key, (n, n), dtype=jnp.float32)
    sim = (sim + sim.T) * 0.5
    mask = (sim > (1.0 - density)).astype(jnp.float32)
    mask = mask * (1.0 - jnp.eye(n, dtype=jnp.float32))   # self loops added by layers
    return sim * mask, mask


def init_branch_params(key, f, heads, out_channels, gcn_layers):
    ks = jax.random.split(key, 12)
    scale = 0.1
    lin_edge = scale * jax.random.normal(ks[7], (heads, f), dtype=jnp.float32)
    att_edge = scale * jax.random.normal(ks[8], (heads, f), dtype=jnp.float32)
    return {
        "gcn1_w": scale * jax.random.normal(ks[0], (f, f), dtype=jnp.float32),
        "gcn1_b": scale * jax.random.normal(ks[1], (f,), dtype=jnp.float32),
        "gcn2_w": scale * jax.random.normal(ks[2], (f, f), dtype=jnp.float32),
        "gcn2_b": scale * jax.random.normal(ks[3], (f,), dtype=jnp.float32),
        "gat_w": scale * jax.random.normal(ks[4], (f, heads * f), dtype=jnp.float32),
        "gat_asrc": scale * jax.random.normal(ks[5], (heads, f), dtype=jnp.float32),
        "gat_adst": scale * jax.random.normal(ks[6], (heads, f), dtype=jnp.float32),
        # per-head scalar coefficient of the (1-dim) edge attribute
        # (equivalent to PyG GATConv(edge_dim=1) with bias-free edge lin):
        "gat_c": jnp.sum(lin_edge * att_edge, axis=1).reshape(1, heads),
        "gat_b": scale * jax.random.normal(ks[9], (f,), dtype=jnp.float32),
        "cnn_w": scale * jax.random.normal(ks[10], (out_channels, gcn_layers, f),
                                           dtype=jnp.float32),
        "cnn_b": scale * jax.random.normal(ks[11], (out_channels,), dtype=jnp.float32),
    }


# ----------------------------------------------------------------------------
if __name__ == "__main__":
    # args: circRNA_number=32, disease_number=24, fcir=16, fdis=8,
    #       gcn_layers=2, out_channels=8, GAT heads=4
    circRNA_number, disease_number = 32, 24
    fcir, fdis = 16, 8
    gcn_layers, out_channels, heads = 2, 8, 4

    root = jax.random.PRNGKey(0)
    k_xc, k_xd, k_cc, k_dd, k_pc, k_pd = jax.random.split(root, 6)

    # synthetic node features (stand-in for torch.manual_seed(1); torch.randn)
    x_cir = jax.random.normal(k_xc, (circRNA_number, fcir), dtype=jnp.float32)
    x_dis = jax.random.normal(k_xd, (disease_number, fdis), dtype=jnp.float32)

    # synthetic similarity graphs (data['cc'] / data['dd']) as dense weighted adjacency
    cc_w, cc_mask = make_graph(k_cc, circRNA_number)
    dd_w, dd_mask = make_graph(k_dd, disease_number)

    cir_params = init_branch_params(k_pc, fcir, heads, out_channels, gcn_layers)
    dis_params = init_branch_params(k_pd, fdis, heads, out_channels, gcn_layers)

    # --- precompute (once) everything that is static per graph / param set
    cc_graph = prepare_graph(cc_w, cc_mask)
    dd_graph = prepare_graph(dd_w, dd_mask)
    prep_cir = prepare_branch_inputs(x_cir, cc_graph, cir_params, heads, fcir)
    prep_dis = prepare_branch_inputs(x_dis, dd_graph, dis_params, heads, fdis)

    # --- single fused Pallas kernel for the whole forward pass
    scores, cir_fea, dis_fea = gcn_model_forward(
        prep_cir, prep_dis, heads=heads,
        nc=circRNA_number, nd=disease_number, oc=out_channels)
    jax.block_until_ready((scores, cir_fea, dis_fea))

    assert scores.shape == (circRNA_number, disease_number)
    assert cir_fea.shape == (circRNA_number, out_channels)
    assert dis_fea.shape == (disease_number, out_channels)
    assert bool(jnp.all(jnp.isfinite(scores)))
    assert bool(jnp.all(jnp.isfinite(cir_fea)))
    assert bool(jnp.all(jnp.isfinite(dis_fea)))
    print("KERNEL_OK")
</pallas_src>

<mosaic_0001>
module attributes {stable_mosaic.version = 11 : i64} {
  func.func @_fused_forward_kernel(%arg0: memref<32x16xf32, #tpu.memory_space<vmem>>, %arg1: memref<32x32xf32, #tpu.memory_space<vmem>>, %arg2: memref<32x32xf32, #tpu.memory_space<vmem>>, %arg3: memref<32x32xf32, #tpu.memory_space<vmem>>, %arg4: memref<16x16xf32, #tpu.memory_space<vmem>>, %arg5: memref<1x16xf32, #tpu.memory_space<vmem>>, %arg6: memref<4x16x16xf32, #tpu.memory_space<vmem>>, %arg7: memref<4x1x16xf32, #tpu.memory_space<vmem>>, %arg8: memref<4x1x16xf32, #tpu.memory_space<vmem>>, %arg9: memref<4x1x1xf32, #tpu.memory_space<vmem>>, %arg10: memref<1x16xf32, #tpu.memory_space<vmem>>, %arg11: memref<16x16xf32, #tpu.memory_space<vmem>>, %arg12: memref<1x16xf32, #tpu.memory_space<vmem>>, %arg13: memref<16x8xf32, #tpu.memory_space<vmem>>, %arg14: memref<16x8xf32, #tpu.memory_space<vmem>>, %arg15: memref<1x8xf32, #tpu.memory_space<vmem>>, %arg16: memref<24x8xf32, #tpu.memory_space<vmem>>, %arg17: memref<24x24xf32, #tpu.memory_space<vmem>>, %arg18: memref<24x24xf32, #tpu.memory_space<vmem>>, %arg19: memref<24x24xf32, #tpu.memory_space<vmem>>, %arg20: memref<8x8xf32, #tpu.memory_space<vmem>>, %arg21: memref<1x8xf32, #tpu.memory_space<vmem>>, %arg22: memref<4x8x8xf32, #tpu.memory_space<vmem>>, %arg23: memref<4x1x8xf32, #tpu.memory_space<vmem>>, %arg24: memref<4x1x8xf32, #tpu.memory_space<vmem>>, %arg25: memref<4x1x1xf32, #tpu.memory_space<vmem>>, %arg26: memref<1x8xf32, #tpu.memory_space<vmem>>, %arg27: memref<8x8xf32, #tpu.memory_space<vmem>>, %arg28: memref<1x8xf32, #tpu.memory_space<vmem>>, %arg29: memref<8x8xf32, #tpu.memory_space<vmem>>, %arg30: memref<8x8xf32, #tpu.memory_space<vmem>>, %arg31: memref<1x8xf32, #tpu.memory_space<vmem>>, %arg32: memref<32x24xf32, #tpu.memory_space<vmem>>, %arg33: memref<32x8xf32, #tpu.memory_space<vmem>>, %arg34: memref<24x8xf32, #tpu.memory_space<vmem>>) attributes {dimension_semantics = [], scalar_prefetch = 0 : i64, scratch_operands = 0 : i64, tpu.core_type = #tpu.core_type<tc>} {
    %c0 = arith.constant 0 : index
    %c0_0 = arith.constant 0 : index
    %0 = vector.load %arg0[%c0, %c0_0] : memref<32x16xf32, #tpu.memory_space<vmem>>, vector<32x16xf32>
    %c0_1 = arith.constant 0 : index
    %c0_2 = arith.constant 0 : index
    %1 = vector.load %arg1[%c0_1, %c0_2] : memref<32x32xf32, #tpu.memory_space<vmem>>, vector<32x32xf32>
    %c0_3 = arith.constant 0 : index
    %c0_4 = arith.constant 0 : index
    %2 = vector.load %arg2[%c0_3, %c0_4] : memref<32x32xf32, #tpu.memory_space<vmem>>, vector<32x32xf32>
    %c0_5 = arith.constant 0 : index
    %c0_6 = arith.constant 0 : index
    %3 = vector.load %arg3[%c0_5, %c0_6] : memref<32x32xf32, #tpu.memory_space<vmem>>, vector<32x32xf32>
    %c0_7 = arith.constant 0 : index
    %c0_8 = arith.constant 0 : index
    %4 = vector.load %arg4[%c0_7, %c0_8] : memref<16x16xf32, #tpu.memory_space<vmem>>, vector<16x16xf32>
    %cst = arith.constant dense<0.000000e+00> : vector<32x16xf32>
    %5 = tpu.matmul %0, %4, %cst {dimension_numbers = #tpu.dot_dimension_numbers<[1], [0], [0], [1], [0, 0, 1, 1], [], []>} : vector<32x16xf32>, vector<16x16xf32>, vector<32x16xf32> -> vector<32x16xf32>
    %cst_9 = arith.constant dense<0.000000e+00> : vector<32x16xf32>
    %6 = tpu.matmul %1, %5, %cst_9 {dimension_numbers = #tpu.dot_dimension_numbers<[1], [0], [0], [1], [0, 0, 1, 1], [], []>} : vector<32x32xf32>, vector<32x16xf32>, vector<32x16xf32> -> vector<32x16xf32>
    %c0_10 = arith.constant 0 : index
    %c0_11 = arith.constant 0 : index
    %7 = vector.load %arg5[%c0_10, %c0_11] : memref<1x16xf32, #tpu.memory_space<vmem>>, vector<1x16xf32>
    %8 = vector.broadcast %7 : vector<1x16xf32> to vector<32x16xf32>
    %9 = arith.addf %6, %8 : vector<32x16xf32>
    %cst_12 = arith.constant 0.000000e+00 : f32
    %10 = vector.broadcast %cst_12 : f32 to vector<32x16xf32>
    %11 = arith.maximumf %9, %10 : vector<32x16xf32>
    %12 = vector.shape_cast %11 : vector<32x16xf32> to vector<1x32x16xf32>
    %13 = vector.shape_cast %12 : vector<1x32x16xf32> to vector<1x32x16xf32>
    %14 = vector.broadcast %13 : vector<1x32x16xf32> to vector<4x32x16xf32>
    %c0_13 = arith.constant 0 : index
    %c0_14 = arith.constant 0 : index
    %c0_15 = arith.constant 0 : index
    %15 = vector.load %arg6[%c0_13, %c0_14, %c0_15] : memref<4x16x16xf32, #tpu.memory_space<vmem>>, vector<4x16x16xf32>
    "tpu.trace_start"() <{level = 10 : i32, message = "hnd,hdf->hnf"}> : () -> ()
    %cst_16 = arith.constant dense<0.000000e+00> : vector<4x32x16xf32>
    %16 = tpu.matmul %14, %15, %cst_16 {dimension_numbers = #tpu.dot_dimension_numbers<[2], [1], [1], [2], [0, 0, 0, 1, 1, 2], [0], [0]>} : vector<4x32x16xf32>, vector<4x16x16xf32>, vector<4x32x16xf32> -> vector<4x32x16xf32>
    "tpu.trace_stop"() : () -> ()
    %c0_17 = arith.constant 0 : index
    %c0_18 = arith.constant 0 : index
    %c0_19 = arith.constant 0 : index
    %17 = vector.load %arg7[%c0_17, %c0_18, %c0_19] : memref<4x1x16xf32, #tpu.memory_space<vmem>>, vector<4x1x16xf32>
    "tpu.trace_start"() <{level = 10 : i32, message = "hnf,hkf->hnk"}> : () -> ()
    %cst_20 = arith.constant dense<0.000000e+00> : vector<4x32x1xf32>
    %18 = tpu.matmul %16, %17, %cst_20 {dimension_numbers = #tpu.dot_dimension_numbers<[2], [2], [1], [1], [0, 0, 0, 1, 1, 1], [0], [0]>} : vector<4x32x16xf32>, vector<4x1x16xf32>, vector<4x32x1xf32> -> vector<4x32x1xf32>
    "tpu.trace_stop"() : () -> ()
    %c0_21 = arith.constant 0 : index
    %c0_22 = arith.constant 0 : index
    %c0_23 = arith.constant 0 : index
    %19 = vector.load %arg8[%c0_21, %c0_22, %c0_23] : memref<4x1x16xf32, #tpu.memory_space<vmem>>, vector<4x1x16xf32>
    "tpu.trace_start"() <{level = 10 : i32, message = "hkf,hjf->hkj"}> : () -> ()
    %cst_24 = arith.constant dense<0.000000e+00> : vector<4x1x32xf32>
    %20 = tpu.matmul %19, %16, %cst_24 {dimension_numbers = #tpu.dot_dimension_numbers<[2], [2], [1], [1], [0, 0, 0, 1, 1, 1], [0], [0]>} : vector<4x1x16xf32>, vector<4x32x16xf32>, vector<4x1x32xf32> -> vector<4x1x32xf32>
    "tpu.trace_stop"() : () -> ()
    %21 = vector.broadcast %18 : vector<4x32x1xf32> to vector<4x32x32xf32>
    %22 = vector.broadcast %20 : vector<4x1x32xf32> to vector<4x32x32xf32>
    %23 = arith.addf %21, %22 : vector<4x32x32xf32>
    %c0_25 = arith.constant 0 : index
    %c0_26 = arith.constant 0 : index
    %c0_27 = arith.constant 0 : index
    %24 = vector.load %arg9[%c0_25, %c0_26, %c0_27] : memref<4x1x1xf32, #tpu.memory_space<vmem>>, vector<4x1x1xf32>
    %25 = vector.shape_cast %2 : vector<32x32xf32> to vector<1x32x32xf32>
    %26 = vector.broadcast %24 : vector<4x1x1xf32> to vector<4x32x32xf32>
    %27 = vector.broadcast %25 : vector<1x32x32xf32> to vector<4x32x32xf32>
    %28 = arith.mulf %26, %27 : vector<4x32x32xf32>
    %29 = arith.addf %23, %28 : vector<4x32x32xf32>
    %cst_28 = arith.constant 0.000000e+00 : f32
    %30 = vector.broadcast %cst_28 : f32 to vector<4x32x32xf32>
    %31 = arith.cmpf ogt, %29, %30 : vector<4x32x32xf32>
    %cst_29 = arith.constant 2.000000e-01 : f32
    %32 = vector.broadcast %cst_29 : f32 to vector<4x32x32xf32>
    %33 = arith.mulf %32, %29 : vector<4x32x32xf32>
    %34 = arith.select %31, %29, %33 : vector<4x32x32xi1>, vector<4x32x32xf32>
    %35 = vector.shape_cast %3 : vector<32x32xf32> to vector<1x32x32xf32>
    %cst_30 = arith.constant 0.000000e+00 : f32
    %36 = vector.broadcast %cst_30 : f32 to vector<1x32x32xf32>
    %37 = arith.cmpf ogt, %35, %36 : vector<1x32x32xf32>
    %cst_31 = arith.constant -1.000000e+30 : f32
    %38 = vector.shape_cast %37 : vector<1x32x32xi1> to vector<1x32x32xi1>
    %39 = vector.broadcast %38 : vector<1x32x32xi1> to vector<4x32x32xi1>
    %40 = vector.broadcast %cst_31 : f32 to vector<4x32x32xf32>
    %41 = arith.select %39, %34, %40 : vector<4x32x32xi1>, vector<4x32x32xf32>
    %cst_32 = arith.constant dense<0xFF800000> : vector<4x32xf32>
    %42 = vector.multi_reduction <maximumf>, %41, %cst_32 [2] : vector<4x32x32xf32> to vector<4x32xf32>
    %43 = vector.shape_cast %42 : vector<4x32xf32> to vector<4x32x1xf32>
    %44 = vector.broadcast %43 : vector<4x32x1xf32> to vector<4x32x32xf32>
    %45 = arith.subf %41, %44 : vector<4x32x32xf32>
    %46 = math.exp %45 : vector<4x32x32xf32>
    %cst_33 = arith.constant dense<0.000000e+00> : vector<4x32xf32>
    %47 = vector.multi_reduction <add>, %46, %cst_33 [2] : vector<4x32x32xf32> to vector<4x32xf32>
    %48 = vector.shape_cast %47 : vector<4x32xf32> to vector<4x32x1xf32>
    %cst_34 = arith.constant 4.000000e+00 : f32
    %49 = vector.broadcast %cst_34 : f32 to vector<4x32x1xf32>
    %50 = arith.mulf %48, %49 : vector<4x32x1xf32>
    %51 = tpu.reciprocal %50 : vector<4x32x1xf32> -> vector<4x32x1xf32>
    %52 = vector.broadcast %51 : vector<4x32x1xf32> to vector<4x32x32xf32>
    %53 = arith.mulf %46, %52 : vector<4x32x32xf32>
    "tpu.trace_start"() <{level = 10 : i32, message = "hij,hjf->hif"}> : () -> ()
    %cst_35 = arith.constant dense<0.000000e+00> : vector<4x32x16xf32>
    %54 = tpu.matmul %53, %16, %cst_35 {dimension_numbers = #tpu.dot_dimension_numbers<[2], [1], [1], [2], [0, 0, 0, 1, 1, 2], [0], [0]>} : vector<4x32x32xf32>, vector<4x32x16xf32>, vector<4x32x16xf32> -> vector<4x32x16xf32>
    "tpu.trace_stop"() : () -> ()
    %cst_36 = arith.constant dense<0.000000e+00> : vector<32x16xf32>
    %55 = vector.multi_reduction <add>, %54, %cst_36 [0] : vector<4x32x16xf32> to vector<32x16xf32>
    %c0_37 = arith.constant 0 : index
    %c0_38 = arith.constant 0 : index
    %56 = vector.load %arg10[%c0_37, %c0_38] : memref<1x16xf32, #tpu.memory_space<vmem>>, vector<1x16xf32>
    %57 = vector.broadcast %56 : vector<1x16xf32> to vector<32x16xf32>
    %58 = arith.addf %55, %57 : vector<32x16xf32>
    %cst_39 = arith.constant 0.000000e+00 : f32
    %59 = vector.broadcast %cst_39 : f32 to vector<32x16xf32>
    %60 = arith.maximumf %58, %59 : vector<32x16xf32>
    %c0_40 = arith.constant 0 : index
    %c0_41 = arith.constant 0 : index
    %61 = vector.load %arg11[%c0_40, %c0_41] : memref<16x16xf32, #tpu.memory_space<vmem>>, vector<16x16xf32>
    %cst_42 = arith.constant dense<0.000000e+00> : vector<32x16xf32>
    %62 = tpu.matmul %60, %61, %cst_42 {dimension_numbers = #tpu.dot_dimension_numbers<[1], [0], [0], [1], [0, 0, 1, 1], [], []>} : vector<32x16xf32>, vector<16x16xf32>, vector<32x16xf32> -> vector<32x16xf32>
    %cst_43 = arith.constant dense<0.000000e+00> : vector<32x16xf32>
    %63 = tpu.matmul %1, %62, %cst_43 {dimension_numbers = #tpu.dot_dimension_numbers<[1], [0], [0], [1], [0, 0, 1, 1], [], []>} : vector<32x32xf32>, vector<32x16xf32>, vector<32x16xf32> -> vector<32x16xf32>
    %c0_44 = arith.constant 0 : index
    %c0_45 = arith.constant 0 : index
    %64 = vector.load %arg12[%c0_44, %c0_45] : memref<1x16xf32, #tpu.memory_space<vmem>>, vector<1x16xf32>
    %65 = vector.broadcast %64 : vector<1x16xf32> to vector<32x16xf32>
    %66 = arith.addf %63, %65 : vector<32x16xf32>
    %cst_46 = arith.constant 0.000000e+00 : f32
    %67 = vector.broadcast %cst_46 : f32 to vector<32x16xf32>
    %68 = arith.maximumf %66, %67 : vector<32x16xf32>
    %c0_47 = arith.constant 0 : index
    %c0_48 = arith.constant 0 : index
    %69 = vector.load %arg13[%c0_47, %c0_48] : memref<16x8xf32, #tpu.memory_space<vmem>>, vector<16x8xf32>
    %cst_49 = arith.constant dense<0.000000e+00> : vector<32x8xf32>
    %70 = tpu.matmul %11, %69, %cst_49 {dimension_numbers = #tpu.dot_dimension_numbers<[1], [0], [0], [1], [0, 0, 1, 1], [], []>} : vector<32x16xf32>, vector<16x8xf32>, vector<32x8xf32> -> vector<32x8xf32>
    %c0_50 = arith.constant 0 : index
    %c0_51 = arith.constant 0 : index
    %71 = vector.load %arg14[%c0_50, %c0_51] : memref<16x8xf32, #tpu.memory_space<vmem>>, vector<16x8xf32>
    %cst_52 = arith.constant dense<0.000000e+00> : vector<32x8xf32>
    %72 = tpu.matmul %68, %71, %cst_52 {dimension_numbers = #tpu.dot_dimension_numbers<[1], [0], [0], [1], [0, 0, 1, 1], [], []>} : vector<32x16xf32>, vector<16x8xf32>, vector<32x8xf32> -> vector<32x8xf32>
    %73 = arith.addf %70, %72 : vector<32x8xf32>
    %c0_53 = arith.constant 0 : index
    %c0_54 = arith.constant 0 : index
    %74 = vector.load %arg15[%c0_53, %c0_54] : memref<1x8xf32, #tpu.memory_space<vmem>>, vector<1x8xf32>
    %75 = vector.broadcast %74 : vector<1x8xf32> to vector<32x8xf32>
    %76 = arith.addf %73, %75 : vector<32x8xf32>
    %c0_55 = arith.constant 0 : index
    %c0_56 = arith.constant 0 : index
    %77 = vector.load %arg16[%c0_55, %c0_56] : memref<24x8xf32, #tpu.memory_space<vmem>>, vector<24x8xf32>
    %c0_57 = arith.constant 0 : index
    %c0_58 = arith.constant 0 : index
    %78 = vector.load %arg17[%c0_57, %c0_58] : memref<24x24xf32, #tpu.memory_space<vmem>>, vector<24x24xf32>
    %c0_59 = arith.constant 0 : index
    %c0_60 = arith.constant 0 : index
    %79 = vector.load %arg18[%c0_59, %c0_60] : memref<24x24xf32, #tpu.memory_space<vmem>>, vector<24x24xf32>
    %c0_61 = arith.constant 0 : index
    %c0_62 = arith.constant 0 : index
    %80 = vector.load %arg19[%c0_61, %c0_62] : memref<24x24xf32, #tpu.memory_space<vmem>>, vector<24x24xf32>
    %c0_63 = arith.constant 0 : index
    %c0_64 = arith.constant 0 : index
    %81 = vector.load %arg20[%c0_63, %c0_64] : memref<8x8xf32, #tpu.memory_space<vmem>>, vector<8x8xf32>
    %cst_65 = arith.constant dense<0.000000e+00> : vector<24x8xf32>
    %82 = tpu.matmul %77, %81, %cst_65 {dimension_numbers = #tpu.dot_dimension_numbers<[1], [0], [0], [1], [0, 0, 1, 1], [], []>} : vector<24x8xf32>, vector<8x8xf32>, vector<24x8xf32> -> vector<24x8xf32>
    %cst_66 = arith.constant dense<0.000000e+00> : vector<24x8xf32>
    %83 = tpu.matmul %78, %82, %cst_66 {dimension_numbers = #tpu.dot_dimension_numbers<[1], [0], [0], [1], [0, 0, 1, 1], [], []>} : vector<24x24xf32>, vector<24x8xf32>, vector<24x8xf32> -> vector<24x8xf32>
    %c0_67 = arith.constant 0 : index
    %c0_68 = arith.constant 0 : index
    %84 = vector.load %arg21[%c0_67, %c0_68] : memref<1x8xf32, #tpu.memory_space<vmem>>, vector<1x8xf32>
    %85 = vector.broadcast %84 : vector<1x8xf32> to vector<24x8xf32>
    %86 = arith.addf %83, %85 : vector<24x8xf32>
    %cst_69 = arith.constant 0.000000e+00 : f32
    %87 = vector.broadcast %cst_69 : f32 to vector<24x8xf32>
    %88 = arith.maximumf %86, %87 : vector<24x8xf32>
    %89 = vector.shape_cast %88 : vector<24x8xf32> to vector<1x24x8xf32>
    %90 = vector.shape_cast %89 : vector<1x24x8xf32> to vector<1x24x8xf32>
    %91 = vector.broadcast %90 : vector<1x24x8xf32> to vector<4x24x8xf32>
    %c0_70 = arith.constant 0 : index
    %c0_71 = arith.constant 0 : index
    %c0_72 = arith.constant 0 : index
    %92 = vector.load %arg22[%c0_70, %c0_71, %c0_72] : memref<4x8x8xf32, #tpu.memory_space<vmem>>, vector<4x8x8xf32>
    "tpu.trace_start"() <{level = 10 : i32, message = "hnd,hdf->hnf"}> : () -> ()
    %cst_73 = arith.constant dense<0.000000e+00> : vector<4x24x8xf32>
    %93 = tpu.matmul %91, %92, %cst_73 {dimension_numbers = #tpu.dot_dimension_numbers<[2], [1], [1], [2], [0, 0, 0, 1, 1, 2], [0], [0]>} : vector<4x24x8xf32>, vector<4x8x8xf32>, vector<4x24x8xf32> -> vector<4x24x8xf32>
    "tpu.trace_stop"() : () -> ()
    %c0_74 = arith.constant 0 : index
    %c0_75 = arith.constant 0 : index
    %c0_76 = arith.constant 0 : index
    %94 = vector.load %arg23[%c0_74, %c0_75, %c0_76] : memref<4x1x8xf32, #tpu.memory_space<vmem>>, vector<4x1x8xf32>
    "tpu.trace_start"() <{level = 10 : i32, message = "hnf,hkf->hnk"}> : () -> ()
    %cst_77 = arith.constant dense<0.000000e+00> : vector<4x24x1xf32>
    %95 = tpu.matmul %93, %94, %cst_77 {dimension_numbers = #tpu.dot_dimension_numbers<[2], [2], [1], [1], [0, 0, 0, 1, 1, 1], [0], [0]>} : vector<4x24x8xf32>, vector<4x1x8xf32>, vector<4x24x1xf32> -> vector<4x24x1xf32>
    "tpu.trace_stop"() : () -> ()
    %c0_78 = arith.constant 0 : index
    %c0_79 = arith.constant 0 : index
    %c0_80 = arith.constant 0 : index
    %96 = vector.load %arg24[%c0_78, %c0_79, %c0_80] : memref<4x1x8xf32, #tpu.memory_space<vmem>>, vector<4x1x8xf32>
    "tpu.trace_start"() <{level = 10 : i32, message = "hkf,hjf->hkj"}> : () -> ()
    %cst_81 = arith.constant dense<0.000000e+00> : vector<4x1x24xf32>
    %97 = tpu.matmul %96, %93, %cst_81 {dimension_numbers = #tpu.dot_dimension_numbers<[2], [2], [1], [1], [0, 0, 0, 1, 1, 1], [0], [0]>} : vector<4x1x8xf32>, vector<4x24x8xf32>, vector<4x1x24xf32> -> vector<4x1x24xf32>
    "tpu.trace_stop"() : () -> ()
    %98 = vector.broadcast %95 : vector<4x24x1xf32> to vector<4x24x24xf32>
    %99 = vector.broadcast %97 : vector<4x1x24xf32> to vector<4x24x24xf32>
    %100 = arith.addf %98, %99 : vector<4x24x24xf32>
    %c0_82 = arith.constant 0 : index
    %c0_83 = arith.constant 0 : index
    %c0_84 = arith.constant 0 : index
    %101 = vector.load %arg25[%c0_82, %c0_83, %c0_84] : memref<4x1x1xf32, #tpu.memory_space<vmem>>, vector<4x1x1xf32>
    %102 = vector.shape_cast %79 : vector<24x24xf32> to vector<1x24x24xf32>
    %103 = vector.broadcast %101 : vector<4x1x1xf32> to vector<4x24x24xf32>
    %104 = vector.broadcast %102 : vector<1x24x24xf32> to vector<4x24x24xf32>
    %105 = arith.mulf %103, %104 : vector<4x24x24xf32>
    %106 = arith.addf %100, %105 : vector<4x24x24xf32>
    %cst_85 = arith.constant 0.000000e+00 : f32
    %107 = vector.broadcast %cst_85 : f32 to vector<4x24x24xf32>
    %108 = arith.cmpf ogt, %106, %107 : vector<4x24x24xf32>
    %cst_86 = arith.constant 2.000000e-01 : f32
    %109 = vector.broadcast %cst_86 : f32 to vector<4x24x24xf32>
    %110 = arith.mulf %109, %106 : vector<4x24x24xf32>
    %111 = arith.select %108, %106, %110 : vector<4x24x24xi1>, vector<4x24x24xf32>
    %112 = vector.shape_cast %80 : vector<24x24xf32> to vector<1x24x24xf32>
    %cst_87 = arith.constant 0.000000e+00 : f32
    %113 = vector.broadcast %cst_87 : f32 to vector<1x24x24xf32>
    %114 = arith.cmpf ogt, %112, %113 : vector<1x24x24xf32>
    %cst_88 = arith.constant -1.000000e+30 : f32
    %115 = vector.shape_cast %114 : vector<1x24x24xi1> to vector<1x24x24xi1>
    %116 = vector.broadcast %115 : vector<1x24x24xi1> to vector<4x24x24xi1>
    %117 = vector.broadcast %cst_88 : f32 to vector<4x24x24xf32>
    %118 = arith.select %116, %111, %117 : vector<4x24x24xi1>, vector<4x24x24xf32>
    %cst_89 = arith.constant dense<0xFF800000> : vector<4x24xf32>
    %119 = vector.multi_reduction <maximumf>, %118, %cst_89 [2] : vector<4x24x24xf32> to vector<4x24xf32>
    %120 = vector.shape_cast %119 : vector<4x24xf32> to vector<4x24x1xf32>
    %121 = vector.broadcast %120 : vector<4x24x1xf32> to vector<4x24x24xf32>
    %122 = arith.subf %118, %121 : vector<4x24x24xf32>
    %123 = math.exp %122 : vector<4x24x24xf32>
    %cst_90 = arith.constant dense<0.000000e+00> : vector<4x24xf32>
    %124 = vector.multi_reduction <add>, %123, %cst_90 [2] : vector<4x24x24xf32> to vector<4x24xf32>
    %125 = vector.shape_cast %124 : vector<4x24xf32> to vector<4x24x1xf32>
    %cst_91 = arith.constant 4.000000e+00 : f32
    %126 = vector.broadcast %cst_91 : f32 to vector<4x24x1xf32>
    %127 = arith.mulf %125, %126 : vector<4x24x1xf32>
    %128 = tpu.reciprocal %127 : vector<4x24x1xf32> -> vector<4x24x1xf32>
    %129 = vector.broadcast %128 : vector<4x24x1xf32> to vector<4x24x24xf32>
    %130 = arith.mulf %123, %129 : vector<4x24x24xf32>
    "tpu.trace_start"() <{level = 10 : i32, message = "hij,hjf->hif"}> : () -> ()
    %cst_92 = arith.constant dense<0.000000e+00> : vector<4x24x8xf32>
    %131 = tpu.matmul %130, %93, %cst_92 {dimension_numbers = #tpu.dot_dimension_numbers<[2], [1], [1], [2], [0, 0, 0, 1, 1, 2], [0], [0]>} : vector<4x24x24xf32>, vector<4x24x8xf32>, vector<4x24x8xf32> -> vector<4x24x8xf32>
    "tpu.trace_stop"() : () -> ()
    %cst_93 = arith.constant dense<0.000000e+00> : vector<24x8xf32>
    %132 = vector.multi_reduction <add>, %131, %cst_93 [0] : vector<4x24x8xf32> to vector<24x8xf32>
    %c0_94 = arith.constant 0 : index
    %c0_95 = arith.constant 0 : index
    %133 = vector.load %arg26[%c0_94, %c0_95] : memref<1x8xf32, #tpu.memory_space<vmem>>, vector<1x8xf32>
    %134 = vector.broadcast %133 : vector<1x8xf32> to vector<24x8xf32>
    %135 = arith.addf %132, %134 : vector<24x8xf32>
    %cst_96 = arith.constant 0.000000e+00 : f32
    %136 = vector.broadcast %cst_96 : f32 to vector<24x8xf32>
    %137 = arith.maximumf %135, %136 : vector<24x8xf32>
    %c0_97 = arith.constant 0 : index
    %c0_98 = arith.constant 0 : index
    %138 = vector.load %arg27[%c0_97, %c0_98] : memref<8x8xf32, #tpu.memory_space<vmem>>, vector<8x8xf32>
    %cst_99 = arith.constant dense<0.000000e+00> : vector<24x8xf32>
    %139 = tpu.matmul %137, %138, %cst_99 {dimension_numbers = #tpu.dot_dimension_numbers<[1], [0], [0], [1], [0, 0, 1, 1], [], []>} : vector<24x8xf32>, vector<8x8xf32>, vector<24x8xf32> -> vector<24x8xf32>
    %cst_100 = arith.constant dense<0.000000e+00> : vector<24x8xf32>
    %140 = tpu.matmul %78, %139, %cst_100 {dimension_numbers = #tpu.dot_dimension_numbers<[1], [0], [0], [1], [0, 0, 1, 1], [], []>} : vector<24x24xf32>, vector<24x8xf32>, vector<24x8xf32> -> vector<24x8xf32>
    %c0_101 = arith.constant 0 : index
    %c0_102 = arith.constant 0 : index
    %141 = vector.load %arg28[%c0_101, %c0_102] : memref<1x8xf32, #tpu.memory_space<vmem>>, vector<1x8xf32>
    %142 = vector.broadcast %141 : vector<1x8xf32> to vector<24x8xf32>
    %143 = arith.addf %140, %142 : vector<24x8xf32>
    %cst_103 = arith.constant 0.000000e+00 : f32
    %144 = vector.broadcast %cst_103 : f32 to vector<24x8xf32>
    %145 = arith.maximumf %143, %144 : vector<24x8xf32>
    %c0_104 = arith.constant 0 : index
    %c0_105 = arith.constant 0 : index
    %146 = vector.load %arg29[%c0_104, %c0_105] : memref<8x8xf32, #tpu.memory_space<vmem>>, vector<8x8xf32>
    %cst_106 = arith.constant dense<0.000000e+00> : vector<24x8xf32>
    %147 = tpu.matmul %88, %146, %cst_106 {dimension_numbers = #tpu.dot_dimension_numbers<[1], [0], [0], [1], [0, 0, 1, 1], [], []>} : vector<24x8xf32>, vector<8x8xf32>, vector<24x8xf32> -> vector<24x8xf32>
    %c0_107 = arith.constant 0 : index
    %c0_108 = arith.constant 0 : index
    %148 = vector.load %arg30[%c0_107, %c0_108] : memref<8x8xf32, #tpu.memory_space<vmem>>, vector<8x8xf32>
    %cst_109 = arith.constant dense<0.000000e+00> : vector<24x8xf32>
    %149 = tpu.matmul %145, %148, %cst_109 {dimension_numbers = #tpu.dot_dimension_numbers<[1], [0], [0], [1], [0, 0, 1, 1], [], []>} : vector<24x8xf32>, vector<8x8xf32>, vector<24x8xf32> -> vector<24x8xf32>
    %150 = arith.addf %147, %149 : vector<24x8xf32>
    %c0_110 = arith.constant 0 : index
    %c0_111 = arith.constant 0 : index
    %151 = vector.load %arg31[%c0_110, %c0_111] : memref<1x8xf32, #tpu.memory_space<vmem>>, vector<1x8xf32>
    %152 = vector.broadcast %151 : vector<1x8xf32> to vector<24x8xf32>
    %153 = arith.addf %150, %152 : vector<24x8xf32>
    %cst_112 = arith.constant dense<0.000000e+00> : vector<32x24xf32>
    %154 = tpu.matmul %76, %153, %cst_112 {dimension_numbers = #tpu.dot_dimension_numbers<[1], [1], [0], [0], [0, 0, 1, 0], [], []>} : vector<32x8xf32>, vector<24x8xf32>, vector<32x24xf32> -> vector<32x24xf32>
    %c0_113 = arith.constant 0 : index
    %c0_114 = arith.constant 0 : index
    %155 = vector.load %arg32[%c0_113, %c0_114] : memref<32x24xf32, #tpu.memory_space<vmem>>, vector<32x24xf32>
    tpu.vector_store %arg32[%c0_113, %c0_114], %154 {strides = array<i32>} : memref<32x24xf32, #tpu.memory_space<vmem>>, vector<32x24xf32>,
    %c0_115 = arith.constant 0 : index
    %c0_116 = arith.constant 0 : index
    %156 = vector.load %arg33[%c0_115, %c0_116] : memref<32x8xf32, #tpu.memory_space<vmem>>, vector<32x8xf32>
    tpu.vector_store %arg33[%c0_115, %c0_116], %76 {strides = array<i32>} : memref<32x8xf32, #tpu.memory_space<vmem>>, vector<32x8xf32>,
    %c0_117 = arith.constant 0 : index
    %c0_118 = arith.constant 0 : index
    %157 = vector.load %arg34[%c0_117, %c0_118] : memref<24x8xf32, #tpu.memory_space<vmem>>, vector<24x8xf32>
    tpu.vector_store %arg34[%c0_117, %c0_118], %153 {strides = array<i32>} : memref<24x8xf32, #tpu.memory_space<vmem>>, vector<24x8xf32>,
    return
  }
}

</mosaic_0001>

<llo_original>
// kernel: tpu_custom_call.1
$region0: #{tpu_custom_call.1}
  #allocation0 [shape = 'u32[]', space=smem, size = 0x4, offset = 0x4, fixed_abs, tag = 'smem constant byte address 0x4 - core index']
  #allocation1 [shape = 'u32[144,128]{1,0:T(1,128)}', space=vmem, size = 0x12000, scoped, tag = 'internal scratch']
  %s0 = inlined_call_operand.smem [shape: u32[35], index: -1, kind: input, shape index: {}]
  %s1 = sld [smem:[%s0]]
  %s2 = scalar_lea.smem %s0, 1
  %s3 = sld [smem:[%s2]]
  %s4 = scalar_lea.smem %s0, 2
  %s5 = sld [smem:[%s4]]
  %s6 = scalar_lea.smem %s0, 3
  %s7 = sld [smem:[%s6]]
  %s8 = scalar_lea.smem %s0, 4
  %s9 = sld [smem:[%s8]]
  %s10 = scalar_lea.smem %s0, 5
  %s11 = sld [smem:[%s10]]
  %s12 = scalar_lea.smem %s0, 6
  %s13 = sld [smem:[%s12]]
  %s14 = scalar_lea.smem %s0, 7
  %s15 = sld [smem:[%s14]]
  %s16 = scalar_lea.smem %s0, 8
  %s17 = sld [smem:[%s16]]
  %s18 = scalar_lea.smem %s0, 9
  %s19 = sld [smem:[%s18]]
  %s20 = scalar_lea.smem %s0, 10
  %s21 = sld [smem:[%s20]]
  %s22 = scalar_lea.smem %s0, 11
  %s23 = sld [smem:[%s22]]
  %s24 = scalar_lea.smem %s0, 12
  %s25 = sld [smem:[%s24]]
  %s26 = scalar_lea.smem %s0, 13
  %s27 = sld [smem:[%s26]]
  %s28 = scalar_lea.smem %s0, 14
  %s29 = sld [smem:[%s28]]
  %s30 = scalar_lea.smem %s0, 15
  %s31 = sld [smem:[%s30]]
  %s32 = scalar_lea.smem %s0, 16
  %s33 = sld [smem:[%s32]]
  %s34 = scalar_lea.smem %s0, 17
  %s35 = sld [smem:[%s34]]
  %s36 = scalar_lea.smem %s0, 18
  %s37 = sld [smem:[%s36]]
  %s38 = scalar_lea.smem %s0, 19
  %s39 = sld [smem:[%s38]]
  %s40 = scalar_lea.smem %s0, 20
  %s41 = sld [smem:[%s40]]
  %s42 = scalar_lea.smem %s0, 21
  %s43 = sld [smem:[%s42]]
  %s44 = scalar_lea.smem %s0, 22
  %s45 = sld [smem:[%s44]]
  %s46 = scalar_lea.smem %s0, 23
  %s47 = sld [smem:[%s46]]
  %s48 = scalar_lea.smem %s0, 24
  %s49 = sld [smem:[%s48]]
  %s50 = scalar_lea.smem %s0, 25
  %s51 = sld [smem:[%s50]]
  %s52 = scalar_lea.smem %s0, 26
  %s53 = sld [smem:[%s52]]
  %s54 = scalar_lea.smem %s0, 27
  %s55 = sld [smem:[%s54]]
  %s56 = scalar_lea.smem %s0, 28
  %s57 = sld [smem:[%s56]]
  %s58 = scalar_lea.smem %s0, 29
  %s59 = sld [smem:[%s58]]
  %s60 = scalar_lea.smem %s0, 30
  %s61 = sld [smem:[%s60]]
  %s62 = scalar_lea.smem %s0, 31
  %s63 = sld [smem:[%s62]]
  %s64 = scalar_lea.smem %s0, 32
  %s65 = sld [smem:[%s64]]
  %s66 = scalar_lea.smem %s0, 33
  %s67 = sld [smem:[%s66]]
  %s68 = scalar_lea.smem %s0, 34
  %s69 = sld [smem:[%s68]]
  %70 = xla_tuple %s65, %s67, %s69
  %s71 = sld [smem:[#allocation0]]
  $region210: #{tpu_custom_call.1} parent=0
    _
  %s73 = ssub.s32 1, %s71
  %s74 = scalar_select 0, %s73, %s71
  $region1: #{tpu_custom_call.1} parent=0
    #allocation2 [shape = 'u8[16384]{0}', space=vmem, size = 0x4000, scoped, tag = 'input window, operand 3, single buffered']
    #allocation3 [shape = 's32[1]{0}', space=sflag, size = 0x4, scoped, tag = 'scoped memory for tpu_custom_call.1']
    #allocation4 [shape = 'u8[8192]{0}', space=vmem, size = 0x2000, scoped, tag = 'input window, operand 4, single buffered']
    #allocation5 [shape = 's32[1]{0}', space=sflag, size = 0x4, scoped, tag = 'scoped memory for tpu_custom_call.1']
    #allocation6 [shape = 'u8[512]{0}', space=vmem, size = 0x400, scoped, tag = 'input window, operand 5, single buffered']
    #allocation7 [shape = 'u8[2048]{0}', space=vmem, size = 0x800, scoped, tag = 'input window, operand 7, single buffered']
    #allocation8 [shape = 's32[1]{0}', space=sflag, size = 0x4, scoped, tag = 'scoped memory for tpu_custom_call.1']
    #allocation9 [shape = 'u8[2048]{0}', space=vmem, size = 0x800, scoped, tag = 'input window, operand 8, single buffered']
    #allocation10 [shape = 'u8[512]{0}', space=vmem, size = 0x400, scoped, tag = 'input window, operand 10, single buffered']
    #allocation11 [shape = 's32[1]{0}', space=sflag, size = 0x4, scoped, tag = 'scoped memory for tpu_custom_call.1']
    #allocation12 [shape = 'u8[8192]{0}', space=vmem, size = 0x2000, scoped, tag = 'input window, operand 11, single buffered']
    #allocation13 [shape = 'u8[512]{0}', space=vmem, size = 0x400, scoped, tag = 'input window, operand 12, single buffered']
    #allocation14 [shape = 's32[1]{0}', space=sflag, size = 0x4, scoped, tag = 'scoped memory for tpu_custom_call.1']
    #allocation15 [shape = 'u8[512]{0}', space=vmem, size = 0x400, scoped, tag = 'input window, operand 15, single buffered']
    #allocation16 [shape = 'u8[12288]{0}', space=vmem, size = 0x3000, scoped, tag = 'input window, operand 18, single buffered']
    #allocation17 [shape = 's32[1]{0}', space=sflag, size = 0x4, scoped, tag = 'scoped memory for tpu_custom_call.1']
    #allocation18 [shape = 'u8[4096]{0}', space=vmem, size = 0x1000, scoped, tag = 'input window, operand 20, single buffered']
    #allocation19 [shape = 'u8[512]{0}', space=vmem, size = 0x400, scoped, tag = 'input window, operand 21, single buffered']
    #allocation20 [shape = 's32[1]{0}', space=sflag, size = 0x4, scoped, tag = 'scoped memory for tpu_custom_call.1']
    #allocation21 [shape = 'u8[2048]{0}', space=vmem, size = 0x800, scoped, tag = 'input window, operand 23, single buffered']
    #allocation22 [shape = 'u8[2048]{0}', space=vmem, size = 0x800, scoped, tag = 'input window, operand 24, single buffered']
    #allocation23 [shape = 's32[1]{0}', space=sflag, size = 0x4, scoped, tag = 'scoped memory for tpu_custom_call.1']
    %75 = vsyncpa [#allocation3], 0
    %76 = vsyncpa [#allocation5], 0
    %77 = vsyncpa [#allocation8], 0
    %78 = vsyncpa [#allocation11], 0
    %79 = vsyncpa [#allocation14], 0
    %80 = vsyncpa [#allocation17], 0
    %81 = vsyncpa [#allocation20], 0
    %82 = vsyncpa [#allocation23], 0
    // Predicated region
    $region2: #{tpu_custom_call.1} parent=1 // pred_check
      _
    $region3: #{tpu_custom_call.1} parent=1 // pred_check_branch
      %84 = sbr.rel (0) target = $region5
    $region4: #{tpu_custom_call.1} parent=1 // pred_region
      _
    $region5: #{tpu_custom_call.1} parent=1 // pred_fallthru
      _
    // Predicated region
    $region6: #{tpu_custom_call.1} parent=1 // pred_check
      _
    $region7: #{tpu_custom_call.1} parent=1 // pred_check_branch
      %86 = sbr.rel (0) target = $region9
    $region8: #{tpu_custom_call.1} parent=1 // pred_region
      _
    $region9: #{tpu_custom_call.1} parent=1 // pred_fallthru
      _
    // Predicated region
    $region10: #{tpu_custom_call.1} parent=1 // pred_check
      _
    $region11: #{tpu_custom_call.1} parent=1 // pred_check_branch
      %88 = sbr.rel (0) target = $region13
    $region12: #{tpu_custom_call.1} parent=1 // pred_region
      _
    $region13: #{tpu_custom_call.1} parent=1 // pred_fallthru
      _
    // Predicated region
    $region14: #{tpu_custom_call.1} parent=1 // pred_check
      _
    $region15: #{tpu_custom_call.1} parent=1 // pred_check_branch
      %90 = sbr.rel (0) target = $region17
    $region16: #{tpu_custom_call.1} parent=1 // pred_region
      %s92 = ssub.s32 512, 512
      %93 = vsyncadd [#allocation3], %s92
      %s94 = sshll.u32 [#allocation2], 4
      %s95 = int_to_ptr.vmem [resolvable:$true] %s94
      %100 = dma.hbm_to_vmem [thread:$0]  %s7, 512, %s95, [#allocation3], 128, 128, 8
    $region17: #{tpu_custom_call.1} parent=1 // pred_fallthru
      _
    // Predicated region
    $region18: #{tpu_custom_call.1} parent=1 // pred_check
      _
    $region19: #{tpu_custom_call.1} parent=1 // pred_check_branch
      %102 = sbr.rel (0) target = $region21
    $region20: #{tpu_custom_call.1} parent=1 // pred_region
      %s104 = ssub.s32 256, 256
      %105 = vsyncadd [#allocation5], %s104
      %s106 = sshll.u32 [#allocation4], 4
      %s107 = int_to_ptr.vmem [resolvable:$true] %s106
      %112 = dma.hbm_to_vmem [thread:$0]  %s9, 256, %s107, [#allocation5], 128, 128, 8
    $region21: #{tpu_custom_call.1} parent=1 // pred_fallthru
      _
    // Predicated region
    $region22: #{tpu_custom_call.1} parent=1 // pred_check
      _
    $region23: #{tpu_custom_call.1} parent=1 // pred_check_branch
      %114 = sbr.rel (0) target = $region25
    $region24: #{tpu_custom_call.1} parent=1 // pred_region
      %s116 = ssub.s32 16, 16
      %117 = vsyncadd [#allocation5], %s116
      %s119 = sshll.u32 [#allocation6], 4
      %s120 = int_to_ptr.vmem [resolvable:$true] %s119
      %122 = dma.hbm_to_vmem [thread:$0]  %s11, 16, %s120, [#allocation5]
    $region25: #{tpu_custom_call.1} parent=1 // pred_fallthru
      _
    // Predicated region
    $region26: #{tpu_custom_call.1} parent=1 // pred_check
      _
    $region27: #{tpu_custom_call.1} parent=1 // pred_check_branch
      %124 = sbr.rel (0) target = $region29
    $region28: #{tpu_custom_call.1} parent=1 // pred_region
      _
    $region29: #{tpu_custom_call.1} parent=1 // pred_fallthru
      _
    // Predicated region
    $region30: #{tpu_custom_call.1} parent=1 // pred_check
      _
    $region31: #{tpu_custom_call.1} parent=1 // pred_check_branch
      %126 = sbr.rel (0) target = $region33
    $region32: #{tpu_custom_call.1} parent=1 // pred_region
      %s128 = ssub.s32 64, 64
      %129 = vsyncadd [#allocation8], %s128
      %s130 = sshll.u32 [#allocation7], 4
      %s131 = int_to_ptr.vmem [resolvable:$true] %s130
      %136 = dma.hbm_to_vmem [thread:$0]  %s15, 64, %s131, [#allocation8], 16, 16, 1
    $region33: #{tpu_custom_call.1} parent=1 // pred_fallthru
      _
    // Predicated region
    $region34: #{tpu_custom_call.1} parent=1 // pred_check
      _
    $region35: #{tpu_custom_call.1} parent=1 // pred_check_branch
      %138 = sbr.rel (0) target = $region37
    $region36: #{tpu_custom_call.1} parent=1 // pred_region
      %s140 = ssub.s32 64, 64
      %141 = vsyncadd [#allocation8], %s140
      %s142 = sshll.u32 [#allocation9], 4
      %s143 = int_to_ptr.vmem [resolvable:$true] %s142
      %148 = dma.hbm_to_vmem [thread:$0]  %s17, 64, %s143, [#allocation8], 16, 16, 1
    $region37: #{tpu_custom_call.1} parent=1 // pred_fallthru
      _
    // Predicated region
    $region38: #{tpu_custom_call.1} parent=1 // pred_check
      _
    $region39: #{tpu_custom_call.1} parent=1 // pred_check_branch
      %150 = sbr.rel (0) target = $region41
    $region40: #{tpu_custom_call.1} parent=1 // pred_region
      _
    $region41: #{tpu_custom_call.1} parent=1 // pred_fallthru
      _
    // Predicated region
    $region42: #{tpu_custom_call.1} parent=1 // pred_check
      _
    $region43: #{tpu_custom_call.1} parent=1 // pred_check_branch
      %152 = sbr.rel (0) target = $region45
    $region44: #{tpu_custom_call.1} parent=1 // pred_region
      %s154 = ssub.s32 16, 16
      %155 = vsyncadd [#allocation11], %s154
      %s157 = sshll.u32 [#allocation10], 4
      %s158 = int_to_ptr.vmem [resolvable:$true] %s157
      %160 = dma.hbm_to_vmem [thread:$0]  %s21, 16, %s158, [#allocation11]
    $region45: #{tpu_custom_call.1} parent=1 // pred_fallthru
      _
    // Predicated region
    $region46: #{tpu_custom_call.1} parent=1 // pred_check
      _
    $region47: #{tpu_custom_call.1} parent=1 // pred_check_branch
      %162 = sbr.rel (0) target = $region49
    $region48: #{tpu_custom_call.1} parent=1 // pred_region
      %s164 = ssub.s32 256, 256
      %165 = vsyncadd [#allocation11], %s164
      %s166 = sshll.u32 [#allocation12], 4
      %s167 = int_to_ptr.vmem [resolvable:$true] %s166
      %172 = dma.hbm_to_vmem [thread:$0]  %s23, 256, %s167, [#allocation11], 128, 128, 8
    $region49: #{tpu_custom_call.1} parent=1 // pred_fallthru
      _
    // Predicated region
    $region50: #{tpu_custom_call.1} parent=1 // pred_check
      _
    $region51: #{tpu_custom_call.1} parent=1 // pred_check_branch
      %174 = sbr.rel (0) target = $region53
    $region52: #{tpu_custom_call.1} parent=1 // pred_region
      %s176 = ssub.s32 16, 16
      %177 = vsyncadd [#allocation14], %s176
      %s179 = sshll.u32 [#allocation13], 4
      %s180 = int_to_ptr.vmem [resolvable:$true] %s179
      %182 = dma.hbm_to_vmem [thread:$0]  %s25, 16, %s180, [#allocation14]
    $region53: #{tpu_custom_call.1} parent=1 // pred_fallthru
      _
    // Predicated region
    $region54: #{tpu_custom_call.1} parent=1 // pred_check
      _
    $region55: #{tpu_custom_call.1} parent=1 // pred_check_branch
      %184 = sbr.rel (0) target = $region57
    $region56: #{tpu_custom_call.1} parent=1 // pred_region
      _
    $region57: #{tpu_custom_call.1} parent=1 // pred_fallthru
      _
    // Predicated region
    $region58: #{tpu_custom_call.1} parent=1 // pred_check
      _
    $region59: #{tpu_custom_call.1} parent=1 // pred_check_branch
      %186 = sbr.rel (0) target = $region61
    $region60: #{tpu_custom_call.1} parent=1 // pred_region
      _
    $region61: #{tpu_custom_call.1} parent=1 // pred_fallthru
      _
    // Predicated region
    $region62: #{tpu_custom_call.1} parent=1 // pred_check
      _
    $region63: #{tpu_custom_call.1} parent=1 // pred_check_branch
      %188 = sbr.rel (0) target = $region65
    $region64: #{tpu_custom_call.1} parent=1 // pred_region
      %s190 = ssub.s32 16, 16
      %191 = vsyncadd [#allocation14], %s190
      %s193 = sshll.u32 [#allocation15], 4
      %s194 = int_to_ptr.vmem [resolvable:$true] %s193
      %196 = dma.hbm_to_vmem [thread:$0]  %s31, 16, %s194, [#allocation14]
    $region65: #{tpu_custom_call.1} parent=1 // pred_fallthru
      _
    // Predicated region
    $region66: #{tpu_custom_call.1} parent=1 // pred_check
      _
    $region67: #{tpu_custom_call.1} parent=1 // pred_check_branch
      %198 = sbr.rel (0) target = $region69
    $region68: #{tpu_custom_call.1} parent=1 // pred_region
      _
    $region69: #{tpu_custom_call.1} parent=1 // pred_fallthru
      _
    // Predicated region
    $region70: #{tpu_custom_call.1} parent=1 // pred_check
      _
    $region71: #{tpu_custom_call.1} parent=1 // pred_check_branch
      %200 = sbr.rel (0) target = $region73
    $region72: #{tpu_custom_call.1} parent=1 // pred_region
      _
    $region73: #{tpu_custom_call.1} parent=1 // pred_fallthru
      _
    // Predicated region
    $region74: #{tpu_custom_call.1} parent=1 // pred_check
      _
    $region75: #{tpu_custom_call.1} parent=1 // pred_check_branch
      %202 = sbr.rel (0) target = $region77
    $region76: #{tpu_custom_call.1} parent=1 // pred_region
      %s204 = ssub.s32 384, 384
      %205 = vsyncadd [#allocation17], %s204
      %s206 = sshll.u32 [#allocation16], 4
      %s207 = int_to_ptr.vmem [resolvable:$true] %s206
      %212 = dma.hbm_to_vmem [thread:$0]  %s37, 384, %s207, [#allocation17], 128, 128, 8
    $region77: #{tpu_custom_call.1} parent=1 // pred_fallthru
      _
    // Predicated region
    $region78: #{tpu_custom_call.1} parent=1 // pred_check
      _
    $region79: #{tpu_custom_call.1} parent=1 // pred_check_branch
      %214 = sbr.rel (0) target = $region81
    $region80: #{tpu_custom_call.1} parent=1 // pred_region
      _
    $region81: #{tpu_custom_call.1} parent=1 // pred_fallthru
      _
    // Predicated region
    $region82: #{tpu_custom_call.1} parent=1 // pred_check
      _
    $region83: #{tpu_custom_call.1} parent=1 // pred_check_branch
      %216 = sbr.rel (0) target = $region85
    $region84: #{tpu_custom_call.1} parent=1 // pred_region
      %s218 = ssub.s32 128, 128
      %219 = vsyncadd [#allocation17], %s218
      %s221 = sshll.u32 [#allocation18], 4
      %s222 = int_to_ptr.vmem [resolvable:$true] %s221
      %224 = dma.hbm_to_vmem [thread:$0]  %s41, 128, %s222, [#allocation17]
    $region85: #{tpu_custom_call.1} parent=1 // pred_fallthru
      _
    // Predicated region
    $region86: #{tpu_custom_call.1} parent=1 // pred_check
      _
    $region87: #{tpu_custom_call.1} parent=1 // pred_check_branch
      %226 = sbr.rel (0) target = $region89
    $region88: #{tpu_custom_call.1} parent=1 // pred_region
      %s228 = ssub.s32 16, 16
      %229 = vsyncadd [#allocation20], %s228
      %s231 = sshll.u32 [#allocation19], 4
      %s232 = int_to_ptr.vmem [resolvable:$true] %s231
      %234 = dma.hbm_to_vmem [thread:$0]  %s43, 16, %s232, [#allocation20]
    $region89: #{tpu_custom_call.1} parent=1 // pred_fallthru
      _
    // Predicated region
    $region90: #{tpu_custom_call.1} parent=1 // pred_check
      _
    $region91: #{tpu_custom_call.1} parent=1 // pred_check_branch
      %236 = sbr.rel (0) target = $region93
    $region92: #{tpu_custom_call.1} parent=1 // pred_region
      _
    $region93: #{tpu_custom_call.1} parent=1 // pred_fallthru
      _
    // Predicated region
    $region94: #{tpu_custom_call.1} parent=1 // pred_check
      _
    $region95: #{tpu_custom_call.1} parent=1 // pred_check_branch
      %238 = sbr.rel (0) target = $region97
    $region96: #{tpu_custom_call.1} parent=1 // pred_region
      %s240 = ssub.s32 64, 64
      %241 = vsyncadd [#allocation20], %s240
      %s242 = sshll.u32 [#allocation21], 4
      %s243 = int_to_ptr.vmem [resolvable:$true] %s242
      %248 = dma.hbm_to_vmem [thread:$0]  %s47, 64, %s243, [#allocation20], 16, 16, 1
    $region97: #{tpu_custom_call.1} parent=1 // pred_fallthru
      _
    // Predicated region
    $region98: #{tpu_custom_call.1} parent=1 // pred_check
      _
    $region99: #{tpu_custom_call.1} parent=1 // pred_check_branch
      %250 = sbr.rel (0) target = $region101
    $region100: #{tpu_custom_call.1} parent=1 // pred_region
      %s252 = ssub.s32 64, 64
      %253 = vsyncadd [#allocation23], %s252
      %s254 = sshll.u32 [#allocation22], 4
      %s255 = int_to_ptr.vmem [resolvable:$true] %s254
      %260 = dma.hbm_to_vmem [thread:$0]  %s49, 64, %s255, [#allocation23], 16, 16, 1
    $region101: #{tpu_custom_call.1} parent=1 // pred_fallthru
      _
    // Predicated region
    $region102: #{tpu_custom_call.1} parent=1 // pred_check
      _
    $region103: #{tpu_custom_call.1} parent=1 // pred_check_branch
      %262 = sbr.rel (0) target = $region105
    $region104: #{tpu_custom_call.1} parent=1 // pred_region
      _
    $region105: #{tpu_custom_call.1} parent=1 // pred_fallthru
      _
    // Predicated region
    $region106: #{tpu_custom_call.1} parent=1 // pred_check
      _
    $region107: #{tpu_custom_call.1} parent=1 // pred_check_branch
      %264 = sbr.rel (0) target = $region109
    $region108: #{tpu_custom_call.1} parent=1 // pred_region
      _
    $region109: #{tpu_custom_call.1} parent=1 // pred_fallthru
      _
    // Predicated region
    $region110: #{tpu_custom_call.1} parent=1 // pred_check
      _
    $region111: #{tpu_custom_call.1} parent=1 // pred_check_branch
      %266 = sbr.rel (0) target = $region113
    $region112: #{tpu_custom_call.1} parent=1 // pred_region
      _
    $region113: #{tpu_custom_call.1} parent=1 // pred_fallthru
      _
    // Predicated region
    $region114: #{tpu_custom_call.1} parent=1 // pred_check
      _
    $region115: #{tpu_custom_call.1} parent=1 // pred_check_branch
      %268 = sbr.rel (0) target = $region117
    $region116: #{tpu_custom_call.1} parent=1 // pred_region
      _
    $region117: #{tpu_custom_call.1} parent=1 // pred_fallthru
      _
    // Predicated region
    $region118: #{tpu_custom_call.1} parent=1 // pred_check
      _
    $region119: #{tpu_custom_call.1} parent=1 // pred_check_branch
      %270 = sbr.rel (0) target = $region121
    $region120: #{tpu_custom_call.1} parent=1 // pred_region
      _
    $region121: #{tpu_custom_call.1} parent=1 // pred_fallthru
      _
    // Predicated region
    $region122: #{tpu_custom_call.1} parent=1 // pred_check
      _
    $region123: #{tpu_custom_call.1} parent=1 // pred_check_branch
      %272 = sbr.rel (0) target = $region125
    $region124: #{tpu_custom_call.1} parent=1 // pred_region
      _
    $region125: #{tpu_custom_call.1} parent=1 // pred_fallthru
      _
    // Predicated region
    $region126: #{tpu_custom_call.1} parent=1 // pred_check
      _
    $region127: #{tpu_custom_call.1} parent=1 // pred_check_branch
      %274 = sbr.rel (0) target = $region129
    $region128: #{tpu_custom_call.1} parent=1 // pred_region
      _
    $region129: #{tpu_custom_call.1} parent=1 // pred_fallthru
      _
    // Predicated region
    $region130: #{tpu_custom_call.1} parent=1 // pred_check
      _
    $region131: #{tpu_custom_call.1} parent=1 // pred_check_branch
      %276 = sbr.rel (0) target = $region133
    $region132: #{tpu_custom_call.1} parent=1 // pred_region
      %277 = dma.done [#allocation3], 512
    $region133: #{tpu_custom_call.1} parent=1 // pred_fallthru
      _
    // Predicated region
    $region134: #{tpu_custom_call.1} parent=1 // pred_check
      _
    $region135: #{tpu_custom_call.1} parent=1 // pred_check_branch
      %279 = sbr.rel (0) target = $region137
    $region136: #{tpu_custom_call.1} parent=1 // pred_region
      %280 = dma.done [#allocation5], 256
    $region137: #{tpu_custom_call.1} parent=1 // pred_fallthru
      _
    // Predicated region
    $region138: #{tpu_custom_call.1} parent=1 // pred_check
      _
    $region139: #{tpu_custom_call.1} parent=1 // pred_check_branch
      %282 = sbr.rel (0) target = $region141
    $region140: #{tpu_custom_call.1} parent=1 // pred_region
      %283 = dma.done [#allocation5], 16
    $region141: #{tpu_custom_call.1} parent=1 // pred_fallthru
      _
    // Predicated region
    $region142: #{tpu_custom_call.1} parent=1 // pred_check
      _
    $region143: #{tpu_custom_call.1} parent=1 // pred_check_branch
      %285 = sbr.rel (0) target = $region145
    $region144: #{tpu_custom_call.1} parent=1 // pred_region
      %286 = dma.done [#allocation8], 64
    $region145: #{tpu_custom_call.1} parent=1 // pred_fallthru
      _
    // Predicated region
    $region146: #{tpu_custom_call.1} parent=1 // pred_check
      _
    $region147: #{tpu_custom_call.1} parent=1 // pred_check_branch
      %288 = sbr.rel (0) target = $region149
    $region148: #{tpu_custom_call.1} parent=1 // pred_region
      %289 = dma.done [#allocation8], 64
    $region149: #{tpu_custom_call.1} parent=1 // pred_fallthru
      _
    // Predicated region
    $region150: #{tpu_custom_call.1} parent=1 // pred_check
      _
    $region151: #{tpu_custom_call.1} parent=1 // pred_check_branch
      %291 = sbr.rel (0) target = $region153
    $region152: #{tpu_custom_call.1} parent=1 // pred_region
      %292 = dma.done [#allocation11], 16
    $region153: #{tpu_custom_call.1} parent=1 // pred_fallthru
      _
    // Predicated region
    $region154: #{tpu_custom_call.1} parent=1 // pred_check
      _
    $region155: #{tpu_custom_call.1} parent=1 // pred_check_branch
      %294 = sbr.rel (0) target = $region157
    $region156: #{tpu_custom_call.1} parent=1 // pred_region
      %295 = dma.done [#allocation11], 256
    $region157: #{tpu_custom_call.1} parent=1 // pred_fallthru
      _
    // Predicated region
    $region158: #{tpu_custom_call.1} parent=1 // pred_check
      _
    $region159: #{tpu_custom_call.1} parent=1 // pred_check_branch
      %297 = sbr.rel (0) target = $region161
    $region160: #{tpu_custom_call.1} parent=1 // pred_region
      %298 = dma.done [#allocation14], 16
    $region161: #{tpu_custom_call.1} parent=1 // pred_fallthru
      _
    // Predicated region
    $region162: #{tpu_custom_call.1} parent=1 // pred_check
      _
    $region163: #{tpu_custom_call.1} parent=1 // pred_check_branch
      %300 = sbr.rel (0) target = $region165
    $region164: #{tpu_custom_call.1} parent=1 // pred_region
      %301 = dma.done [#allocation14], 16
    $region165: #{tpu_custom_call.1} parent=1 // pred_fallthru
      _
    // Predicated region
    $region166: #{tpu_custom_call.1} parent=1 // pred_check
      _
    $region167: #{tpu_custom_call.1} parent=1 // pred_check_branch
      %303 = sbr.rel (0) target = $region169
    $region168: #{tpu_custom_call.1} parent=1 // pred_region
      %304 = dma.done [#allocation17], 384
    $region169: #{tpu_custom_call.1} parent=1 // pred_fallthru
      _
    // Predicated region
    $region170: #{tpu_custom_call.1} parent=1 // pred_check
      _
    $region171: #{tpu_custom_call.1} parent=1 // pred_check_branch
      %306 = sbr.rel (0) target = $region173
    $region172: #{tpu_custom_call.1} parent=1 // pred_region
      %307 = dma.done [#allocation17], 128
    $region173: #{tpu_custom_call.1} parent=1 // pred_fallthru
      _
    // Predicated region
    $region174: #{tpu_custom_call.1} parent=1 // pred_check
      _
    $region175: #{tpu_custom_call.1} parent=1 // pred_check_branch
      %309 = sbr.rel (0) target = $region177
    $region176: #{tpu_custom_call.1} parent=1 // pred_region
      %310 = dma.done [#allocation20], 16
    $region177: #{tpu_custom_call.1} parent=1 // pred_fallthru
      _
    // Predicated region
    $region178: #{tpu_custom_call.1} parent=1 // pred_check
      _
    $region179: #{tpu_custom_call.1} parent=1 // pred_check_branch
      %312 = sbr.rel (0) target = $region181
    $region180: #{tpu_custom_call.1} parent=1 // pred_region
      %313 = dma.done [#allocation20], 64
    $region181: #{tpu_custom_call.1} parent=1 // pred_fallthru
      _
    // Predicated region
    $region182: #{tpu_custom_call.1} parent=1 // pred_check
      _
    $region183: #{tpu_custom_call.1} parent=1 // pred_check_branch
      %315 = sbr.rel (0) target = $region185
    $region184: #{tpu_custom_call.1} parent=1 // pred_region
      %316 = dma.done [#allocation23], 64
    $region185: #{tpu_custom_call.1} parent=1 // pred_fallthru
      _
    %v317 = vld [vmem:[%s1] sm:$0xff]
    %v318 = vld [vmem:[%s1 + $0x8] sm:$0xff]
    %v319 = vld [vmem:[%s1 + $0x10] sm:$0xff]
    %v320 = vld [vmem:[%s1 + $0x18] sm:$0xff]
    %v321 = vld [vmem:[%s3] sm:$0xff]
    %v322 = vld [vmem:[%s3 + $0x8] sm:$0xff]
    %v323 = vld [vmem:[%s3 + $0x10] sm:$0xff]
    %v324 = vld [vmem:[%s3 + $0x18] sm:$0xff]
    %v325 = vld [vmem:[%s5] sm:$0xff]
    %v326 = vld [vmem:[%s5 + $0x8] sm:$0xff]
    %v327 = vld [vmem:[%s5 + $0x10] sm:$0xff]
    %v328 = vld [vmem:[%s5 + $0x18] sm:$0xff]
    %v329 = vld [vmem:[#allocation2] sm:$0xff]
    %v330 = vld [vmem:[#allocation2 + $0x8] sm:$0xff]
    %v331 = vld [vmem:[#allocation2 + $0x10] sm:$0xff]
    %v332 = vld [vmem:[#allocation2 + $0x18] sm:$0xff]
    %v333 = vld [vmem:[#allocation4] sm:$0xff]
    %v334 = vld [vmem:[#allocation4 + $0x8] sm:$0xff]
    %vm335 = vcmask 130048
    %v337 = vsel %vm335, %v317, 0
    %v340 = vsel %vm335, %v318, 0
    %v343 = vsel %vm335, %v319, 0
    %v346 = vsel %vm335, %v320, 0
    %348 = vmatprep.subr.mxu0 0.0
    %349 = vmatpush1.msra.mxu0 %v333
    %350 = vmatprep.subr.mxu0 0.0
    %351 = vmatpush1.msra.mxu0 %v334
    %352 = vmatprep.subr.mxu0 0.0
    %353 = vmatpush1.msra.mxu0 0.0
    %354 = vmatprep.subr.mxu0 0.0
    %355 = vmatpush1.msra.mxu0 0.0
    %356 = vmatprep.subr.mxu0 0.0
    %357 = vmatpush1.msra.mxu0 0.0
    %358 = vmatprep.subr.mxu0 0.0
    %359 = vmatpush1.msra.mxu0 0.0
    %360 = vmatprep.subr.mxu0 0.0
    %361 = vmatpush1.msra.mxu0 0.0
    %362 = vmatprep.subr.mxu0 0.0
    %363 = vmatpush1.msra.mxu0 0.0
    %364 = vmatprep.subr.mxu0 0.0
    %365 = vmatpush1.msra.mxu0 0.0
    %366 = vmatprep.subr.mxu0 0.0
    %367 = vmatpush1.msra.mxu0 0.0
    %368 = vmatprep.subr.mxu0 0.0
    %369 = vmatpush1.msra.mxu0 0.0
    %370 = vmatprep.subr.mxu0 0.0
    %371 = vmatpush1.msra.mxu0 0.0
    %372 = vmatprep.subr.mxu0 0.0
    %373 = vmatpush1.msra.mxu0 0.0
    %374 = vmatprep.subr.mxu0 0.0
    %375 = vmatpush1.msra.mxu0 0.0
    %376 = vmatprep.subr.mxu0 0.0
    %377 = vmatpush1.msra.mxu0 0.0
    %378 = vmatprep.subr.mxu0 0.0
    %379 = vmatpush1.msra.mxu0 0.0
    %380 = vmatprep.subr.mxu0 0.0
    %381 = vmatpush1.msra.mxu0 0.0
    %382 = vmatprep.subr.mxu0 0.0
    %383 = vmatpush1.msra.mxu0 0.0
    %384 = vmatprep.subr.mxu0 0.0
    %385 = vmatpush1.msra.mxu0 0.0
    %386 = vmatprep.subr.mxu0 0.0
    %387 = vmatpush1.msra.mxu0 0.0
    %388 = vmatprep.subr.mxu0 0.0
    %389 = vmatpush1.msra.mxu0 0.0
    %390 = vmatprep.subr.mxu0 0.0
    %391 = vmatpush1.msra.mxu0 0.0
    %392 = vmatprep.subr.mxu0 0.0
    %393 = vmatpush1.msra.mxu0 0.0
    %394 = vmatprep.subr.mxu0 0.0
    %395 = vmatpush1.msra.mxu0 0.0
    %396 = vmatprep.subr.mxu0 0.0
    %397 = vmatpush1.msra.mxu0 0.0
    %398 = vmatprep.subr.mxu0 0.0
    %399 = vmatpush1.msra.mxu0 0.0
    %400 = vmatprep.subr.mxu0 0.0
    %401 = vmatpush1.msra.mxu0 0.0
    %402 = vmatprep.subr.mxu0 0.0
    %403 = vmatpush1.msra.mxu0 0.0
    %404 = vmatprep.subr.mxu0 0.0
    %405 = vmatpush1.msra.mxu0 0.0
    %406 = vmatprep.subr.mxu0 0.0
    %407 = vmatpush1.msra.mxu0 0.0
    %408 = vmatprep.subr.mxu0 0.0
    %409 = vmatpush1.msra.mxu0 0.0
    %410 = vmatprep.subr.mxu0 0.0
    %411 = vmatpush1.msra.mxu0 0.0
    %412 = vmatprep.mubr.f32.mxu0 0.0
    %413 = vmatmul.mubr.f32.gmra.mrb[0].mxu0 %v337
    %v414 = vpop.f32.mrb[0].mxu0
    %v415 = vadd.f32 0.0, %v414
    %v416 = vpop.f32.mrb[0].mxu0
    %417 = vmatprep.mubr.f32.mxu0 0.0
    %418 = vmatmul.mubr.f32.gmra.mrb[0].mxu0 %v340
    %v419 = vpop.f32.mrb[0].mxu0
    %v420 = vadd.f32 0.0, %v419
    %v421 = vpop.f32.mrb[0].mxu0
    %422 = vmatprep.mubr.f32.mxu0 0.0
    %423 = vmatmul.mubr.f32.gmra.mrb[0].mxu0 %v343
    %v424 = vpop.f32.mrb[0].mxu0
    %v425 = vadd.f32 0.0, %v424
    %v426 = vpop.f32.mrb[0].mxu0
    %427 = vmatprep.mubr.f32.mxu0 0.0
    %428 = vmatmul.mubr.f32.gmra.mrb[0].mxu0 %v346
    %v429 = vpop.f32.mrb[0].mxu0
    %v430 = vadd.f32 0.0, %v429
    %v431 = vpop.f32.mrb[0].mxu0
    %432 = vdwg.mxu0
    %v433 = vld [vmem:[#allocation6] sm:$0x1]
    %v435 = vlaneseq
    %v436 = vshrl.u32 %v435, 7
    %v437 = vsub.s32 0, %v436
    %v438 = vrot.slane %v433, %v437
    %vm440 = vcmask 261120
    %v442 = vsel %vm440, %v321, 0
    %v445 = vsel %vm440, %v322, 0
    %v448 = vsel %vm440, %v323, 0
    %v451 = vsel %vm440, %v324, 0
    %453 = vmatprep.subr.mxu0 0.0
    %454 = vmatpush1.msra.mxu0 %v415
    %455 = vmatprep.subr.mxu0 0.0
    %456 = vmatpush1.msra.mxu0 %v420
    %457 = vmatprep.subr.mxu0 0.0
    %458 = vmatpush1.msra.mxu0 %v425
    %459 = vmatprep.subr.mxu0 0.0
    %460 = vmatpush1.msra.mxu0 %v430
    %461 = vmatprep.subr.mxu0 0.0
    %462 = vmatpush1.msra.mxu0 0.0
    %463 = vmatprep.subr.mxu0 0.0
    %464 = vmatpush1.msra.mxu0 0.0
    %465 = vmatprep.subr.mxu0 0.0
    %466 = vmatpush1.msra.mxu0 0.0
    %467 = vmatprep.subr.mxu0 0.0
    %468 = vmatpush1.msra.mxu0 0.0
    %469 = vmatprep.subr.mxu0 0.0
    %470 = vmatpush1.msra.mxu0 0.0
    %471 = vmatprep.subr.mxu0 0.0
    %472 = vmatpush1.msra.mxu0 0.0
    %473 = vmatprep.subr.mxu0 0.0
    %474 = vmatpush1.msra.mxu0 0.0
    %475 = vmatprep.subr.mxu0 0.0
    %476 = vmatpush1.msra.mxu0 0.0
    %477 = vmatprep.subr.mxu0 0.0
    %478 = vmatpush1.msra.mxu0 0.0
    %479 = vmatprep.subr.mxu0 0.0
    %480 = vmatpush1.msra.mxu0 0.0
    %481 = vmatprep.subr.mxu0 0.0
    %482 = vmatpush1.msra.mxu0 0.0
    %483 = vmatprep.subr.mxu0 0.0
    %484 = vmatpush1.msra.mxu0 0.0
    %485 = vmatprep.subr.mxu0 0.0
    %486 = vmatpush1.msra.mxu0 0.0
    %487 = vmatprep.subr.mxu0 0.0
    %488 = vmatpush1.msra.mxu0 0.0
    %489 = vmatprep.subr.mxu0 0.0
    %490 = vmatpush1.msra.mxu0 0.0
    %491 = vmatprep.subr.mxu0 0.0
    %492 = vmatpush1.msra.mxu0 0.0
    %493 = vmatprep.subr.mxu0 0.0
    %494 = vmatpush1.msra.mxu0 0.0
    %495 = vmatprep.subr.mxu0 0.0
    %496 = vmatpush1.msra.mxu0 0.0
    %497 = vmatprep.subr.mxu0 0.0
    %498 = vmatpush1.msra.mxu0 0.0
    %499 = vmatprep.subr.mxu0 0.0
    %500 = vmatpush1.msra.mxu0 0.0
    %501 = vmatprep.subr.mxu0 0.0
    %502 = vmatpush1.msra.mxu0 0.0
    %503 = vmatprep.subr.mxu0 0.0
    %504 = vmatpush1.msra.mxu0 0.0
    %505 = vmatprep.subr.mxu0 0.0
    %506 = vmatpush1.msra.mxu0 0.0
    %507 = vmatprep.subr.mxu0 0.0
    %508 = vmatpush1.msra.mxu0 0.0
    %509 = vmatprep.subr.mxu0 0.0
    %510 = vmatpush1.msra.mxu0 0.0
    %511 = vmatprep.subr.mxu0 0.0
    %512 = vmatpush1.msra.mxu0 0.0
    %513 = vmatprep.subr.mxu0 0.0
    %514 = vmatpush1.msra.mxu0 0.0
    %515 = vmatprep.subr.mxu0 0.0
    %516 = vmatpush1.msra.mxu0 0.0
    %517 = vmatprep.mubr.f32.mxu0 0.0
    %518 = vmatmul.mubr.f32.gmra.mrb[0].mxu0 %v442
    %v519 = vpop.f32.mrb[0].mxu0
    %v520 = vadd.f32 %v438, %v519
    %v521 = vpop.f32.mrb[0].mxu0
    %522 = vmatprep.mubr.f32.mxu0 0.0
    %523 = vmatmul.mubr.f32.gmra.mrb[0].mxu0 %v445
    %v524 = vpop.f32.mrb[0].mxu0
    %v525 = vadd.f32 %v438, %v524
    %v526 = vpop.f32.mrb[0].mxu0
    %527 = vmatprep.mubr.f32.mxu0 0.0
    %528 = vmatmul.mubr.f32.gmra.mrb[0].mxu0 %v448
    %v529 = vpop.f32.mrb[0].mxu0
    %v530 = vadd.f32 %v438, %v529
    %v531 = vpop.f32.mrb[0].mxu0
    %532 = vmatprep.mubr.f32.mxu0 0.0
    %533 = vmatmul.mubr.f32.gmra.mrb[0].mxu0 %v451
    %v534 = vpop.f32.mrb[0].mxu0
    %v535 = vadd.f32 %v438, %v534
    %v536 = vpop.f32.mrb[0].mxu0
    %537 = vdwg.mxu0
    %v538 = vmax.f32 %v520, 0.0
    %v539 = vmax.f32 %v525, 0.0
    %v540 = vmax.f32 %v530, 0.0
    %v541 = vmax.f32 %v535, 0.0
    %v542 = vld [vmem:[%s13] sm:$0xff]
    %v543 = vld [vmem:[%s13 + $0x8] sm:$0xff]
    %v544 = vld [vmem:[%s13 + $0x10] sm:$0xff]
    %v545 = vld [vmem:[%s13 + $0x18] sm:$0xff]
    %v546 = vld [vmem:[%s13 + $0x20] sm:$0xff]
    %v547 = vld [vmem:[%s13 + $0x28] sm:$0xff]
    %v548 = vld [vmem:[%s13 + $0x30] sm:$0xff]
    %v549 = vld [vmem:[%s13 + $0x38] sm:$0xff]
    %v551 = vsel %vm335, %v538, 0
    %v554 = vsel %vm335, %v539, 0
    %v557 = vsel %vm335, %v540, 0
    %v560 = vsel %vm335, %v541, 0
    %562 = vmatprep.subr.mxu0 0.0
    %563 = vmatpush1.msra.mxu0 %v542
    %564 = vmatprep.subr.mxu0 0.0
    %565 = vmatpush1.msra.mxu0 %v543
    %566 = vmatprep.subr.mxu0 0.0
    %567 = vmatpush1.msra.mxu0 0.0
    %568 = vmatprep.subr.mxu0 0.0
    %569 = vmatpush1.msra.mxu0 0.0
    %570 = vmatprep.subr.mxu0 0.0
    %571 = vmatpush1.msra.mxu0 0.0
    %572 = vmatprep.subr.mxu0 0.0
    %573 = vmatpush1.msra.mxu0 0.0
    %574 = vmatprep.subr.mxu0 0.0
    %575 = vmatpush1.msra.mxu0 0.0
    %576 = vmatprep.subr.mxu0 0.0
    %577 = vmatpush1.msra.mxu0 0.0
    %578 = vmatprep.subr.mxu0 0.0
    %579 = vmatpush1.msra.mxu0 0.0
    %580 = vmatprep.subr.mxu0 0.0
    %581 = vmatpush1.msra.mxu0 0.0
    %582 = vmatprep.subr.mxu0 0.0
    %583 = vmatpush1.msra.mxu0 0.0
    %584 = vmatprep.subr.mxu0 0.0
    %585 = vmatpush1.msra.mxu0 0.0
    %586 = vmatprep.subr.mxu0 0.0
    %587 = vmatpush1.msra.mxu0 0.0
    %588 = vmatprep.subr.mxu0 0.0
    %589 = vmatpush1.msra.mxu0 0.0
    %590 = vmatprep.subr.mxu0 0.0
    %591 = vmatpush1.msra.mxu0 0.0
    %592 = vmatprep.subr.mxu0 0.0
    %593 = vmatpush1.msra.mxu0 0.0
    %594 = vmatprep.subr.mxu0 0.0
    %595 = vmatpush1.msra.mxu0 0.0
    %596 = vmatprep.subr.mxu0 0.0
    %597 = vmatpush1.msra.mxu0 0.0
    %598 = vmatprep.subr.mxu0 0.0
    %599 = vmatpush1.msra.mxu0 0.0
    %600 = vmatprep.subr.mxu0 0.0
    %601 = vmatpush1.msra.mxu0 0.0
    %602 = vmatprep.subr.mxu0 0.0
    %603 = vmatpush1.msra.mxu0 0.0
    %604 = vmatprep.subr.mxu0 0.0
    %605 = vmatpush1.msra.mxu0 0.0
    %606 = vmatprep.subr.mxu0 0.0
    %607 = vmatpush1.msra.mxu0 0.0
    %608 = vmatprep.subr.mxu0 0.0
    %609 = vmatpush1.msra.mxu0 0.0
    %610 = vmatprep.subr.mxu0 0.0
    %611 = vmatpush1.msra.mxu0 0.0
    %612 = vmatprep.subr.mxu0 0.0
    %613 = vmatpush1.msra.mxu0 0.0
    %614 = vmatprep.subr.mxu0 0.0
    %615 = vmatpush1.msra.mxu0 0.0
    %616 = vmatprep.subr.mxu0 0.0
    %617 = vmatpush1.msra.mxu0 0.0
    %618 = vmatprep.subr.mxu0 0.0
    %619 = vmatpush1.msra.mxu0 0.0
    %620 = vmatprep.subr.mxu0 0.0
    %621 = vmatpush1.msra.mxu0 0.0
    %622 = vmatprep.subr.mxu0 0.0
    %623 = vmatpush1.msra.mxu0 0.0
    %624 = vmatprep.subr.mxu0 0.0
    %625 = vmatpush1.msra.mxu0 0.0
    %626 = vmatprep.mubr.f32.mxu0 0.0
    %627 = vmatmul.mubr.f32.gmra.mrb[0].mxu0 %v551
    %v628 = vpop.f32.mrb[0].mxu0
    %v629 = vadd.f32 0.0, %v628
    %v630 = vpop.f32.mrb[0].mxu0
    %631 = vmatprep.mubr.f32.mxu0 0.0
    %632 = vmatmul.mubr.f32.gmra.mrb[0].mxu0 %v554
    %v633 = vpop.f32.mrb[0].mxu0
    %v634 = vadd.f32 0.0, %v633
    %v635 = vpop.f32.mrb[0].mxu0
    %636 = vmatprep.mubr.f32.mxu0 0.0
    %637 = vmatmul.mubr.f32.gmra.mrb[0].mxu0 %v557
    %v638 = vpop.f32.mrb[0].mxu0
    %v639 = vadd.f32 0.0, %v638
    %v640 = vpop.f32.mrb[0].mxu0
    %641 = vmatprep.mubr.f32.mxu0 0.0
    %642 = vmatmul.mubr.f32.gmra.mrb[0].mxu0 %v560
    %v643 = vpop.f32.mrb[0].mxu0
    %v644 = vadd.f32 0.0, %v643
    %v645 = vpop.f32.mrb[0].mxu0
    %646 = vdwg.mxu0
    %647 = vmatprep.subr.mxu0 0.0
    %648 = vmatpush1.msra.mxu0 %v544
    %649 = vmatprep.subr.mxu0 0.0
    %650 = vmatpush1.msra.mxu0 %v545
    %651 = vmatprep.subr.mxu0 0.0
    %652 = vmatpush1.msra.mxu0 0.0
    %653 = vmatprep.subr.mxu0 0.0
    %654 = vmatpush1.msra.mxu0 0.0
    %655 = vmatprep.subr.mxu0 0.0
    %656 = vmatpush1.msra.mxu0 0.0
    %657 = vmatprep.subr.mxu0 0.0
    %658 = vmatpush1.msra.mxu0 0.0
    %659 = vmatprep.subr.mxu0 0.0
    %660 = vmatpush1.msra.mxu0 0.0
    %661 = vmatprep.subr.mxu0 0.0
    %662 = vmatpush1.msra.mxu0 0.0
    %663 = vmatprep.subr.mxu0 0.0
    %664 = vmatpush1.msra.mxu0 0.0
    %665 = vmatprep.subr.mxu0 0.0
    %666 = vmatpush1.msra.mxu0 0.0
    %667 = vmatprep.subr.mxu0 0.0
    %668 = vmatpush1.msra.mxu0 0.0
    %669 = vmatprep.subr.mxu0 0.0
    %670 = vmatpush1.msra.mxu0 0.0
    %671 = vmatprep.subr.mxu0 0.0
    %672 = vmatpush1.msra.mxu0 0.0
    %673 = vmatprep.subr.mxu0 0.0
    %674 = vmatpush1.msra.mxu0 0.0
    %675 = vmatprep.subr.mxu0 0.0
    %676 = vmatpush1.msra.mxu0 0.0
    %677 = vmatprep.subr.mxu0 0.0
    %678 = vmatpush1.msra.mxu0 0.0
    %679 = vmatprep.subr.mxu0 0.0
    %680 = vmatpush1.msra.mxu0 0.0
    %681 = vmatprep.subr.mxu0 0.0
    %682 = vmatpush1.msra.mxu0 0.0
    %683 = vmatprep.subr.mxu0 0.0
    %684 = vmatpush1.msra.mxu0 0.0
    %685 = vmatprep.subr.mxu0 0.0
    %686 = vmatpush1.msra.mxu0 0.0
    %687 = vmatprep.subr.mxu0 0.0
    %688 = vmatpush1.msra.mxu0 0.0
    %689 = vmatprep.subr.mxu0 0.0
    %690 = vmatpush1.msra.mxu0 0.0
    %691 = vmatprep.subr.mxu0 0.0
    %692 = vmatpush1.msra.mxu0 0.0
    %693 = vmatprep.subr.mxu0 0.0
    %694 = vmatpush1.msra.mxu0 0.0
    %695 = vmatprep.subr.mxu0 0.0
    %696 = vmatpush1.msra.mxu0 0.0
    %697 = vmatprep.subr.mxu0 0.0
    %698 = vmatpush1.msra.mxu0 0.0
    %699 = vmatprep.subr.mxu0 0.0
    %700 = vmatpush1.msra.mxu0 0.0
    %701 = vmatprep.subr.mxu0 0.0
    %702 = vmatpush1.msra.mxu0 0.0
    %703 = vmatprep.subr.mxu0 0.0
    %704 = vmatpush1.msra.mxu0 0.0
    %705 = vmatprep.subr.mxu0 0.0
    %706 = vmatpush1.msra.mxu0 0.0
    %707 = vmatprep.subr.mxu0 0.0
    %708 = vmatpush1.msra.mxu0 0.0
    %709 = vmatprep.subr.mxu0 0.0
    %710 = vmatpush1.msra.mxu0 0.0
    %711 = vmatprep.mubr.f32.mxu0 0.0
    %712 = vmatmul.mubr.f32.gmra.mrb[0].mxu0 %v551
    %v713 = vpop.f32.mrb[0].mxu0
    %v714 = vadd.f32 0.0, %v713
    %v715 = vpop.f32.mrb[0].mxu0
    %716 = vmatprep.mubr.f32.mxu0 0.0
    %717 = vmatmul.mubr.f32.gmra.mrb[0].mxu0 %v554
    %v718 = vpop.f32.mrb[0].mxu0
    %v719 = vadd.f32 0.0, %v718
    %v720 = vpop.f32.mrb[0].mxu0
    %721 = vmatprep.mubr.f32.mxu0 0.0
    %722 = vmatmul.mubr.f32.gmra.mrb[0].mxu0 %v557
    %v723 = vpop.f32.mrb[0].mxu0
    %v724 = vadd.f32 0.0, %v723
    %v725 = vpop.f32.mrb[0].mxu0
    %726 = vmatprep.mubr.f32.mxu0 0.0
    %727 = vmatmul.mubr.f32.gmra.mrb[0].mxu0 %v560
    %v728 = vpop.f32.mrb[0].mxu0
    %v729 = vadd.f32 0.0, %v728
    %v730 = vpop.f32.mrb[0].mxu0
    %731 = vdwg.mxu0
    %732 = vmatprep.subr.mxu0 0.0
    %733 = vmatpush1.msra.mxu0 %v546
    %734 = vmatprep.subr.mxu0 0.0
    %735 = vmatpush1.msra.mxu0 %v547
    %736 = vmatprep.subr.mxu0 0.0
    %737 = vmatpush1.msra.mxu0 0.0
    %738 = vmatprep.subr.mxu0 0.0
    %739 = vmatpush1.msra.mxu0 0.0
    %740 = vmatprep.subr.mxu0 0.0
    %741 = vmatpush1.msra.mxu0 0.0
    %742 = vmatprep.subr.mxu0 0.0
    %743 = vmatpush1.msra.mxu0 0.0
    %744 = vmatprep.subr.mxu0 0.0
    %745 = vmatpush1.msra.mxu0 0.0
    %746 = vmatprep.subr.mxu0 0.0
    %747 = vmatpush1.msra.mxu0 0.0
    %748 = vmatprep.subr.mxu0 0.0
    %749 = vmatpush1.msra.mxu0 0.0
    %750 = vmatprep.subr.mxu0 0.0
    %751 = vmatpush1.msra.mxu0 0.0
    %752 = vmatprep.subr.mxu0 0.0
    %753 = vmatpush1.msra.mxu0 0.0
    %754 = vmatprep.subr.mxu0 0.0
    %755 = vmatpush1.msra.mxu0 0.0
    %756 = vmatprep.subr.mxu0 0.0
    %757 = vmatpush1.msra.mxu0 0.0
    %758 = vmatprep.subr.mxu0 0.0
    %759 = vmatpush1.msra.mxu0 0.0
    %760 = vmatprep.subr.mxu0 0.0
    %761 = vmatpush1.msra.mxu0 0.0
    %762 = vmatprep.subr.mxu0 0.0
    %763 = vmatpush1.msra.mxu0 0.0
    %764 = vmatprep.subr.mxu0 0.0
    %765 = vmatpush1.msra.mxu0 0.0
    %766 = vmatprep.subr.mxu0 0.0
    %767 = vmatpush1.msra.mxu0 0.0
    %768 = vmatprep.subr.mxu0 0.0
    %769 = vmatpush1.msra.mxu0 0.0
    %770 = vmatprep.subr.mxu0 0.0
    %771 = vmatpush1.msra.mxu0 0.0
    %772 = vmatprep.subr.mxu0 0.0
    %773 = vmatpush1.msra.mxu0 0.0
    %774 = vmatprep.subr.mxu0 0.0
    %775 = vmatpush1.msra.mxu0 0.0
    %776 = vmatprep.subr.mxu0 0.0
    %777 = vmatpush1.msra.mxu0 0.0
    %778 = vmatprep.subr.mxu0 0.0
    %779 = vmatpush1.msra.mxu0 0.0
    %780 = vmatprep.subr.mxu0 0.0
    %781 = vmatpush1.msra.mxu0 0.0
    %782 = vmatprep.subr.mxu0 0.0
    %783 = vmatpush1.msra.mxu0 0.0
    %784 = vmatprep.subr.mxu0 0.0
    %785 = vmatpush1.msra.mxu0 0.0
    %786 = vmatprep.subr.mxu0 0.0
    %787 = vmatpush1.msra.mxu0 0.0
    %788 = vmatprep.subr.mxu0 0.0
    %789 = vmatpush1.msra.mxu0 0.0
    %790 = vmatprep.subr.mxu0 0.0
    %791 = vmatpush1.msra.mxu0 0.0
    %792 = vmatprep.subr.mxu0 0.0
    %793 = vmatpush1.msra.mxu0 0.0
    %794 = vmatprep.subr.mxu0 0.0
    %795 = vmatpush1.msra.mxu0 0.0
    %796 = vmatprep.mubr.f32.mxu0 0.0
    %797 = vmatmul.mubr.f32.gmra.mrb[0].mxu0 %v551
    %v798 = vpop.f32.mrb[0].mxu0
    %v799 = vadd.f32 0.0, %v798
    %v800 = vpop.f32.mrb[0].mxu0
    %801 = vmatprep.mubr.f32.mxu0 0.0
    %802 = vmatmul.mubr.f32.gmra.mrb[0].mxu0 %v554
    %v803 = vpop.f32.mrb[0].mxu0
    %v804 = vadd.f32 0.0, %v803
    %v805 = vpop.f32.mrb[0].mxu0
    %806 = vmatprep.mubr.f32.mxu0 0.0
    %807 = vmatmul.mubr.f32.gmra.mrb[0].mxu0 %v557
    %v808 = vpop.f32.mrb[0].mxu0
    %v809 = vadd.f32 0.0, %v808
    %v810 = vpop.f32.mrb[0].mxu0
    %811 = vmatprep.mubr.f32.mxu0 0.0
    %812 = vmatmul.mubr.f32.gmra.mrb[0].mxu0 %v560
    %v813 = vpop.f32.mrb[0].mxu0
    %v814 = vadd.f32 0.0, %v813
    %v815 = vpop.f32.mrb[0].mxu0
    %816 = vdwg.mxu0
    %817 = vmatprep.subr.mxu0 0.0
    %818 = vmatpush1.msra.mxu0 %v548
    %819 = vmatprep.subr.mxu0 0.0
    %820 = vmatpush1.msra.mxu0 %v549
    %821 = vmatprep.subr.mxu0 0.0
    %822 = vmatpush1.msra.mxu0 0.0
    %823 = vmatprep.subr.mxu0 0.0
    %824 = vmatpush1.msra.mxu0 0.0
    %825 = vmatprep.subr.mxu0 0.0
    %826 = vmatpush1.msra.mxu0 0.0
    %827 = vmatprep.subr.mxu0 0.0
    %828 = vmatpush1.msra.mxu0 0.0
    %829 = vmatprep.subr.mxu0 0.0
    %830 = vmatpush1.msra.mxu0 0.0
    %831 = vmatprep.subr.mxu0 0.0
    %832 = vmatpush1.msra.mxu0 0.0
    %833 = vmatprep.subr.mxu0 0.0
    %834 = vmatpush1.msra.mxu0 0.0
    %835 = vmatprep.subr.mxu0 0.0
    %836 = vmatpush1.msra.mxu0 0.0
    %837 = vmatprep.subr.mxu0 0.0
    %838 = vmatpush1.msra.mxu0 0.0
    %839 = vmatprep.subr.mxu0 0.0
    %840 = vmatpush1.msra.mxu0 0.0
    %841 = vmatprep.subr.mxu0 0.0
    %842 = vmatpush1.msra.mxu0 0.0
    %843 = vmatprep.subr.mxu0 0.0
    %844 = vmatpush1.msra.mxu0 0.0
    %845 = vmatprep.subr.mxu0 0.0
    %846 = vmatpush1.msra.mxu0 0.0
    %847 = vmatprep.subr.mxu0 0.0
    %848 = vmatpush1.msra.mxu0 0.0
    %849 = vmatprep.subr.mxu0 0.0
    %850 = vmatpush1.msra.mxu0 0.0
    %851 = vmatprep.subr.mxu0 0.0
    %852 = vmatpush1.msra.mxu0 0.0
    %853 = vmatprep.subr.mxu0 0.0
    %854 = vmatpush1.msra.mxu0 0.0
    %855 = vmatprep.subr.mxu0 0.0
    %856 = vmatpush1.msra.mxu0 0.0
    %857 = vmatprep.subr.mxu0 0.0
    %858 = vmatpush1.msra.mxu0 0.0
    %859 = vmatprep.subr.mxu0 0.0
    %860 = vmatpush1.msra.mxu0 0.0
    %861 = vmatprep.subr.mxu0 0.0
    %862 = vmatpush1.msra.mxu0 0.0
    %863 = vmatprep.subr.mxu0 0.0
    %864 = vmatpush1.msra.mxu0 0.0
    %865 = vmatprep.subr.mxu0 0.0
    %866 = vmatpush1.msra.mxu0 0.0
    %867 = vmatprep.subr.mxu0 0.0
    %868 = vmatpush1.msra.mxu0 0.0
    %869 = vmatprep.subr.mxu0 0.0
    %870 = vmatpush1.msra.mxu0 0.0
    %871 = vmatprep.subr.mxu0 0.0
    %872 = vmatpush1.msra.mxu0 0.0
    %873 = vmatprep.subr.mxu0 0.0
    %874 = vmatpush1.msra.mxu0 0.0
    %875 = vmatprep.subr.mxu0 0.0
    %876 = vmatpush1.msra.mxu0 0.0
    %877 = vmatprep.subr.mxu0 0.0
    %878 = vmatpush1.msra.mxu0 0.0
    %879 = vmatprep.subr.mxu0 0.0
    %880 = vmatpush1.msra.mxu0 0.0
    %881 = vmatprep.mubr.f32.mxu0 0.0
    %882 = vmatmul.mubr.f32.gmra.mrb[0].mxu0 %v551
    %v883 = vpop.f32.mrb[0].mxu0
    %v884 = vadd.f32 0.0, %v883
    %v885 = vpop.f32.mrb[0].mxu0
    %886 = vmatprep.mubr.f32.mxu0 0.0
    %887 = vmatmul.mubr.f32.gmra.mrb[0].mxu0 %v554
    %v888 = vpop.f32.mrb[0].mxu0
    %v889 = vadd.f32 0.0, %v888
    %v890 = vpop.f32.mrb[0].mxu0
    %891 = vmatprep.mubr.f32.mxu0 0.0
    %892 = vmatmul.mubr.f32.gmra.mrb[0].mxu0 %v557
    %v893 = vpop.f32.mrb[0].mxu0
    %v894 = vadd.f32 0.0, %v893
    %v895 = vpop.f32.mrb[0].mxu0
    %896 = vmatprep.mubr.f32.mxu0 0.0
    %897 = vmatmul.mubr.f32.gmra.mrb[0].mxu0 %v560
    %v898 = vpop.f32.mrb[0].mxu0
    %v899 = vadd.f32 0.0, %v898
    %v900 = vpop.f32.mrb[0].mxu0
    %901 = vdwg.mxu0
    %v902 = vld [vmem:[#allocation7] sm:$0x1]
    %v903 = vld [vmem:[#allocation7 + $0x1] sm:$0x1]
    %v904 = vld [vmem:[#allocation7 + $0x2] sm:$0x1]
    %v905 = vld [vmem:[#allocation7 + $0x3] sm:$0x1]
    %v907 = vlaneseq
    %v908 = vshrl.u32 %v907, 7
    %v909 = vsub.s32 0, %v908
    %v910 = vrot.slane %v902, %v909
    %v912 = vmul.f32 %v629, %v910
    %v913 = vmul.f32 %v634, %v910
    %v914 = vmul.f32 %v639, %v910
    %v915 = vmul.f32 %v644, %v910
    %v916 = vsel %vm335, %v912, 0.0
    %917 = vadd.xlane.f32.xlu0 %v916
    %v918 = vpop.xlane.xlu0 %917
    %v919 = vsel %vm335, %v913, 0.0
    %920 = vadd.xlane.f32.xlu0 %v919
    %v921 = vpop.xlane.xlu0 %920
    %v922 = vsel %vm335, %v914, 0.0
    %923 = vadd.xlane.f32.xlu0 %v922
    %v924 = vpop.xlane.xlu0 %923
    %v925 = vsel %vm335, %v915, 0.0
    %926 = vadd.xlane.f32.xlu0 %v925
    %v927 = vpop.xlane.xlu0 %926
    %v929 = vlaneseq
    %v930 = vshrl.u32 %v929, 7
    %v931 = vsub.s32 0, %v930
    %v932 = vrot.slane %v903, %v931
    %v934 = vmul.f32 %v714, %v932
    %v935 = vmul.f32 %v719, %v932
    %v936 = vmul.f32 %v724, %v932
    %v937 = vmul.f32 %v729, %v932
    %v938 = vsel %vm335, %v934, 0.0
    %939 = vadd.xlane.f32.xlu0 %v938
    %v940 = vpop.xlane.xlu0 %939
    %v941 = vsel %vm335, %v935, 0.0
    %942 = vadd.xlane.f32.xlu0 %v941
    %v943 = vpop.xlane.xlu0 %942
    %v944 = vsel %vm335, %v936, 0.0
    %945 = vadd.xlane.f32.xlu0 %v944
    %v946 = vpop.xlane.xlu0 %945
    %v947 = vsel %vm335, %v937, 0.0
    %948 = vadd.xlane.f32.xlu0 %v947
    %v949 = vpop.xlane.xlu0 %948
    %v951 = vlaneseq
    %v952 = vshrl.u32 %v951, 7
    %v953 = vsub.s32 0, %v952
    %v954 = vrot.slane %v904, %v953
    %v956 = vmul.f32 %v799, %v954
    %v957 = vmul.f32 %v804, %v954
    %v958 = vmul.f32 %v809, %v954
    %v959 = vmul.f32 %v814, %v954
    %v960 = vsel %vm335, %v956, 0.0
    %961 = vadd.xlane.f32.xlu0 %v960
    %v962 = vpop.xlane.xlu0 %961
    %v963 = vsel %vm335, %v957, 0.0
    %964 = vadd.xlane.f32.xlu0 %v963
    %v965 = vpop.xlane.xlu0 %964
    %v966 = vsel %vm335, %v958, 0.0
    %967 = vadd.xlane.f32.xlu0 %v966
    %v968 = vpop.xlane.xlu0 %967
    %v969 = vsel %vm335, %v959, 0.0
    %970 = vadd.xlane.f32.xlu0 %v969
    %v971 = vpop.xlane.xlu0 %970
    %v973 = vlaneseq
    %v974 = vshrl.u32 %v973, 7
    %v975 = vsub.s32 0, %v974
    %v976 = vrot.slane %v905, %v975
    %v978 = vmul.f32 %v884, %v976
    %v979 = vmul.f32 %v889, %v976
    %v980 = vmul.f32 %v894, %v976
    %v981 = vmul.f32 %v899, %v976
    %v982 = vsel %vm335, %v978, 0.0
    %983 = vadd.xlane.f32.xlu0 %v982
    %v984 = vpop.xlane.xlu0 %983
    %v985 = vsel %vm335, %v979, 0.0
    %986 = vadd.xlane.f32.xlu0 %v985
    %v987 = vpop.xlane.xlu0 %986
    %v988 = vsel %vm335, %v980, 0.0
    %989 = vadd.xlane.f32.xlu0 %v988
    %v990 = vpop.xlane.xlu0 %989
    %v991 = vsel %vm335, %v981, 0.0
    %992 = vadd.xlane.f32.xlu0 %v991
    %v993 = vpop.xlane.xlu0 %992
    %v994 = vld [vmem:[#allocation9] sm:$0x1]
    %v995 = vld [vmem:[#allocation9 + $0x1] sm:$0x1]
    %v996 = vld [vmem:[#allocation9 + $0x2] sm:$0x1]
    %v997 = vld [vmem:[#allocation9 + $0x3] sm:$0x1]
    %v999 = vsel %vm335, %v994, 0
    %v1002 = vsel %vm335, %v629, 0
    %v1005 = vsel %vm335, %v634, 0
    %v1008 = vsel %vm335, %v639, 0
    %v1011 = vsel %vm335, %v644, 0
    %1013 = vmatprep.subr.mxu0 0.0
    %1014 = vmatpush1.xpose.msra.mxu0 %v1002
    %1015 = vmatprep.subr.mxu0 0.0
    %1016 = vmatpush1.xpose.msra.mxu0 %v1005
    %1017 = vmatprep.subr.mxu0 0.0
    %1018 = vmatpush1.xpose.msra.mxu0 %v1008
    %1019 = vmatprep.subr.mxu0 0.0
    %1020 = vmatpush1.xpose.msra.mxu0 %v1011
    %1021 = vmatprep.subr.mxu0 0.0
    %1022 = vmatpush1.xpose.msra.mxu0 0.0
    %1023 = vmatprep.subr.mxu0 0.0
    %1024 = vmatpush1.xpose.msra.mxu0 0.0
    %1025 = vmatprep.subr.mxu0 0.0
    %1026 = vmatpush1.xpose.msra.mxu0 0.0
    %1027 = vmatprep.subr.mxu0 0.0
    %1028 = vmatpush1.xpose.msra.mxu0 0.0
    %1029 = vmatprep.subr.mxu0 0.0
    %1030 = vmatpush1.xpose.msra.mxu0 0.0
    %1031 = vmatprep.subr.mxu0 0.0
    %1032 = vmatpush1.xpose.msra.mxu0 0.0
    %1033 = vmatprep.subr.mxu0 0.0
    %1034 = vmatpush1.xpose.msra.mxu0 0.0
    %1035 = vmatprep.subr.mxu0 0.0
    %1036 = vmatpush1.xpose.msra.mxu0 0.0
    %1037 = vmatprep.subr.mxu0 0.0
    %1038 = vmatpush1.xpose.msra.mxu0 0.0
    %1039 = vmatprep.subr.mxu0 0.0
    %1040 = vmatpush1.xpose.msra.mxu0 0.0
    %1041 = vmatprep.subr.mxu0 0.0
    %1042 = vmatpush1.xpose.msra.mxu0 0.0
    %1043 = vmatprep.subr.mxu0 0.0
    %1044 = vmatpush1.xpose.msra.mxu0 0.0
    %1045 = vmatprep.subr.mxu0 0.0
    %1046 = vmatpush1.xpose.msra.mxu0 0.0
    %1047 = vmatprep.subr.mxu0 0.0
    %1048 = vmatpush1.xpose.msra.mxu0 0.0
    %1049 = vmatprep.subr.mxu0 0.0
    %1050 = vmatpush1.xpose.msra.mxu0 0.0
    %1051 = vmatprep.subr.mxu0 0.0
    %1052 = vmatpush1.xpose.msra.mxu0 0.0
    %1053 = vmatprep.subr.mxu0 0.0
    %1054 = vmatpush1.xpose.msra.mxu0 0.0
    %1055 = vmatprep.subr.mxu0 0.0
    %1056 = vmatpush1.xpose.msra.mxu0 0.0
    %1057 = vmatprep.subr.mxu0 0.0
    %1058 = vmatpush1.xpose.msra.mxu0 0.0
    %1059 = vmatprep.subr.mxu0 0.0
    %1060 = vmatpush1.xpose.msra.mxu0 0.0
    %1061 = vmatprep.subr.mxu0 0.0
    %1062 = vmatpush1.xpose.msra.mxu0 0.0
    %1063 = vmatprep.subr.mxu0 0.0
    %1064 = vmatpush1.xpose.msra.mxu0 0.0
    %1065 = vmatprep.subr.mxu0 0.0
    %1066 = vmatpush1.xpose.msra.mxu0 0.0
    %1067 = vmatprep.subr.mxu0 0.0
    %1068 = vmatpush1.xpose.msra.mxu0 0.0
    %1069 = vmatprep.subr.mxu0 0.0
    %1070 = vmatpush1.xpose.msra.mxu0 0.0
    %1071 = vmatprep.subr.mxu0 0.0
    %1072 = vmatpush1.xpose.msra.mxu0 0.0
    %1073 = vmatprep.subr.mxu0 0.0
    %1074 = vmatpush1.xpose.msra.mxu0 0.0
    %1075 = vmatprep.subr.mxu0 0.0
    %1076 = vmatpush1.xpose.msra.mxu0 0.0
    %1077 = vmatprep.mubr.f32.mxu0 0.0
    %1078 = vmatmul.mubr.f32.gmra.mrb[0].mxu0 %v999
    %v1079 = vpop.f32.mrb[0].mxu0
    %v1080 = vadd.f32 0.0, %v1079
    %v1081 = vpop.f32.mrb[0].mxu0
    %1082 = vdwg.mxu0
    %v1084 = vsel %vm335, %v995, 0
    %v1087 = vsel %vm335, %v714, 0
    %v1090 = vsel %vm335, %v719, 0
    %v1093 = vsel %vm335, %v724, 0
    %v1096 = vsel %vm335, %v729, 0
    %1098 = vmatprep.subr.mxu0 0.0
    %1099 = vmatpush1.xpose.msra.mxu0 %v1087
    %1100 = vmatprep.subr.mxu0 0.0
    %1101 = vmatpush1.xpose.msra.mxu0 %v1090
    %1102 = vmatprep.subr.mxu0 0.0
    %1103 = vmatpush1.xpose.msra.mxu0 %v1093
    %1104 = vmatprep.subr.mxu0 0.0
    %1105 = vmatpush1.xpose.msra.mxu0 %v1096
    %1106 = vmatprep.subr.mxu0 0.0
    %1107 = vmatpush1.xpose.msra.mxu0 0.0
    %1108 = vmatprep.subr.mxu0 0.0
    %1109 = vmatpush1.xpose.msra.mxu0 0.0
    %1110 = vmatprep.subr.mxu0 0.0
    %1111 = vmatpush1.xpose.msra.mxu0 0.0
    %1112 = vmatprep.subr.mxu0 0.0
    %1113 = vmatpush1.xpose.msra.mxu0 0.0
    %1114 = vmatprep.subr.mxu0 0.0
    %1115 = vmatpush1.xpose.msra.mxu0 0.0
    %1116 = vmatprep.subr.mxu0 0.0
    %1117 = vmatpush1.xpose.msra.mxu0 0.0
    %1118 = vmatprep.subr.mxu0 0.0
    %1119 = vmatpush1.xpose.msra.mxu0 0.0
    %1120 = vmatprep.subr.mxu0 0.0
    %1121 = vmatpush1.xpose.msra.mxu0 0.0
    %1122 = vmatprep.subr.mxu0 0.0
    %1123 = vmatpush1.xpose.msra.mxu0 0.0
    %1124 = vmatprep.subr.mxu0 0.0
    %1125 = vmatpush1.xpose.msra.mxu0 0.0
    %1126 = vmatprep.subr.mxu0 0.0
    %1127 = vmatpush1.xpose.msra.mxu0 0.0
    %1128 = vmatprep.subr.mxu0 0.0
    %1129 = vmatpush1.xpose.msra.mxu0 0.0
    %1130 = vmatprep.subr.mxu0 0.0
    %1131 = vmatpush1.xpose.msra.mxu0 0.0
    %1132 = vmatprep.subr.mxu0 0.0
    %1133 = vmatpush1.xpose.msra.mxu0 0.0
    %1134 = vmatprep.subr.mxu0 0.0
    %1135 = vmatpush1.xpose.msra.mxu0 0.0
    %1136 = vmatprep.subr.mxu0 0.0
    %1137 = vmatpush1.xpose.msra.mxu0 0.0
    %1138 = vmatprep.subr.mxu0 0.0
    %1139 = vmatpush1.xpose.msra.mxu0 0.0
    %1140 = vmatprep.subr.mxu0 0.0
    %1141 = vmatpush1.xpose.msra.mxu0 0.0
    %1142 = vmatprep.subr.mxu0 0.0
    %1143 = vmatpush1.xpose.msra.mxu0 0.0
    %1144 = vmatprep.subr.mxu0 0.0
    %1145 = vmatpush1.xpose.msra.mxu0 0.0
    %1146 = vmatprep.subr.mxu0 0.0
    %1147 = vmatpush1.xpose.msra.mxu0 0.0
    %1148 = vmatprep.subr.mxu0 0.0
    %1149 = vmatpush1.xpose.msra.mxu0 0.0
    %1150 = vmatprep.subr.mxu0 0.0
    %1151 = vmatpush1.xpose.msra.mxu0 0.0
    %1152 = vmatprep.subr.mxu0 0.0
    %1153 = vmatpush1.xpose.msra.mxu0 0.0
    %1154 = vmatprep.subr.mxu0 0.0
    %1155 = vmatpush1.xpose.msra.mxu0 0.0
    %1156 = vmatprep.subr.mxu0 0.0
    %1157 = vmatpush1.xpose.msra.mxu0 0.0
    %1158 = vmatprep.subr.mxu0 0.0
    %1159 = vmatpush1.xpose.msra.mxu0 0.0
    %1160 = vmatprep.subr.mxu0 0.0
    %1161 = vmatpush1.xpose.msra.mxu0 0.0
    %1162 = vmatprep.mubr.f32.mxu0 0.0
    %1163 = vmatmul.mubr.f32.gmra.mrb[0].mxu0 %v1084
    %v1164 = vpop.f32.mrb[0].mxu0
    %v1165 = vadd.f32 0.0, %v1164
    %v1166 = vpop.f32.mrb[0].mxu0
    %1167 = vdwg.mxu0
    %v1169 = vsel %vm335, %v996, 0
    %v1172 = vsel %vm335, %v799, 0
    %v1175 = vsel %vm335, %v804, 0
    %v1178 = vsel %vm335, %v809, 0
    %v1181 = vsel %vm335, %v814, 0
    %1183 = vmatprep.subr.mxu0 0.0
    %1184 = vmatpush1.xpose.msra.mxu0 %v1172
    %1185 = vmatprep.subr.mxu0 0.0
    %1186 = vmatpush1.xpose.msra.mxu0 %v1175
    %1187 = vmatprep.subr.mxu0 0.0
    %1188 = vmatpush1.xpose.msra.mxu0 %v1178
    %1189 = vmatprep.subr.mxu0 0.0
    %1190 = vmatpush1.xpose.msra.mxu0 %v1181
    %1191 = vmatprep.subr.mxu0 0.0
    %1192 = vmatpush1.xpose.msra.mxu0 0.0
    %1193 = vmatprep.subr.mxu0 0.0
    %1194 = vmatpush1.xpose.msra.mxu0 0.0
    %1195 = vmatprep.subr.mxu0 0.0
    %1196 = vmatpush1.xpose.msra.mxu0 0.0
    %1197 = vmatprep.subr.mxu0 0.0
    %1198 = vmatpush1.xpose.msra.mxu0 0.0
    %1199 = vmatprep.subr.mxu0 0.0
    %1200 = vmatpush1.xpose.msra.mxu0 0.0
    %1201 = vmatprep.subr.mxu0 0.0
    %1202 = vmatpush1.xpose.msra.mxu0 0.0
    %1203 = vmatprep.subr.mxu0 0.0
    %1204 = vmatpush1.xpose.msra.mxu0 0.0
    %1205 = vmatprep.subr.mxu0 0.0
    %1206 = vmatpush1.xpose.msra.mxu0 0.0
    %1207 = vmatprep.subr.mxu0 0.0
    %1208 = vmatpush1.xpose.msra.mxu0 0.0
    %1209 = vmatprep.subr.mxu0 0.0
    %1210 = vmatpush1.xpose.msra.mxu0 0.0
    %1211 = vmatprep.subr.mxu0 0.0
    %1212 = vmatpush1.xpose.msra.mxu0 0.0
    %1213 = vmatprep.subr.mxu0 0.0
    %1214 = vmatpush1.xpose.msra.mxu0 0.0
    %1215 = vmatprep.subr.mxu0 0.0
    %1216 = vmatpush1.xpose.msra.mxu0 0.0
    %1217 = vmatprep.subr.mxu0 0.0
    %1218 = vmatpush1.xpose.msra.mxu0 0.0
    %1219 = vmatprep.subr.mxu0 0.0
    %1220 = vmatpush1.xpose.msra.mxu0 0.0
    %1221 = vmatprep.subr.mxu0 0.0
    %1222 = vmatpush1.xpose.msra.mxu0 0.0
    %1223 = vmatprep.subr.mxu0 0.0
    %1224 = vmatpush1.xpose.msra.mxu0 0.0
    %1225 = vmatprep.subr.mxu0 0.0
    %1226 = vmatpush1.xpose.msra.mxu0 0.0
    %1227 = vmatprep.subr.mxu0 0.0
    %1228 = vmatpush1.xpose.msra.mxu0 0.0
    %1229 = vmatprep.subr.mxu0 0.0
    %1230 = vmatpush1.xpose.msra.mxu0 0.0
    %1231 = vmatprep.subr.mxu0 0.0
    %1232 = vmatpush1.xpose.msra.mxu0 0.0
    %1233 = vmatprep.subr.mxu0 0.0
    %1234 = vmatpush1.xpose.msra.mxu0 0.0
    %1235 = vmatprep.subr.mxu0 0.0
    %1236 = vmatpush1.xpose.msra.mxu0 0.0
    %1237 = vmatprep.subr.mxu0 0.0
    %1238 = vmatpush1.xpose.msra.mxu0 0.0
    %1239 = vmatprep.subr.mxu0 0.0
    %1240 = vmatpush1.xpose.msra.mxu0 0.0
    %1241 = vmatprep.subr.mxu0 0.0
    %1242 = vmatpush1.xpose.msra.mxu0 0.0
    %1243 = vmatprep.subr.mxu0 0.0
    %1244 = vmatpush1.xpose.msra.mxu0 0.0
    %1245 = vmatprep.subr.mxu0 0.0
    %1246 = vmatpush1.xpose.msra.mxu0 0.0
    %1247 = vmatprep.mubr.f32.mxu0 0.0
    %1248 = vmatmul.mubr.f32.gmra.mrb[0].mxu0 %v1169
    %v1249 = vpop.f32.mrb[0].mxu0
    %v1250 = vadd.f32 0.0, %v1249
    %v1251 = vpop.f32.mrb[0].mxu0
    %1252 = vdwg.mxu0
    %v1254 = vsel %vm335, %v997, 0
    %v1257 = vsel %vm335, %v884, 0
    %v1260 = vsel %vm335, %v889, 0
    %v1263 = vsel %vm335, %v894, 0
    %v1266 = vsel %vm335, %v899, 0
    %1268 = vmatprep.subr.mxu0 0.0
    %1269 = vmatpush1.xpose.msra.mxu0 %v1257
    %1270 = vmatprep.subr.mxu0 0.0
    %1271 = vmatpush1.xpose.msra.mxu0 %v1260
    %1272 = vmatprep.subr.mxu0 0.0
    %1273 = vmatpush1.xpose.msra.mxu0 %v1263
    %1274 = vmatprep.subr.mxu0 0.0
    %1275 = vmatpush1.xpose.msra.mxu0 %v1266
    %1276 = vmatprep.subr.mxu0 0.0
    %1277 = vmatpush1.xpose.msra.mxu0 0.0
    %1278 = vmatprep.subr.mxu0 0.0
    %1279 = vmatpush1.xpose.msra.mxu0 0.0
    %1280 = vmatprep.subr.mxu0 0.0
    %1281 = vmatpush1.xpose.msra.mxu0 0.0
    %1282 = vmatprep.subr.mxu0 0.0
    %1283 = vmatpush1.xpose.msra.mxu0 0.0
    %1284 = vmatprep.subr.mxu0 0.0
    %1285 = vmatpush1.xpose.msra.mxu0 0.0
    %1286 = vmatprep.subr.mxu0 0.0
    %1287 = vmatpush1.xpose.msra.mxu0 0.0
    %1288 = vmatprep.subr.mxu0 0.0
    %1289 = vmatpush1.xpose.msra.mxu0 0.0
    %1290 = vmatprep.subr.mxu0 0.0
    %1291 = vmatpush1.xpose.msra.mxu0 0.0
    %1292 = vmatprep.subr.mxu0 0.0
    %1293 = vmatpush1.xpose.msra.mxu0 0.0
    %1294 = vmatprep.subr.mxu0 0.0
    %1295 = vmatpush1.xpose.msra.mxu0 0.0
    %1296 = vmatprep.subr.mxu0 0.0
    %1297 = vmatpush1.xpose.msra.mxu0 0.0
    %1298 = vmatprep.subr.mxu0 0.0
    %1299 = vmatpush1.xpose.msra.mxu0 0.0
    %1300 = vmatprep.subr.mxu0 0.0
    %1301 = vmatpush1.xpose.msra.mxu0 0.0
    %1302 = vmatprep.subr.mxu0 0.0
    %1303 = vmatpush1.xpose.msra.mxu0 0.0
    %1304 = vmatprep.subr.mxu0 0.0
    %1305 = vmatpush1.xpose.msra.mxu0 0.0
    %1306 = vmatprep.subr.mxu0 0.0
    %1307 = vmatpush1.xpose.msra.mxu0 0.0
    %1308 = vmatprep.subr.mxu0 0.0
    %1309 = vmatpush1.xpose.msra.mxu0 0.0
    %1310 = vmatprep.subr.mxu0 0.0
    %1311 = vmatpush1.xpose.msra.mxu0 0.0
    %1312 = vmatprep.subr.mxu0 0.0
    %1313 = vmatpush1.xpose.msra.mxu0 0.0
    %1314 = vmatprep.subr.mxu0 0.0
    %1315 = vmatpush1.xpose.msra.mxu0 0.0
    %1316 = vmatprep.subr.mxu0 0.0
    %1317 = vmatpush1.xpose.msra.mxu0 0.0
    %1318 = vmatprep.subr.mxu0 0.0
    %1319 = vmatpush1.xpose.msra.mxu0 0.0
    %1320 = vmatprep.subr.mxu0 0.0
    %1321 = vmatpush1.xpose.msra.mxu0 0.0
    %1322 = vmatprep.subr.mxu0 0.0
    %1323 = vmatpush1.xpose.msra.mxu0 0.0
    %1324 = vmatprep.subr.mxu0 0.0
    %1325 = vmatpush1.xpose.msra.mxu0 0.0
    %1326 = vmatprep.subr.mxu0 0.0
    %1327 = vmatpush1.xpose.msra.mxu0 0.0
    %1328 = vmatprep.subr.mxu0 0.0
    %1329 = vmatpush1.xpose.msra.mxu0 0.0
    %1330 = vmatprep.subr.mxu0 0.0
    %1331 = vmatpush1.xpose.msra.mxu0 0.0
    %1332 = vmatprep.mubr.f32.mxu0 0.0
    %1333 = vmatmul.mubr.f32.gmra.mrb[0].mxu0 %v1254
    %v1334 = vpop.f32.mrb[0].mxu0
    %v1335 = vadd.f32 0.0, %v1334
    %v1336 = vpop.f32.mrb[0].mxu0
    %1337 = vdwg.mxu0
    %1339 = vset.pattern.permute.xlu0 0
    %1340 = vperm.xlu0 %1339, %v918
    %v1341 = vpop.permute.xlu0 %1340
    %1344 = vset.pattern.permute.xlu0 0
    %1345 = vperm.xlu0 %1344, %v921
    %v1346 = vpop.permute.xlu0 %1345
    %1349 = vset.pattern.permute.xlu0 0
    %1350 = vperm.xlu0 %1349, %v924
    %v1351 = vpop.permute.xlu0 %1350
    %1354 = vset.pattern.permute.xlu0 0
    %1355 = vperm.xlu0 %1354, %v927
    %v1356 = vpop.permute.xlu0 %1355
    %1359 = vset.pattern.permute.xlu0 0
    %1360 = vperm.xlu0 %1359, %v940
    %v1361 = vpop.permute.xlu0 %1360
    %1364 = vset.pattern.permute.xlu0 0
    %1365 = vperm.xlu0 %1364, %v943
    %v1366 = vpop.permute.xlu0 %1365
    %1369 = vset.pattern.permute.xlu0 0
    %1370 = vperm.xlu0 %1369, %v946
    %v1371 = vpop.permute.xlu0 %1370
    %1374 = vset.pattern.permute.xlu0 0
    %1375 = vperm.xlu0 %1374, %v949
    %v1376 = vpop.permute.xlu0 %1375
    %1379 = vset.pattern.permute.xlu0 0
    %1380 = vperm.xlu0 %1379, %v962
    %v1381 = vpop.permute.xlu0 %1380
    %1384 = vset.pattern.permute.xlu0 0
    %1385 = vperm.xlu0 %1384, %v965
    %v1386 = vpop.permute.xlu0 %1385
    %1389 = vset.pattern.permute.xlu0 0
    %1390 = vperm.xlu0 %1389, %v968
    %v1391 = vpop.permute.xlu0 %1390
    %1394 = vset.pattern.permute.xlu0 0
    %1395 = vperm.xlu0 %1394, %v971
    %v1396 = vpop.permute.xlu0 %1395
    %1399 = vset.pattern.permute.xlu0 0
    %1400 = vperm.xlu0 %1399, %v984
    %v1401 = vpop.permute.xlu0 %1400
    %1404 = vset.pattern.permute.xlu0 0
    %1405 = vperm.xlu0 %1404, %v987
    %v1406 = vpop.permute.xlu0 %1405
    %1409 = vset.pattern.permute.xlu0 0
    %1410 = vperm.xlu0 %1409, %v990
    %v1411 = vpop.permute.xlu0 %1410
    %1414 = vset.pattern.permute.xlu0 0
    %1415 = vperm.xlu0 %1414, %v993
    %v1416 = vpop.permute.xlu0 %1415
    %v1418 = vlaneseq
    %v1419 = vshrl.u32 %v1418, 7
    %v1420 = vsub.s32 0, %v1419
    %v1421 = vrot.slane %v1080, %v1420
    %v1422 = vlaneseq
    %v1423 = vshrl.u32 %v1422, 7
    %v1424 = vsub.s32 0, %v1423
    %v1425 = vrot.slane %v1165, %v1424
    %v1426 = vlaneseq
    %v1427 = vshrl.u32 %v1426, 7
    %v1428 = vsub.s32 0, %v1427
    %v1429 = vrot.slane %v1250, %v1428
    %v1430 = vlaneseq
    %v1431 = vshrl.u32 %v1430, 7
    %v1432 = vsub.s32 0, %v1431
    %v1433 = vrot.slane %v1335, %v1432
    %v1434 = vadd.f32 %v1341, %v1421
    %v1435 = vadd.f32 %v1346, %v1421
    %v1436 = vadd.f32 %v1351, %v1421
    %v1437 = vadd.f32 %v1356, %v1421
    %v1438 = vadd.f32 %v1361, %v1425
    %v1439 = vadd.f32 %v1366, %v1425
    %v1440 = vadd.f32 %v1371, %v1425
    %v1441 = vadd.f32 %v1376, %v1425
    %v1442 = vadd.f32 %v1381, %v1429
    %v1443 = vadd.f32 %v1386, %v1429
    %v1444 = vadd.f32 %v1391, %v1429
    %v1445 = vadd.f32 %v1396, %v1429
    %v1446 = vadd.f32 %v1401, %v1433
    %v1447 = vadd.f32 %v1406, %v1433
    %v1448 = vadd.f32 %v1411, %v1433
    %v1449 = vadd.f32 %v1416, %v1433
    %v1450 = vld [vmem:[%s19] sm:$0x1]
    %v1451 = vld [vmem:[%s19 + $0x1] sm:$0x1]
    %v1452 = vld [vmem:[%s19 + $0x2] sm:$0x1]
    %v1453 = vld [vmem:[%s19 + $0x3] sm:$0x1]
    %v1458 = vlaneseq
    %v1459 = vshrl.u32 %v1458, 7
    %v1460 = vsub.s32 0, %v1459
    %v1461 = vrot.slane %v1450, %v1460
    %v1462 = vlaneseq
    %v1463 = vshrl.u32 %v1462, 7
    %v1464 = vsub.s32 0, %v1463
    %v1465 = vrot.slane %v1451, %v1464
    %v1466 = vlaneseq
    %v1467 = vshrl.u32 %v1466, 7
    %v1468 = vsub.s32 0, %v1467
    %v1469 = vrot.slane %v1452, %v1468
    %v1470 = vlaneseq
    %v1471 = vshrl.u32 %v1470, 7
    %v1472 = vsub.s32 0, %v1471
    %v1473 = vrot.slane %v1453, %v1472
    %1474 = vset.pattern.permute.xlu0 0
    %1475 = vperm.xlu0 %1474, %v1461
    %v1476 = vpop.permute.xlu0 %1475
    %1478 = vset.pattern.permute.xlu0 0
    %1479 = vperm.xlu0 %1478, %v1465
    %v1480 = vpop.permute.xlu0 %1479
    %1482 = vset.pattern.permute.xlu0 0
    %1483 = vperm.xlu0 %1482, %v1469
    %v1484 = vpop.permute.xlu0 %1483
    %1486 = vset.pattern.permute.xlu0 0
    %1487 = vperm.xlu0 %1486, %v1473
    %v1488 = vpop.permute.xlu0 %1487
    %v1490 = vmul.f32 %v1476, %v325
    %v1491 = vmul.f32 %v1476, %v326
    %v1492 = vmul.f32 %v1476, %v327
    %v1493 = vmul.f32 %v1476, %v328
    %v1494 = vmul.f32 %v1480, %v325
    %v1495 = vmul.f32 %v1480, %v326
    %v1496 = vmul.f32 %v1480, %v327
    %v1497 = vmul.f32 %v1480, %v328
    %v1498 = vmul.f32 %v1484, %v325
    %v1499 = vmul.f32 %v1484, %v326
    %v1500 = vmul.f32 %v1484, %v327
    %v1501 = vmul.f32 %v1484, %v328
    %v1502 = vmul.f32 %v1488, %v325
    %v1503 = vmul.f32 %v1488, %v326
    %v1504 = vmul.f32 %v1488, %v327
    %v1505 = vmul.f32 %v1488, %v328
    %v1506 = vadd.f32 %v1434, %v1490
    %v1507 = vadd.f32 %v1435, %v1491
    %v1508 = vadd.f32 %v1436, %v1492
    %v1509 = vadd.f32 %v1437, %v1493
    %v1510 = vadd.f32 %v1438, %v1494
    %v1511 = vadd.f32 %v1439, %v1495
    %v1512 = vadd.f32 %v1440, %v1496
    %v1513 = vadd.f32 %v1441, %v1497
    %v1514 = vadd.f32 %v1442, %v1498
    %v1515 = vadd.f32 %v1443, %v1499
    %v1516 = vadd.f32 %v1444, %v1500
    %v1517 = vadd.f32 %v1445, %v1501
    %v1518 = vadd.f32 %v1446, %v1502
    %v1519 = vadd.f32 %v1447, %v1503
    %v1520 = vadd.f32 %v1448, %v1504
    %v1521 = vadd.f32 %v1449, %v1505
    %vm1522 = vcmp.gt.f32.partialorder %v1506, 0.0
    %vm1523 = vcmp.gt.f32.partialorder %v1507, 0.0
    %vm1524 = vcmp.gt.f32.partialorder %v1508, 0.0
    %vm1525 = vcmp.gt.f32.partialorder %v1509, 0.0
    %vm1526 = vcmp.gt.f32.partialorder %v1510, 0.0
    %vm1527 = vcmp.gt.f32.partialorder %v1511, 0.0
    %vm1528 = vcmp.gt.f32.partialorder %v1512, 0.0
    %vm1529 = vcmp.gt.f32.partialorder %v1513, 0.0
    %vm1530 = vcmp.gt.f32.partialorder %v1514, 0.0
    %vm1531 = vcmp.gt.f32.partialorder %v1515, 0.0
    %vm1532 = vcmp.gt.f32.partialorder %v1516, 0.0
    %vm1533 = vcmp.gt.f32.partialorder %v1517, 0.0
    %vm1534 = vcmp.gt.f32.partialorder %v1518, 0.0
    %vm1535 = vcmp.gt.f32.partialorder %v1519, 0.0
    %vm1536 = vcmp.gt.f32.partialorder %v1520, 0.0
    %vm1537 = vcmp.gt.f32.partialorder %v1521, 0.0
    %v1538 = vmul.f32 %v1506, 0.2
    %v1539 = vmul.f32 %v1507, 0.2
    %v1540 = vmul.f32 %v1508, 0.2
    %v1541 = vmul.f32 %v1509, 0.2
    %v1542 = vmul.f32 %v1510, 0.2
    %v1543 = vmul.f32 %v1511, 0.2
    %v1544 = vmul.f32 %v1512, 0.2
    %v1545 = vmul.f32 %v1513, 0.2
    %v1546 = vmul.f32 %v1514, 0.2
    %v1547 = vmul.f32 %v1515, 0.2
    %v1548 = vmul.f32 %v1516, 0.2
    %v1549 = vmul.f32 %v1517, 0.2
    %v1550 = vmul.f32 %v1518, 0.2
    %v1551 = vmul.f32 %v1519, 0.2
    %v1552 = vmul.f32 %v1520, 0.2
    %v1553 = vmul.f32 %v1521, 0.2
    %v1554 = vsel %vm1522, %v1506, %v1538
    %v1555 = vsel %vm1523, %v1507, %v1539
    %v1556 = vsel %vm1524, %v1508, %v1540
    %v1557 = vsel %vm1525, %v1509, %v1541
    %v1558 = vsel %vm1526, %v1510, %v1542
    %v1559 = vsel %vm1527, %v1511, %v1543
    %v1560 = vsel %vm1528, %v1512, %v1544
    %v1561 = vsel %vm1529, %v1513, %v1545
    %v1562 = vsel %vm1530, %v1514, %v1546
    %v1563 = vsel %vm1531, %v1515, %v1547
    %v1564 = vsel %vm1532, %v1516, %v1548
    %v1565 = vsel %vm1533, %v1517, %v1549
    %v1566 = vsel %vm1534, %v1518, %v1550
    %v1567 = vsel %vm1535, %v1519, %v1551
    %v1568 = vsel %vm1536, %v1520, %v1552
    %v1569 = vsel %vm1537, %v1521, %v1553
    %vm1570 = vcmp.gt.f32.partialorder %v329, 0.0
    %vm1571 = vcmp.gt.f32.partialorder %v330, 0.0
    %vm1572 = vcmp.gt.f32.partialorder %v331, 0.0
    %vm1573 = vcmp.gt.f32.partialorder %v332, 0.0
    %v1574 = vsel %vm1570, 1, 0
    %v1575 = vsel %vm1571, 1, 0
    %v1576 = vsel %vm1572, 1, 0
    %v1577 = vsel %vm1573, 1, 0
    %vm1578 = vcmp.eq.s32.totalorder %v1574, 1
    %vm1579 = vcmp.eq.s32.totalorder %v1575, 1
    %vm1580 = vcmp.eq.s32.totalorder %v1576, 1
    %vm1581 = vcmp.eq.s32.totalorder %v1577, 1
    %v1582 = vsel %vm1578, %v1554, -1e+30
    %v1583 = vsel %vm1579, %v1555, -1e+30
    %v1584 = vsel %vm1580, %v1556, -1e+30
    %v1585 = vsel %vm1581, %v1557, -1e+30
    %v1586 = vsel %vm1578, %v1558, -1e+30
    %v1587 = vsel %vm1579, %v1559, -1e+30
    %v1588 = vsel %vm1580, %v1560, -1e+30
    %v1589 = vsel %vm1581, %v1561, -1e+30
    %v1590 = vsel %vm1578, %v1562, -1e+30
    %v1591 = vsel %vm1579, %v1563, -1e+30
    %v1592 = vsel %vm1580, %v1564, -1e+30
    %v1593 = vsel %vm1581, %v1565, -1e+30
    %v1594 = vsel %vm1578, %v1566, -1e+30
    %v1595 = vsel %vm1579, %v1567, -1e+30
    %v1596 = vsel %vm1580, %v1568, -1e+30
    %v1597 = vsel %vm1581, %v1569, -1e+30
    %v1598 = vsel %vm440, %v1582, -inf
    %1599 = vmax.xlane.f32.xlu0 %v1598
    %v1600 = vpop.xlane.xlu0 %1599
    %v1601 = vsel %vm440, %v1583, -inf
    %1602 = vmax.xlane.f32.xlu0 %v1601
    %v1603 = vpop.xlane.xlu0 %1602
    %v1604 = vsel %vm440, %v1584, -inf
    %1605 = vmax.xlane.f32.xlu0 %v1604
    %v1606 = vpop.xlane.xlu0 %1605
    %v1607 = vsel %vm440, %v1585, -inf
    %1608 = vmax.xlane.f32.xlu0 %v1607
    %v1609 = vpop.xlane.xlu0 %1608
    %v1610 = vsel %vm440, %v1586, -inf
    %1611 = vmax.xlane.f32.xlu0 %v1610
    %v1612 = vpop.xlane.xlu0 %1611
    %v1613 = vsel %vm440, %v1587, -inf
    %1614 = vmax.xlane.f32.xlu0 %v1613
    %v1615 = vpop.xlane.xlu0 %1614
    %v1616 = vsel %vm440, %v1588, -inf
    %1617 = vmax.xlane.f32.xlu0 %v1616
    %v1618 = vpop.xlane.xlu0 %1617
    %v1619 = vsel %vm440, %v1589, -inf
    %1620 = vmax.xlane.f32.xlu0 %v1619
    %v1621 = vpop.xlane.xlu0 %1620
    %v1622 = vsel %vm440, %v1590, -inf
    %1623 = vmax.xlane.f32.xlu0 %v1622
    %v1624 = vpop.xlane.xlu0 %1623
    %v1625 = vsel %vm440, %v1591, -inf
    %1626 = vmax.xlane.f32.xlu0 %v1625
    %v1627 = vpop.xlane.xlu0 %1626
    %v1628 = vsel %vm440, %v1592, -inf
    %1629 = vmax.xlane.f32.xlu0 %v1628
    %v1630 = vpop.xlane.xlu0 %1629
    %v1631 = vsel %vm440, %v1593, -inf
    %1632 = vmax.xlane.f32.xlu0 %v1631
    %v1633 = vpop.xlane.xlu0 %1632
    %v1634 = vsel %vm440, %v1594, -inf
    %1635 = vmax.xlane.f32.xlu0 %v1634
    %v1636 = vpop.xlane.xlu0 %1635
    %v1637 = vsel %vm440, %v1595, -inf
    %1638 = vmax.xlane.f32.xlu0 %v1637
    %v1639 = vpop.xlane.xlu0 %1638
    %v1640 = vsel %vm440, %v1596, -inf
    %1641 = vmax.xlane.f32.xlu0 %v1640
    %v1642 = vpop.xlane.xlu0 %1641
    %v1643 = vsel %vm440, %v1597, -inf
    %1644 = vmax.xlane.f32.xlu0 %v1643
    %v1645 = vpop.xlane.xlu0 %1644
    %v1646 = vsub.f32 %v1582, %v1600
    %v1647 = vsub.f32 %v1583, %v1603
    %v1648 = vsub.f32 %v1584, %v1606
    %v1649 = vsub.f32 %v1585, %v1609
    %v1650 = vsub.f32 %v1586, %v1612
    %v1651 = vsub.f32 %v1587, %v1615
    %v1652 = vsub.f32 %v1588, %v1618
    %v1653 = vsub.f32 %v1589, %v1621
    %v1654 = vsub.f32 %v1590, %v1624
    %v1655 = vsub.f32 %v1591, %v1627
    %v1656 = vsub.f32 %v1592, %v1630
    %v1657 = vsub.f32 %v1593, %v1633
    %v1658 = vsub.f32 %v1594, %v1636
    %v1659 = vsub.f32 %v1595, %v1639
    %v1660 = vsub.f32 %v1596, %v1642
    %v1661 = vsub.f32 %v1597, %v1645
    %v1662 = vmul.f32 %v1646, 1.442695
    %v1663 = vpow.pop %v1662
    %v1664 = vmul.f32 %v1647, 1.442695
    %v1665 = vpow.pop %v1664
    %v1666 = vmul.f32 %v1648, 1.442695
    %v1667 = vpow.pop %v1666
    %v1668 = vmul.f32 %v1649, 1.442695
    %v1669 = vpow.pop %v1668
    %v1670 = vmul.f32 %v1650, 1.442695
    %v1671 = vpow.pop %v1670
    %v1672 = vmul.f32 %v1651, 1.442695
    %v1673 = vpow.pop %v1672
    %v1674 = vmul.f32 %v1652, 1.442695
    %v1675 = vpow.pop %v1674
    %v1676 = vmul.f32 %v1653, 1.442695
    %v1677 = vpow.pop %v1676
    %v1678 = vmul.f32 %v1654, 1.442695
    %v1679 = vpow.pop %v1678
    %v1680 = vmul.f32 %v1655, 1.442695
    %v1681 = vpow.pop %v1680
    %v1682 = vmul.f32 %v1656, 1.442695
    %v1683 = vpow.pop %v1682
    %v1684 = vmul.f32 %v1657, 1.442695
    %v1685 = vpow.pop %v1684
    %v1686 = vmul.f32 %v1658, 1.442695
    %v1687 = vpow.pop %v1686
    %v1688 = vmul.f32 %v1659, 1.442695
    %v1689 = vpow.pop %v1688
    %v1690 = vmul.f32 %v1660, 1.442695
    %v1691 = vpow.pop %v1690
    %v1692 = vmul.f32 %v1661, 1.442695
    %v1693 = vpow.pop %v1692
    %v1694 = vsel %vm440, %v1663, 0.0
    %1695 = vadd.xlane.f32.xlu0 %v1694
    %v1696 = vpop.xlane.xlu0 %1695
    %v1697 = vsel %vm440, %v1665, 0.0
    %1698 = vadd.xlane.f32.xlu0 %v1697
    %v1699 = vpop.xlane.xlu0 %1698
    %v1700 = vsel %vm440, %v1667, 0.0
    %1701 = vadd.xlane.f32.xlu0 %v1700
    %v1702 = vpop.xlane.xlu0 %1701
    %v1703 = vsel %vm440, %v1669, 0.0
    %1704 = vadd.xlane.f32.xlu0 %v1703
    %v1705 = vpop.xlane.xlu0 %1704
    %v1706 = vsel %vm440, %v1671, 0.0
    %1707 = vadd.xlane.f32.xlu0 %v1706
    %v1708 = vpop.xlane.xlu0 %1707
    %v1709 = vsel %vm440, %v1673, 0.0
    %1710 = vadd.xlane.f32.xlu0 %v1709
    %v1711 = vpop.xlane.xlu0 %1710
    %v1712 = vsel %vm440, %v1675, 0.0
    %1713 = vadd.xlane.f32.xlu0 %v1712
    %v1714 = vpop.xlane.xlu0 %1713
    %v1715 = vsel %vm440, %v1677, 0.0
    %1716 = vadd.xlane.f32.xlu0 %v1715
    %v1717 = vpop.xlane.xlu0 %1716
    %v1718 = vsel %vm440, %v1679, 0.0
    %1719 = vadd.xlane.f32.xlu0 %v1718
    %v1720 = vpop.xlane.xlu0 %1719
    %v1721 = vsel %vm440, %v1681, 0.0
    %1722 = vadd.xlane.f32.xlu0 %v1721
    %v1723 = vpop.xlane.xlu0 %1722
    %v1724 = vsel %vm440, %v1683, 0.0
    %1725 = vadd.xlane.f32.xlu0 %v1724
    %v1726 = vpop.xlane.xlu0 %1725
    %v1727 = vsel %vm440, %v1685, 0.0
    %1728 = vadd.xlane.f32.xlu0 %v1727
    %v1729 = vpop.xlane.xlu0 %1728
    %v1730 = vsel %vm440, %v1687, 0.0
    %1731 = vadd.xlane.f32.xlu0 %v1730
    %v1732 = vpop.xlane.xlu0 %1731
    %v1733 = vsel %vm440, %v1689, 0.0
    %1734 = vadd.xlane.f32.xlu0 %v1733
    %v1735 = vpop.xlane.xlu0 %1734
    %v1736 = vsel %vm440, %v1691, 0.0
    %1737 = vadd.xlane.f32.xlu0 %v1736
    %v1738 = vpop.xlane.xlu0 %1737
    %v1739 = vsel %vm440, %v1693, 0.0
    %1740 = vadd.xlane.f32.xlu0 %v1739
    %v1741 = vpop.xlane.xlu0 %1740
    %v1742 = vmul.f32 %v1696, 4.0
    %v1743 = vmul.f32 %v1699, 4.0
    %v1744 = vmul.f32 %v1702, 4.0
    %v1745 = vmul.f32 %v1705, 4.0
    %v1746 = vmul.f32 %v1708, 4.0
    %v1747 = vmul.f32 %v1711, 4.0
    %v1748 = vmul.f32 %v1714, 4.0
    %v1749 = vmul.f32 %v1717, 4.0
    %v1750 = vmul.f32 %v1720, 4.0
    %v1751 = vmul.f32 %v1723, 4.0
    %v1752 = vmul.f32 %v1726, 4.0
    %v1753 = vmul.f32 %v1729, 4.0
    %v1754 = vmul.f32 %v1732, 4.0
    %v1755 = vmul.f32 %v1735, 4.0
    %v1756 = vmul.f32 %v1738, 4.0
    %v1757 = vmul.f32 %v1741, 4.0
    %v1758 = vrcp.pop %v1742
    %v1759 = vrcp.pop %v1743
    %v1760 = vrcp.pop %v1744
    %v1761 = vrcp.pop %v1745
    %v1762 = vrcp.pop %v1746
    %v1763 = vrcp.pop %v1747
    %v1764 = vrcp.pop %v1748
    %v1765 = vrcp.pop %v1749
    %v1766 = vrcp.pop %v1750
    %v1767 = vrcp.pop %v1751
    %v1768 = vrcp.pop %v1752
    %v1769 = vrcp.pop %v1753
    %v1770 = vrcp.pop %v1754
    %v1771 = vrcp.pop %v1755
    %v1772 = vrcp.pop %v1756
    %v1773 = vrcp.pop %v1757
    %v1774 = vmul.f32 %v1663, %v1758
    %v1775 = vmul.f32 %v1665, %v1759
    %v1776 = vmul.f32 %v1667, %v1760
    %v1777 = vmul.f32 %v1669, %v1761
    %v1778 = vmul.f32 %v1671, %v1762
    %v1779 = vmul.f32 %v1673, %v1763
    %v1780 = vmul.f32 %v1675, %v1764
    %v1781 = vmul.f32 %v1677, %v1765
    %v1782 = vmul.f32 %v1679, %v1766
    %v1783 = vmul.f32 %v1681, %v1767
    %v1784 = vmul.f32 %v1683, %v1768
    %v1785 = vmul.f32 %v1685, %v1769
    %v1786 = vmul.f32 %v1687, %v1770
    %v1787 = vmul.f32 %v1689, %v1771
    %v1788 = vmul.f32 %v1691, %v1772
    %v1789 = vmul.f32 %v1693, %v1773
    %v1791 = vsel %vm440, %v1774, 0
    %v1794 = vsel %vm440, %v1775, 0
    %v1797 = vsel %vm440, %v1776, 0
    %v1800 = vsel %vm440, %v1777, 0
    %1802 = vmatprep.subr.mxu0 0.0
    %1803 = vmatpush1.msra.mxu0 %v629
    %1804 = vmatprep.subr.mxu0 0.0
    %1805 = vmatpush1.msra.mxu0 %v634
    %1806 = vmatprep.subr.mxu0 0.0
    %1807 = vmatpush1.msra.mxu0 %v639
    %1808 = vmatprep.subr.mxu0 0.0
    %1809 = vmatpush1.msra.mxu0 %v644
    %1810 = vmatprep.subr.mxu0 0.0
    %1811 = vmatpush1.msra.mxu0 0.0
    %1812 = vmatprep.subr.mxu0 0.0
    %1813 = vmatpush1.msra.mxu0 0.0
    %1814 = vmatprep.subr.mxu0 0.0
    %1815 = vmatpush1.msra.mxu0 0.0
    %1816 = vmatprep.subr.mxu0 0.0
    %1817 = vmatpush1.msra.mxu0 0.0
    %1818 = vmatprep.subr.mxu0 0.0
    %1819 = vmatpush1.msra.mxu0 0.0
    %1820 = vmatprep.subr.mxu0 0.0
    %1821 = vmatpush1.msra.mxu0 0.0
    %1822 = vmatprep.subr.mxu0 0.0
    %1823 = vmatpush1.msra.mxu0 0.0
    %1824 = vmatprep.subr.mxu0 0.0
    %1825 = vmatpush1.msra.mxu0 0.0
    %1826 = vmatprep.subr.mxu0 0.0
    %1827 = vmatpush1.msra.mxu0 0.0
    %1828 = vmatprep.subr.mxu0 0.0
    %1829 = vmatpush1.msra.mxu0 0.0
    %1830 = vmatprep.subr.mxu0 0.0
    %1831 = vmatpush1.msra.mxu0 0.0
    %1832 = vmatprep.subr.mxu0 0.0
    %1833 = vmatpush1.msra.mxu0 0.0
    %1834 = vmatprep.subr.mxu0 0.0
    %1835 = vmatpush1.msra.mxu0 0.0
    %1836 = vmatprep.subr.mxu0 0.0
    %1837 = vmatpush1.msra.mxu0 0.0
    %1838 = vmatprep.subr.mxu0 0.0
    %1839 = vmatpush1.msra.mxu0 0.0
    %1840 = vmatprep.subr.mxu0 0.0
    %1841 = vmatpush1.msra.mxu0 0.0
    %1842 = vmatprep.subr.mxu0 0.0
    %1843 = vmatpush1.msra.mxu0 0.0
    %1844 = vmatprep.subr.mxu0 0.0
    %1845 = vmatpush1.msra.mxu0 0.0
    %1846 = vmatprep.subr.mxu0 0.0
    %1847 = vmatpush1.msra.mxu0 0.0
    %1848 = vmatprep.subr.mxu0 0.0
    %1849 = vmatpush1.msra.mxu0 0.0
    %1850 = vmatprep.subr.mxu0 0.0
    %1851 = vmatpush1.msra.mxu0 0.0
    %1852 = vmatprep.subr.mxu0 0.0
    %1853 = vmatpush1.msra.mxu0 0.0
    %1854 = vmatprep.subr.mxu0 0.0
    %1855 = vmatpush1.msra.mxu0 0.0
    %1856 = vmatprep.subr.mxu0 0.0
    %1857 = vmatpush1.msra.mxu0 0.0
    %1858 = vmatprep.subr.mxu0 0.0
    %1859 = vmatpush1.msra.mxu0 0.0
    %1860 = vmatprep.subr.mxu0 0.0
    %1861 = vmatpush1.msra.mxu0 0.0
    %1862 = vmatprep.subr.mxu0 0.0
    %1863 = vmatpush1.msra.mxu0 0.0
    %1864 = vmatprep.subr.mxu0 0.0
    %1865 = vmatpush1.msra.mxu0 0.0
    %1866 = vmatprep.mubr.f32.mxu0 0.0
    %1867 = vmatmul.mubr.f32.gmra.mrb[0].mxu0 %v1791
    %v1868 = vpop.f32.mrb[0].mxu0
    %v1869 = vadd.f32 0.0, %v1868
    %v1870 = vpop.f32.mrb[0].mxu0
    %1871 = vmatprep.mubr.f32.mxu0 0.0
    %1872 = vmatmul.mubr.f32.gmra.mrb[0].mxu0 %v1794
    %v1873 = vpop.f32.mrb[0].mxu0
    %v1874 = vadd.f32 0.0, %v1873
    %v1875 = vpop.f32.mrb[0].mxu0
    %1876 = vmatprep.mubr.f32.mxu0 0.0
    %1877 = vmatmul.mubr.f32.gmra.mrb[0].mxu0 %v1797
    %v1878 = vpop.f32.mrb[0].mxu0
    %v1879 = vadd.f32 0.0, %v1878
    %v1880 = vpop.f32.mrb[0].mxu0
    %1881 = vmatprep.mubr.f32.mxu0 0.0
    %1882 = vmatmul.mubr.f32.gmra.mrb[0].mxu0 %v1800
    %v1883 = vpop.f32.mrb[0].mxu0
    %v1884 = vadd.f32 0.0, %v1883
    %v1885 = vpop.f32.mrb[0].mxu0
    %1886 = vdwg.mxu0
    %v1888 = vsel %vm440, %v1778, 0
    %v1891 = vsel %vm440, %v1779, 0
    %v1894 = vsel %vm440, %v1780, 0
    %v1897 = vsel %vm440, %v1781, 0
    %1899 = vmatprep.subr.mxu0 0.0
    %1900 = vmatpush1.msra.mxu0 %v714
    %1901 = vmatprep.subr.mxu0 0.0
    %1902 = vmatpush1.msra.mxu0 %v719
    %1903 = vmatprep.subr.mxu0 0.0
    %1904 = vmatpush1.msra.mxu0 %v724
    %1905 = vmatprep.subr.mxu0 0.0
    %1906 = vmatpush1.msra.mxu0 %v729
    %1907 = vmatprep.subr.mxu0 0.0
    %1908 = vmatpush1.msra.mxu0 0.0
    %1909 = vmatprep.subr.mxu0 0.0
    %1910 = vmatpush1.msra.mxu0 0.0
    %1911 = vmatprep.subr.mxu0 0.0
    %1912 = vmatpush1.msra.mxu0 0.0
    %1913 = vmatprep.subr.mxu0 0.0
    %1914 = vmatpush1.msra.mxu0 0.0
    %1915 = vmatprep.subr.mxu0 0.0
    %1916 = vmatpush1.msra.mxu0 0.0
    %1917 = vmatprep.subr.mxu0 0.0
    %1918 = vmatpush1.msra.mxu0 0.0
    %1919 = vmatprep.subr.mxu0 0.0
    %1920 = vmatpush1.msra.mxu0 0.0
    %1921 = vmatprep.subr.mxu0 0.0
    %1922 = vmatpush1.msra.mxu0 0.0
    %1923 = vmatprep.subr.mxu0 0.0
    %1924 = vmatpush1.msra.mxu0 0.0
    %1925 = vmatprep.subr.mxu0 0.0
    %1926 = vmatpush1.msra.mxu0 0.0
    %1927 = vmatprep.subr.mxu0 0.0
    %1928 = vmatpush1.msra.mxu0 0.0
    %1929 = vmatprep.subr.mxu0 0.0
    %1930 = vmatpush1.msra.mxu0 0.0
    %1931 = vmatprep.subr.mxu0 0.0
    %1932 = vmatpush1.msra.mxu0 0.0
    %1933 = vmatprep.subr.mxu0 0.0
    %1934 = vmatpush1.msra.mxu0 0.0
    %1935 = vmatprep.subr.mxu0 0.0
    %1936 = vmatpush1.msra.mxu0 0.0
    %1937 = vmatprep.subr.mxu0 0.0
    %1938 = vmatpush1.msra.mxu0 0.0
    %1939 = vmatprep.subr.mxu0 0.0
    %1940 = vmatpush1.msra.mxu0 0.0
    %1941 = vmatprep.subr.mxu0 0.0
    %1942 = vmatpush1.msra.mxu0 0.0
    %1943 = vmatprep.subr.mxu0 0.0
    %1944 = vmatpush1.msra.mxu0 0.0
    %1945 = vmatprep.subr.mxu0 0.0
    %1946 = vmatpush1.msra.mxu0 0.0
    %1947 = vmatprep.subr.mxu0 0.0
    %1948 = vmatpush1.msra.mxu0 0.0
    %1949 = vmatprep.subr.mxu0 0.0
    %1950 = vmatpush1.msra.mxu0 0.0
    %1951 = vmatprep.subr.mxu0 0.0
    %1952 = vmatpush1.msra.mxu0 0.0
    %1953 = vmatprep.subr.mxu0 0.0
    %1954 = vmatpush1.msra.mxu0 0.0
    %1955 = vmatprep.subr.mxu0 0.0
    %1956 = vmatpush1.msra.mxu0 0.0
    %1957 = vmatprep.subr.mxu0 0.0
    %1958 = vmatpush1.msra.mxu0 0.0
    %1959 = vmatprep.subr.mxu0 0.0
    %1960 = vmatpush1.msra.mxu0 0.0
    %1961 = vmatprep.subr.mxu0 0.0
    %1962 = vmatpush1.msra.mxu0 0.0
    %1963 = vmatprep.mubr.f32.mxu0 0.0
    %1964 = vmatmul.mubr.f32.gmra.mrb[0].mxu0 %v1888
    %v1965 = vpop.f32.mrb[0].mxu0
    %v1966 = vadd.f32 0.0, %v1965
    %v1967 = vpop.f32.mrb[0].mxu0
    %1968 = vmatprep.mubr.f32.mxu0 0.0
    %1969 = vmatmul.mubr.f32.gmra.mrb[0].mxu0 %v1891
    %v1970 = vpop.f32.mrb[0].mxu0
    %v1971 = vadd.f32 0.0, %v1970
    %v1972 = vpop.f32.mrb[0].mxu0
    %1973 = vmatprep.mubr.f32.mxu0 0.0
    %1974 = vmatmul.mubr.f32.gmra.mrb[0].mxu0 %v1894
    %v1975 = vpop.f32.mrb[0].mxu0
    %v1976 = vadd.f32 0.0, %v1975
    %v1977 = vpop.f32.mrb[0].mxu0
    %1978 = vmatprep.mubr.f32.mxu0 0.0
    %1979 = vmatmul.mubr.f32.gmra.mrb[0].mxu0 %v1897
    %v1980 = vpop.f32.mrb[0].mxu0
    %v1981 = vadd.f32 0.0, %v1980
    %v1982 = vpop.f32.mrb[0].mxu0
    %1983 = vdwg.mxu0
    %v1985 = vsel %vm440, %v1782, 0
    %v1988 = vsel %vm440, %v1783, 0
    %v1991 = vsel %vm440, %v1784, 0
    %v1994 = vsel %vm440, %v1785, 0
    %1996 = vmatprep.subr.mxu0 0.0
    %1997 = vmatpush1.msra.mxu0 %v799
    %1998 = vmatprep.subr.mxu0 0.0
    %1999 = vmatpush1.msra.mxu0 %v804
    %2000 = vmatprep.subr.mxu0 0.0
    %2001 = vmatpush1.msra.mxu0 %v809
    %2002 = vmatprep.subr.mxu0 0.0
    %2003 = vmatpush1.msra.mxu0 %v814
    %2004 = vmatprep.subr.mxu0 0.0
    %2005 = vmatpush1.msra.mxu0 0.0
    %2006 = vmatprep.subr.mxu0 0.0
    %2007 = vmatpush1.msra.mxu0 0.0
    %2008 = vmatprep.subr.mxu0 0.0
    %2009 = vmatpush1.msra.mxu0 0.0
    %2010 = vmatprep.subr.mxu0 0.0
    %2011 = vmatpush1.msra.mxu0 0.0
    %2012 = vmatprep.subr.mxu0 0.0
    %2013 = vmatpush1.msra.mxu0 0.0
    %2014 = vmatprep.subr.mxu0 0.0
    %2015 = vmatpush1.msra.mxu0 0.0
    %2016 = vmatprep.subr.mxu0 0.0
    %2017 = vmatpush1.msra.mxu0 0.0
    %2018 = vmatprep.subr.mxu0 0.0
    %2019 = vmatpush1.msra.mxu0 0.0
    %2020 = vmatprep.subr.mxu0 0.0
    %2021 = vmatpush1.msra.mxu0 0.0
    %2022 = vmatprep.subr.mxu0 0.0
    %2023 = vmatpush1.msra.mxu0 0.0
    %2024 = vmatprep.subr.mxu0 0.0
    %2025 = vmatpush1.msra.mxu0 0.0
    %2026 = vmatprep.subr.mxu0 0.0
    %2027 = vmatpush1.msra.mxu0 0.0
    %2028 = vmatprep.subr.mxu0 0.0
    %2029 = vmatpush1.msra.mxu0 0.0
    %2030 = vmatprep.subr.mxu0 0.0
    %2031 = vmatpush1.msra.mxu0 0.0
    %2032 = vmatprep.subr.mxu0 0.0
    %2033 = vmatpush1.msra.mxu0 0.0
    %2034 = vmatprep.subr.mxu0 0.0
    %2035 = vmatpush1.msra.mxu0 0.0
    %2036 = vmatprep.subr.mxu0 0.0
    %2037 = vmatpush1.msra.mxu0 0.0
    %2038 = vmatprep.subr.mxu0 0.0
    %2039 = vmatpush1.msra.mxu0 0.0
    %2040 = vmatprep.subr.mxu0 0.0
    %2041 = vmatpush1.msra.mxu0 0.0
    %2042 = vmatprep.subr.mxu0 0.0
    %2043 = vmatpush1.msra.mxu0 0.0
    %2044 = vmatprep.subr.mxu0 0.0
    %2045 = vmatpush1.msra.mxu0 0.0
    %2046 = vmatprep.subr.mxu0 0.0
    %2047 = vmatpush1.msra.mxu0 0.0
    %2048 = vmatprep.subr.mxu0 0.0
    %2049 = vmatpush1.msra.mxu0 0.0
    %2050 = vmatprep.subr.mxu0 0.0
    %2051 = vmatpush1.msra.mxu0 0.0
    %2052 = vmatprep.subr.mxu0 0.0
    %2053 = vmatpush1.msra.mxu0 0.0
    %2054 = vmatprep.subr.mxu0 0.0
    %2055 = vmatpush1.msra.mxu0 0.0
    %2056 = vmatprep.subr.mxu0 0.0
    %2057 = vmatpush1.msra.mxu0 0.0
    %2058 = vmatprep.subr.mxu0 0.0
    %2059 = vmatpush1.msra.mxu0 0.0
    %2060 = vmatprep.mubr.f32.mxu0 0.0
    %2061 = vmatmul.mubr.f32.gmra.mrb[0].mxu0 %v1985
    %v2062 = vpop.f32.mrb[0].mxu0
    %v2063 = vadd.f32 0.0, %v2062
    %v2064 = vpop.f32.mrb[0].mxu0
    %2065 = vmatprep.mubr.f32.mxu0 0.0
    %2066 = vmatmul.mubr.f32.gmra.mrb[0].mxu0 %v1988
    %v2067 = vpop.f32.mrb[0].mxu0
    %v2068 = vadd.f32 0.0, %v2067
    %v2069 = vpop.f32.mrb[0].mxu0
    %2070 = vmatprep.mubr.f32.mxu0 0.0
    %2071 = vmatmul.mubr.f32.gmra.mrb[0].mxu0 %v1991
    %v2072 = vpop.f32.mrb[0].mxu0
    %v2073 = vadd.f32 0.0, %v2072
    %v2074 = vpop.f32.mrb[0].mxu0
    %2075 = vmatprep.mubr.f32.mxu0 0.0
    %2076 = vmatmul.mubr.f32.gmra.mrb[0].mxu0 %v1994
    %v2077 = vpop.f32.mrb[0].mxu0
    %v2078 = vadd.f32 0.0, %v2077
    %v2079 = vpop.f32.mrb[0].mxu0
    %2080 = vdwg.mxu0
    %v2082 = vsel %vm440, %v1786, 0
    %v2085 = vsel %vm440, %v1787, 0
    %v2088 = vsel %vm440, %v1788, 0
    %v2091 = vsel %vm440, %v1789, 0
    %2093 = vmatprep.subr.mxu0 0.0
    %2094 = vmatpush1.msra.mxu0 %v884
    %2095 = vmatprep.subr.mxu0 0.0
    %2096 = vmatpush1.msra.mxu0 %v889
    %2097 = vmatprep.subr.mxu0 0.0
    %2098 = vmatpush1.msra.mxu0 %v894
    %2099 = vmatprep.subr.mxu0 0.0
    %2100 = vmatpush1.msra.mxu0 %v899
    %2101 = vmatprep.subr.mxu0 0.0
    %2102 = vmatpush1.msra.mxu0 0.0
    %2103 = vmatprep.subr.mxu0 0.0
    %2104 = vmatpush1.msra.mxu0 0.0
    %2105 = vmatprep.subr.mxu0 0.0
    %2106 = vmatpush1.msra.mxu0 0.0
    %2107 = vmatprep.subr.mxu0 0.0
    %2108 = vmatpush1.msra.mxu0 0.0
    %2109 = vmatprep.subr.mxu0 0.0
    %2110 = vmatpush1.msra.mxu0 0.0
    %2111 = vmatprep.subr.mxu0 0.0
    %2112 = vmatpush1.msra.mxu0 0.0
    %2113 = vmatprep.subr.mxu0 0.0
    %2114 = vmatpush1.msra.mxu0 0.0
    %2115 = vmatprep.subr.mxu0 0.0
    %2116 = vmatpush1.msra.mxu0 0.0
    %2117 = vmatprep.subr.mxu0 0.0
    %2118 = vmatpush1.msra.mxu0 0.0
    %2119 = vmatprep.subr.mxu0 0.0
    %2120 = vmatpush1.msra.mxu0 0.0
    %2121 = vmatprep.subr.mxu0 0.0
    %2122 = vmatpush1.msra.mxu0 0.0
    %2123 = vmatprep.subr.mxu0 0.0
    %2124 = vmatpush1.msra.mxu0 0.0
    %2125 = vmatprep.subr.mxu0 0.0
    %2126 = vmatpush1.msra.mxu0 0.0
    %2127 = vmatprep.subr.mxu0 0.0
    %2128 = vmatpush1.msra.mxu0 0.0
    %2129 = vmatprep.subr.mxu0 0.0
    %2130 = vmatpush1.msra.mxu0 0.0
    %2131 = vmatprep.subr.mxu0 0.0
    %2132 = vmatpush1.msra.mxu0 0.0
    %2133 = vmatprep.subr.mxu0 0.0
    %2134 = vmatpush1.msra.mxu0 0.0
    %2135 = vmatprep.subr.mxu0 0.0
    %2136 = vmatpush1.msra.mxu0 0.0
    %2137 = vmatprep.subr.mxu0 0.0
    %2138 = vmatpush1.msra.mxu0 0.0
    %2139 = vmatprep.subr.mxu0 0.0
    %2140 = vmatpush1.msra.mxu0 0.0
    %2141 = vmatprep.subr.mxu0 0.0
    %2142 = vmatpush1.msra.mxu0 0.0
    %2143 = vmatprep.subr.mxu0 0.0
    %2144 = vmatpush1.msra.mxu0 0.0
    %2145 = vmatprep.subr.mxu0 0.0
    %2146 = vmatpush1.msra.mxu0 0.0
    %2147 = vmatprep.subr.mxu0 0.0
    %2148 = vmatpush1.msra.mxu0 0.0
    %2149 = vmatprep.subr.mxu0 0.0
    %2150 = vmatpush1.msra.mxu0 0.0
    %2151 = vmatprep.subr.mxu0 0.0
    %2152 = vmatpush1.msra.mxu0 0.0
    %2153 = vmatprep.subr.mxu0 0.0
    %2154 = vmatpush1.msra.mxu0 0.0
    %2155 = vmatprep.subr.mxu0 0.0
    %2156 = vmatpush1.msra.mxu0 0.0
    %2157 = vmatprep.mubr.f32.mxu0 0.0
    %2158 = vmatmul.mubr.f32.gmra.mrb[0].mxu0 %v2082
    %v2159 = vpop.f32.mrb[0].mxu0
    %v2160 = vadd.f32 0.0, %v2159
    %v2161 = vpop.f32.mrb[0].mxu0
    %2162 = vmatprep.mubr.f32.mxu0 0.0
    %2163 = vmatmul.mubr.f32.gmra.mrb[0].mxu0 %v2085
    %v2164 = vpop.f32.mrb[0].mxu0
    %v2165 = vadd.f32 0.0, %v2164
    %v2166 = vpop.f32.mrb[0].mxu0
    %2167 = vmatprep.mubr.f32.mxu0 0.0
    %2168 = vmatmul.mubr.f32.gmra.mrb[0].mxu0 %v2088
    %v2169 = vpop.f32.mrb[0].mxu0
    %v2170 = vadd.f32 0.0, %v2169
    %v2171 = vpop.f32.mrb[0].mxu0
    %2172 = vmatprep.mubr.f32.mxu0 0.0
    %2173 = vmatmul.mubr.f32.gmra.mrb[0].mxu0 %v2091
    %v2174 = vpop.f32.mrb[0].mxu0
    %v2175 = vadd.f32 0.0, %v2174
    %v2176 = vpop.f32.mrb[0].mxu0
    %2177 = vdwg.mxu0
    %v2178 = vsel %vm335, %v1869, 0.0
    %v2179 = vsel %vm335, %v1966, 0.0
    %v2180 = vadd.f32 %v2178, %v2179
    %v2181 = vsel %vm335, %v2063, 0.0
    %v2182 = vadd.f32 %v2180, %v2181
    %v2183 = vsel %vm335, %v2160, 0.0
    %v2184 = vadd.f32 %v2182, %v2183
    %v2185 = vsel %vm335, %v1874, 0.0
    %v2186 = vsel %vm335, %v1971, 0.0
    %v2187 = vadd.f32 %v2185, %v2186
    %v2188 = vsel %vm335, %v2068, 0.0
    %v2189 = vadd.f32 %v2187, %v2188
    %v2190 = vsel %vm335, %v2165, 0.0
    %v2191 = vadd.f32 %v2189, %v2190
    %v2192 = vsel %vm335, %v1879, 0.0
    %v2193 = vsel %vm335, %v1976, 0.0
    %v2194 = vadd.f32 %v2192, %v2193
    %v2195 = vsel %vm335, %v2073, 0.0
    %v2196 = vadd.f32 %v2194, %v2195
    %v2197 = vsel %vm335, %v2170, 0.0
    %v2198 = vadd.f32 %v2196, %v2197
    %v2199 = vsel %vm335, %v1884, 0.0
    %v2200 = vsel %vm335, %v1981, 0.0
    %v2201 = vadd.f32 %v2199, %v2200
    %v2202 = vsel %vm335, %v2078, 0.0
    %v2203 = vadd.f32 %v2201, %v2202
    %v2204 = vsel %vm335, %v2175, 0.0
    %v2205 = vadd.f32 %v2203, %v2204
    %v2206 = vld [vmem:[#allocation10] sm:$0x1]
    %v2208 = vlaneseq
    %v2209 = vshrl.u32 %v2208, 7
    %v2210 = vsub.s32 0, %v2209
    %v2211 = vrot.slane %v2206, %v2210
    %v2213 = vadd.f32 %v2184, %v2211
    %v2214 = vadd.f32 %v2191, %v2211
    %v2215 = vadd.f32 %v2198, %v2211
    %v2216 = vadd.f32 %v2205, %v2211
    %v2217 = vmax.f32 %v2213, 0.0
    %v2218 = vmax.f32 %v2214, 0.0
    %v2219 = vmax.f32 %v2215, 0.0
    %v2220 = vmax.f32 %v2216, 0.0
    %v2221 = vld [vmem:[#allocation12] sm:$0xff]
    %v2222 = vld [vmem:[#allocation12 + $0x8] sm:$0xff]
    %v2224 = vsel %vm335, %v2217, 0
    %v2227 = vsel %vm335, %v2218, 0
    %v2230 = vsel %vm335, %v2219, 0
    %v2233 = vsel %vm335, %v2220, 0
    %2235 = vmatprep.subr.mxu0 0.0
    %2236 = vmatpush1.msra.mxu0 %v2221
    %2237 = vmatprep.subr.mxu0 0.0
    %2238 = vmatpush1.msra.mxu0 %v2222
    %2239 = vmatprep.subr.mxu0 0.0
    %2240 = vmatpush1.msra.mxu0 0.0
    %2241 = vmatprep.subr.mxu0 0.0
    %2242 = vmatpush1.msra.mxu0 0.0
    %2243 = vmatprep.subr.mxu0 0.0
    %2244 = vmatpush1.msra.mxu0 0.0
    %2245 = vmatprep.subr.mxu0 0.0
    %2246 = vmatpush1.msra.mxu0 0.0
    %2247 = vmatprep.subr.mxu0 0.0
    %2248 = vmatpush1.msra.mxu0 0.0
    %2249 = vmatprep.subr.mxu0 0.0
    %2250 = vmatpush1.msra.mxu0 0.0
    %2251 = vmatprep.subr.mxu0 0.0
    %2252 = vmatpush1.msra.mxu0 0.0
    %2253 = vmatprep.subr.mxu0 0.0
    %2254 = vmatpush1.msra.mxu0 0.0
    %2255 = vmatprep.subr.mxu0 0.0
    %2256 = vmatpush1.msra.mxu0 0.0
    %2257 = vmatprep.subr.mxu0 0.0
    %2258 = vmatpush1.msra.mxu0 0.0
    %2259 = vmatprep.subr.mxu0 0.0
    %2260 = vmatpush1.msra.mxu0 0.0
    %2261 = vmatprep.subr.mxu0 0.0
    %2262 = vmatpush1.msra.mxu0 0.0
    %2263 = vmatprep.subr.mxu0 0.0
    %2264 = vmatpush1.msra.mxu0 0.0
    %2265 = vmatprep.subr.mxu0 0.0
    %2266 = vmatpush1.msra.mxu0 0.0
    %2267 = vmatprep.subr.mxu0 0.0
    %2268 = vmatpush1.msra.mxu0 0.0
    %2269 = vmatprep.subr.mxu0 0.0
    %2270 = vmatpush1.msra.mxu0 0.0
    %2271 = vmatprep.subr.mxu0 0.0
    %2272 = vmatpush1.msra.mxu0 0.0
    %2273 = vmatprep.subr.mxu0 0.0
    %2274 = vmatpush1.msra.mxu0 0.0
    %2275 = vmatprep.subr.mxu0 0.0
    %2276 = vmatpush1.msra.mxu0 0.0
    %2277 = vmatprep.subr.mxu0 0.0
    %2278 = vmatpush1.msra.mxu0 0.0
    %2279 = vmatprep.subr.mxu0 0.0
    %2280 = vmatpush1.msra.mxu0 0.0
    %2281 = vmatprep.subr.mxu0 0.0
    %2282 = vmatpush1.msra.mxu0 0.0
    %2283 = vmatprep.subr.mxu0 0.0
    %2284 = vmatpush1.msra.mxu0 0.0
    %2285 = vmatprep.subr.mxu0 0.0
    %2286 = vmatpush1.msra.mxu0 0.0
    %2287 = vmatprep.subr.mxu0 0.0
    %2288 = vmatpush1.msra.mxu0 0.0
    %2289 = vmatprep.subr.mxu0 0.0
    %2290 = vmatpush1.msra.mxu0 0.0
    %2291 = vmatprep.subr.mxu0 0.0
    %2292 = vmatpush1.msra.mxu0 0.0
    %2293 = vmatprep.subr.mxu0 0.0
    %2294 = vmatpush1.msra.mxu0 0.0
    %2295 = vmatprep.subr.mxu0 0.0
    %2296 = vmatpush1.msra.mxu0 0.0
    %2297 = vmatprep.subr.mxu0 0.0
    %2298 = vmatpush1.msra.mxu0 0.0
    %2299 = vmatprep.mubr.f32.mxu0 0.0
    %2300 = vmatmul.mubr.f32.gmra.mrb[0].mxu0 %v2224
    %v2301 = vpop.f32.mrb[0].mxu0
    %v2302 = vadd.f32 0.0, %v2301
    %v2303 = vpop.f32.mrb[0].mxu0
    %2304 = vmatprep.mubr.f32.mxu0 0.0
    %2305 = vmatmul.mubr.f32.gmra.mrb[0].mxu0 %v2227
    %v2306 = vpop.f32.mrb[0].mxu0
    %v2307 = vadd.f32 0.0, %v2306
    %v2308 = vpop.f32.mrb[0].mxu0
    %2309 = vmatprep.mubr.f32.mxu0 0.0
    %2310 = vmatmul.mubr.f32.gmra.mrb[0].mxu0 %v2230
    %v2311 = vpop.f32.mrb[0].mxu0
    %v2312 = vadd.f32 0.0, %v2311
    %v2313 = vpop.f32.mrb[0].mxu0
    %2314 = vmatprep.mubr.f32.mxu0 0.0
    %2315 = vmatmul.mubr.f32.gmra.mrb[0].mxu0 %v2233
    %v2316 = vpop.f32.mrb[0].mxu0
    %v2317 = vadd.f32 0.0, %v2316
    %v2318 = vpop.f32.mrb[0].mxu0
    %2319 = vdwg.mxu0
    %v2320 = vld [vmem:[#allocation13] sm:$0x1]
    %v2322 = vlaneseq
    %v2323 = vshrl.u32 %v2322, 7
    %v2324 = vsub.s32 0, %v2323
    %v2325 = vrot.slane %v2320, %v2324
    %2327 = vmatprep.subr.mxu0 0.0
    %2328 = vmatpush1.msra.mxu0 %v2302
    %2329 = vmatprep.subr.mxu0 0.0
    %2330 = vmatpush1.msra.mxu0 %v2307
    %2331 = vmatprep.subr.mxu0 0.0
    %2332 = vmatpush1.msra.mxu0 %v2312
    %2333 = vmatprep.subr.mxu0 0.0
    %2334 = vmatpush1.msra.mxu0 %v2317
    %2335 = vmatprep.subr.mxu0 0.0
    %2336 = vmatpush1.msra.mxu0 0.0
    %2337 = vmatprep.subr.mxu0 0.0
    %2338 = vmatpush1.msra.mxu0 0.0
    %2339 = vmatprep.subr.mxu0 0.0
    %2340 = vmatpush1.msra.mxu0 0.0
    %2341 = vmatprep.subr.mxu0 0.0
    %2342 = vmatpush1.msra.mxu0 0.0
    %2343 = vmatprep.subr.mxu0 0.0
    %2344 = vmatpush1.msra.mxu0 0.0
    %2345 = vmatprep.subr.mxu0 0.0
    %2346 = vmatpush1.msra.mxu0 0.0
    %2347 = vmatprep.subr.mxu0 0.0
    %2348 = vmatpush1.msra.mxu0 0.0
    %2349 = vmatprep.subr.mxu0 0.0
    %2350 = vmatpush1.msra.mxu0 0.0
    %2351 = vmatprep.subr.mxu0 0.0
    %2352 = vmatpush1.msra.mxu0 0.0
    %2353 = vmatprep.subr.mxu0 0.0
    %2354 = vmatpush1.msra.mxu0 0.0
    %2355 = vmatprep.subr.mxu0 0.0
    %2356 = vmatpush1.msra.mxu0 0.0
    %2357 = vmatprep.subr.mxu0 0.0
    %2358 = vmatpush1.msra.mxu0 0.0
    %2359 = vmatprep.subr.mxu0 0.0
    %2360 = vmatpush1.msra.mxu0 0.0
    %2361 = vmatprep.subr.mxu0 0.0
    %2362 = vmatpush1.msra.mxu0 0.0
    %2363 = vmatprep.subr.mxu0 0.0
    %2364 = vmatpush1.msra.mxu0 0.0
    %2365 = vmatprep.subr.mxu0 0.0
    %2366 = vmatpush1.msra.mxu0 0.0
    %2367 = vmatprep.subr.mxu0 0.0
    %2368 = vmatpush1.msra.mxu0 0.0
    %2369 = vmatprep.subr.mxu0 0.0
    %2370 = vmatpush1.msra.mxu0 0.0
    %2371 = vmatprep.subr.mxu0 0.0
    %2372 = vmatpush1.msra.mxu0 0.0
    %2373 = vmatprep.subr.mxu0 0.0
    %2374 = vmatpush1.msra.mxu0 0.0
    %2375 = vmatprep.subr.mxu0 0.0
    %2376 = vmatpush1.msra.mxu0 0.0
    %2377 = vmatprep.subr.mxu0 0.0
    %2378 = vmatpush1.msra.mxu0 0.0
    %2379 = vmatprep.subr.mxu0 0.0
    %2380 = vmatpush1.msra.mxu0 0.0
    %2381 = vmatprep.subr.mxu0 0.0
    %2382 = vmatpush1.msra.mxu0 0.0
    %2383 = vmatprep.subr.mxu0 0.0
    %2384 = vmatpush1.msra.mxu0 0.0
    %2385 = vmatprep.subr.mxu0 0.0
    %2386 = vmatpush1.msra.mxu0 0.0
    %2387 = vmatprep.subr.mxu0 0.0
    %2388 = vmatpush1.msra.mxu0 0.0
    %2389 = vmatprep.subr.mxu0 0.0
    %2390 = vmatpush1.msra.mxu0 0.0
    %2391 = vmatprep.mubr.f32.mxu0 0.0
    %2392 = vmatmul.mubr.f32.gmra.mrb[0].mxu0 %v442
    %v2393 = vpop.f32.mrb[0].mxu0
    %v2394 = vadd.f32 %v2325, %v2393
    %v2395 = vpop.f32.mrb[0].mxu0
    %2396 = vmatprep.mubr.f32.mxu0 0.0
    %2397 = vmatmul.mubr.f32.gmra.mrb[0].mxu0 %v445
    %v2398 = vpop.f32.mrb[0].mxu0
    %v2399 = vadd.f32 %v2325, %v2398
    %v2400 = vpop.f32.mrb[0].mxu0
    %2401 = vmatprep.mubr.f32.mxu0 0.0
    %2402 = vmatmul.mubr.f32.gmra.mrb[0].mxu0 %v448
    %v2403 = vpop.f32.mrb[0].mxu0
    %v2404 = vadd.f32 %v2325, %v2403
    %v2405 = vpop.f32.mrb[0].mxu0
    %2406 = vmatprep.mubr.f32.mxu0 0.0
    %2407 = vmatmul.mubr.f32.gmra.mrb[0].mxu0 %v451
    %v2408 = vpop.f32.mrb[0].mxu0
    %v2409 = vadd.f32 %v2325, %v2408
    %v2410 = vpop.f32.mrb[0].mxu0
    %2411 = vdwg.mxu0
    %v2412 = vmax.f32 %v2394, 0.0
    %v2413 = vmax.f32 %v2399, 0.0
    %v2414 = vmax.f32 %v2404, 0.0
    %v2415 = vmax.f32 %v2409, 0.0
    %v2416 = vld [vmem:[%s27] sm:$0xff]
    %v2417 = vld [vmem:[%s27 + $0x8] sm:$0xff]
    %v2418 = vld [vmem:[%s29] sm:$0xff]
    %v2419 = vld [vmem:[%s29 + $0x8] sm:$0xff]
    %v2421 = vsel %vm335, %v2412, 0
    %v2424 = vsel %vm335, %v2413, 0
    %v2427 = vsel %vm335, %v2414, 0
    %v2430 = vsel %vm335, %v2415, 0
    %2432 = vmatprep.subr.mxu0 0.0
    %2433 = vmatpush1.msra.mxu0 %v2418
    %2434 = vmatprep.subr.mxu0 0.0
    %2435 = vmatpush1.msra.mxu0 %v2419
    %2436 = vmatprep.subr.mxu0 0.0
    %2437 = vmatpush1.msra.mxu0 0.0
    %2438 = vmatprep.subr.mxu0 0.0
    %2439 = vmatpush1.msra.mxu0 0.0
    %2440 = vmatprep.subr.mxu0 0.0
    %2441 = vmatpush1.msra.mxu0 0.0
    %2442 = vmatprep.subr.mxu0 0.0
    %2443 = vmatpush1.msra.mxu0 0.0
    %2444 = vmatprep.subr.mxu0 0.0
    %2445 = vmatpush1.msra.mxu0 0.0
    %2446 = vmatprep.subr.mxu0 0.0
    %2447 = vmatpush1.msra.mxu0 0.0
    %2448 = vmatprep.subr.mxu0 0.0
    %2449 = vmatpush1.msra.mxu0 0.0
    %2450 = vmatprep.subr.mxu0 0.0
    %2451 = vmatpush1.msra.mxu0 0.0
    %2452 = vmatprep.subr.mxu0 0.0
    %2453 = vmatpush1.msra.mxu0 0.0
    %2454 = vmatprep.subr.mxu0 0.0
    %2455 = vmatpush1.msra.mxu0 0.0
    %2456 = vmatprep.subr.mxu0 0.0
    %2457 = vmatpush1.msra.mxu0 0.0
    %2458 = vmatprep.subr.mxu0 0.0
    %2459 = vmatpush1.msra.mxu0 0.0
    %2460 = vmatprep.subr.mxu0 0.0
    %2461 = vmatpush1.msra.mxu0 0.0
    %2462 = vmatprep.subr.mxu0 0.0
    %2463 = vmatpush1.msra.mxu0 0.0
    %2464 = vmatprep.subr.mxu0 0.0
    %2465 = vmatpush1.msra.mxu0 0.0
    %2466 = vmatprep.subr.mxu0 0.0
    %2467 = vmatpush1.msra.mxu0 0.0
    %2468 = vmatprep.subr.mxu0 0.0
    %2469 = vmatpush1.msra.mxu0 0.0
    %2470 = vmatprep.subr.mxu0 0.0
    %2471 = vmatpush1.msra.mxu0 0.0
    %2472 = vmatprep.subr.mxu0 0.0
    %2473 = vmatpush1.msra.mxu0 0.0
    %2474 = vmatprep.subr.mxu0 0.0
    %2475 = vmatpush1.msra.mxu0 0.0
    %2476 = vmatprep.subr.mxu0 0.0
    %2477 = vmatpush1.msra.mxu0 0.0
    %2478 = vmatprep.subr.mxu0 0.0
    %2479 = vmatpush1.msra.mxu0 0.0
    %2480 = vmatprep.subr.mxu0 0.0
    %2481 = vmatpush1.msra.mxu0 0.0
    %2482 = vmatprep.subr.mxu0 0.0
    %2483 = vmatpush1.msra.mxu0 0.0
    %2484 = vmatprep.subr.mxu0 0.0
    %2485 = vmatpush1.msra.mxu0 0.0
    %2486 = vmatprep.subr.mxu0 0.0
    %2487 = vmatpush1.msra.mxu0 0.0
    %2488 = vmatprep.subr.mxu0 0.0
    %2489 = vmatpush1.msra.mxu0 0.0
    %2490 = vmatprep.subr.mxu0 0.0
    %2491 = vmatpush1.msra.mxu0 0.0
    %2492 = vmatprep.subr.mxu0 0.0
    %2493 = vmatpush1.msra.mxu0 0.0
    %2494 = vmatprep.subr.mxu0 0.0
    %2495 = vmatpush1.msra.mxu0 0.0
    %2496 = vmatprep.mubr.f32.mxu0 0.0
    %2497 = vmatmul.mubr.f32.gmra.mrb[0].mxu0 %v2421
    %v2498 = vpop.f32.mrb[0].mxu0
    %v2499 = vadd.f32 0.0, %v2498
    %v2500 = vpop.f32.mrb[0].mxu0
    %2501 = vmatprep.mubr.f32.mxu0 0.0
    %2502 = vmatmul.mubr.f32.gmra.mrb[0].mxu0 %v2424
    %v2503 = vpop.f32.mrb[0].mxu0
    %v2504 = vadd.f32 0.0, %v2503
    %v2505 = vpop.f32.mrb[0].mxu0
    %2506 = vmatprep.mubr.f32.mxu0 0.0
    %2507 = vmatmul.mubr.f32.gmra.mrb[0].mxu0 %v2427
    %v2508 = vpop.f32.mrb[0].mxu0
    %v2509 = vadd.f32 0.0, %v2508
    %v2510 = vpop.f32.mrb[0].mxu0
    %2511 = vmatprep.mubr.f32.mxu0 0.0
    %2512 = vmatmul.mubr.f32.gmra.mrb[0].mxu0 %v2430
    %v2513 = vpop.f32.mrb[0].mxu0
    %v2514 = vadd.f32 0.0, %v2513
    %v2515 = vpop.f32.mrb[0].mxu0
    %2516 = vdwg.mxu0
    %2517 = vmatprep.subr.mxu0 0.0
    %2518 = vmatpush1.msra.mxu0 %v2416
    %2519 = vmatprep.subr.mxu0 0.0
    %2520 = vmatpush1.msra.mxu0 %v2417
    %2521 = vmatprep.subr.mxu0 0.0
    %2522 = vmatpush1.msra.mxu0 0.0
    %2523 = vmatprep.subr.mxu0 0.0
    %2524 = vmatpush1.msra.mxu0 0.0
    %2525 = vmatprep.subr.mxu0 0.0
    %2526 = vmatpush1.msra.mxu0 0.0
    %2527 = vmatprep.subr.mxu0 0.0
    %2528 = vmatpush1.msra.mxu0 0.0
    %2529 = vmatprep.subr.mxu0 0.0
    %2530 = vmatpush1.msra.mxu0 0.0
    %2531 = vmatprep.subr.mxu0 0.0
    %2532 = vmatpush1.msra.mxu0 0.0
    %2533 = vmatprep.subr.mxu0 0.0
    %2534 = vmatpush1.msra.mxu0 0.0
    %2535 = vmatprep.subr.mxu0 0.0
    %2536 = vmatpush1.msra.mxu0 0.0
    %2537 = vmatprep.subr.mxu0 0.0
    %2538 = vmatpush1.msra.mxu0 0.0
    %2539 = vmatprep.subr.mxu0 0.0
    %2540 = vmatpush1.msra.mxu0 0.0
    %2541 = vmatprep.subr.mxu0 0.0
    %2542 = vmatpush1.msra.mxu0 0.0
    %2543 = vmatprep.subr.mxu0 0.0
    %2544 = vmatpush1.msra.mxu0 0.0
    %2545 = vmatprep.subr.mxu0 0.0
    %2546 = vmatpush1.msra.mxu0 0.0
    %2547 = vmatprep.subr.mxu0 0.0
    %2548 = vmatpush1.msra.mxu0 0.0
    %2549 = vmatprep.subr.mxu0 0.0
    %2550 = vmatpush1.msra.mxu0 0.0
    %2551 = vmatprep.subr.mxu0 0.0
    %2552 = vmatpush1.msra.mxu0 0.0
    %2553 = vmatprep.subr.mxu0 0.0
    %2554 = vmatpush1.msra.mxu0 0.0
    %2555 = vmatprep.subr.mxu0 0.0
    %2556 = vmatpush1.msra.mxu0 0.0
    %2557 = vmatprep.subr.mxu0 0.0
    %2558 = vmatpush1.msra.mxu0 0.0
    %2559 = vmatprep.subr.mxu0 0.0
    %2560 = vmatpush1.msra.mxu0 0.0
    %2561 = vmatprep.subr.mxu0 0.0
    %2562 = vmatpush1.msra.mxu0 0.0
    %2563 = vmatprep.subr.mxu0 0.0
    %2564 = vmatpush1.msra.mxu0 0.0
    %2565 = vmatprep.subr.mxu0 0.0
    %2566 = vmatpush1.msra.mxu0 0.0
    %2567 = vmatprep.subr.mxu0 0.0
    %2568 = vmatpush1.msra.mxu0 0.0
    %2569 = vmatprep.subr.mxu0 0.0
    %2570 = vmatpush1.msra.mxu0 0.0
    %2571 = vmatprep.subr.mxu0 0.0
    %2572 = vmatpush1.msra.mxu0 0.0
    %2573 = vmatprep.subr.mxu0 0.0
    %2574 = vmatpush1.msra.mxu0 0.0
    %2575 = vmatprep.subr.mxu0 0.0
    %2576 = vmatpush1.msra.mxu0 0.0
    %2577 = vmatprep.subr.mxu0 0.0
    %2578 = vmatpush1.msra.mxu0 0.0
    %2579 = vmatprep.subr.mxu0 0.0
    %2580 = vmatpush1.msra.mxu0 0.0
    %2581 = vmatprep.mubr.f32.mxu0 0.0
    %2582 = vmatmul.mubr.f32.gmra.mrb[0].mxu0 %v551
    %v2583 = vpop.f32.mrb[0].mxu0
    %v2584 = vadd.f32 %v2499, %v2583
    %v2585 = vpop.f32.mrb[0].mxu0
    %2586 = vmatprep.mubr.f32.mxu0 0.0
    %2587 = vmatmul.mubr.f32.gmra.mrb[0].mxu0 %v554
    %v2588 = vpop.f32.mrb[0].mxu0
    %v2589 = vadd.f32 %v2504, %v2588
    %v2590 = vpop.f32.mrb[0].mxu0
    %2591 = vmatprep.mubr.f32.mxu0 0.0
    %2592 = vmatmul.mubr.f32.gmra.mrb[0].mxu0 %v557
    %v2593 = vpop.f32.mrb[0].mxu0
    %v2594 = vadd.f32 %v2509, %v2593
    %v2595 = vpop.f32.mrb[0].mxu0
    %2596 = vmatprep.mubr.f32.mxu0 0.0
    %2597 = vmatmul.mubr.f32.gmra.mrb[0].mxu0 %v560
    %v2598 = vpop.f32.mrb[0].mxu0
    %v2599 = vadd.f32 %v2514, %v2598
    %v2600 = vpop.f32.mrb[0].mxu0
    %2601 = vdwg.mxu0
    %v2602 = vld [vmem:[#allocation15] sm:$0x1]
    %v2604 = vlaneseq
    %v2605 = vshrl.u32 %v2604, 7
    %v2606 = vsub.s32 0, %v2605
    %v2607 = vrot.slane %v2602, %v2606
    %v2609 = vadd.f32 %v2584, %v2607
    %v2610 = vadd.f32 %v2589, %v2607
    %v2611 = vadd.f32 %v2594, %v2607
    %v2612 = vadd.f32 %v2599, %v2607
    %v2613 = vld [vmem:[%s33] sm:$0xff]
    %v2614 = vld [vmem:[%s33 + $0x8] sm:$0xff]
    %v2615 = vld [vmem:[%s33 + $0x10] sm:$0xff]
    %v2616 = vld [vmem:[%s35] sm:$0xff]
    %v2617 = vld [vmem:[%s35 + $0x8] sm:$0xff]
    %v2618 = vld [vmem:[%s35 + $0x10] sm:$0xff]
    %v2619 = vld [vmem:[#allocation16] sm:$0xff]
    %v2620 = vld [vmem:[#allocation16 + $0x8] sm:$0xff]
    %v2621 = vld [vmem:[#allocation16 + $0x10] sm:$0xff]
    %v2622 = vld [vmem:[%s39] sm:$0xff]
    %v2623 = vld [vmem:[%s39 + $0x8] sm:$0xff]
    %v2624 = vld [vmem:[%s39 + $0x10] sm:$0xff]
    %v2625 = vld [vmem:[#allocation18] sm:$0xff]
    %vm2626 = vcmask 64512
    %v2628 = vsel %vm2626, %v2613, 0
    %v2631 = vsel %vm2626, %v2614, 0
    %v2634 = vsel %vm2626, %v2615, 0
    %2636 = vmatprep.subr.mxu0 0.0
    %2637 = vmatpush1.msra.mxu0 %v2625
    %2638 = vmatprep.subr.mxu0 0.0
    %2639 = vmatpush1.msra.mxu0 0.0
    %2640 = vmatprep.subr.mxu0 0.0
    %2641 = vmatpush1.msra.mxu0 0.0
    %2642 = vmatprep.subr.mxu0 0.0
    %2643 = vmatpush1.msra.mxu0 0.0
    %2644 = vmatprep.subr.mxu0 0.0
    %2645 = vmatpush1.msra.mxu0 0.0
    %2646 = vmatprep.subr.mxu0 0.0
    %2647 = vmatpush1.msra.mxu0 0.0
    %2648 = vmatprep.subr.mxu0 0.0
    %2649 = vmatpush1.msra.mxu0 0.0
    %2650 = vmatprep.subr.mxu0 0.0
    %2651 = vmatpush1.msra.mxu0 0.0
    %2652 = vmatprep.subr.mxu0 0.0
    %2653 = vmatpush1.msra.mxu0 0.0
    %2654 = vmatprep.subr.mxu0 0.0
    %2655 = vmatpush1.msra.mxu0 0.0
    %2656 = vmatprep.subr.mxu0 0.0
    %2657 = vmatpush1.msra.mxu0 0.0
    %2658 = vmatprep.subr.mxu0 0.0
    %2659 = vmatpush1.msra.mxu0 0.0
    %2660 = vmatprep.subr.mxu0 0.0
    %2661 = vmatpush1.msra.mxu0 0.0
    %2662 = vmatprep.subr.mxu0 0.0
    %2663 = vmatpush1.msra.mxu0 0.0
    %2664 = vmatprep.subr.mxu0 0.0
    %2665 = vmatpush1.msra.mxu0 0.0
    %2666 = vmatprep.subr.mxu0 0.0
    %2667 = vmatpush1.msra.mxu0 0.0
    %2668 = vmatprep.subr.mxu0 0.0
    %2669 = vmatpush1.msra.mxu0 0.0
    %2670 = vmatprep.subr.mxu0 0.0
    %2671 = vmatpush1.msra.mxu0 0.0
    %2672 = vmatprep.subr.mxu0 0.0
    %2673 = vmatpush1.msra.mxu0 0.0
    %2674 = vmatprep.subr.mxu0 0.0
    %2675 = vmatpush1.msra.mxu0 0.0
    %2676 = vmatprep.subr.mxu0 0.0
    %2677 = vmatpush1.msra.mxu0 0.0
    %2678 = vmatprep.subr.mxu0 0.0
    %2679 = vmatpush1.msra.mxu0 0.0
    %2680 = vmatprep.subr.mxu0 0.0
    %2681 = vmatpush1.msra.mxu0 0.0
    %2682 = vmatprep.subr.mxu0 0.0
    %2683 = vmatpush1.msra.mxu0 0.0
    %2684 = vmatprep.subr.mxu0 0.0
    %2685 = vmatpush1.msra.mxu0 0.0
    %2686 = vmatprep.subr.mxu0 0.0
    %2687 = vmatpush1.msra.mxu0 0.0
    %2688 = vmatprep.subr.mxu0 0.0
    %2689 = vmatpush1.msra.mxu0 0.0
    %2690 = vmatprep.subr.mxu0 0.0
    %2691 = vmatpush1.msra.mxu0 0.0
    %2692 = vmatprep.subr.mxu0 0.0
    %2693 = vmatpush1.msra.mxu0 0.0
    %2694 = vmatprep.subr.mxu0 0.0
    %2695 = vmatpush1.msra.mxu0 0.0
    %2696 = vmatprep.subr.mxu0 0.0
    %2697 = vmatpush1.msra.mxu0 0.0
    %2698 = vmatprep.subr.mxu0 0.0
    %2699 = vmatpush1.msra.mxu0 0.0
    %2700 = vmatprep.mubr.f32.mxu0 0.0
    %2701 = vmatmul.mubr.f32.gmra.mrb[0].mxu0 %v2628
    %v2702 = vpop.f32.mrb[0].mxu0
    %v2703 = vadd.f32 0.0, %v2702
    %v2704 = vpop.f32.mrb[0].mxu0
    %2705 = vmatprep.mubr.f32.mxu0 0.0
    %2706 = vmatmul.mubr.f32.gmra.mrb[0].mxu0 %v2631
    %v2707 = vpop.f32.mrb[0].mxu0
    %v2708 = vadd.f32 0.0, %v2707
    %v2709 = vpop.f32.mrb[0].mxu0
    %2710 = vmatprep.mubr.f32.mxu0 0.0
    %2711 = vmatmul.mubr.f32.gmra.mrb[0].mxu0 %v2634
    %v2712 = vpop.f32.mrb[0].mxu0
    %v2713 = vadd.f32 0.0, %v2712
    %v2714 = vpop.f32.mrb[0].mxu0
    %2715 = vdwg.mxu0
    %v2716 = vld [vmem:[#allocation19] sm:$0x1]
    %v2718 = vlaneseq
    %v2719 = vshrl.u32 %v2718, 7
    %v2720 = vsub.s32 0, %v2719
    %v2721 = vrot.slane %v2716, %v2720
    %vm2723 = vcmask 195584
    %v2725 = vsel %vm2723, %v2616, 0
    %v2728 = vsel %vm2723, %v2617, 0
    %v2731 = vsel %vm2723, %v2618, 0
    %2733 = vmatprep.subr.mxu0 0.0
    %2734 = vmatpush1.msra.mxu0 %v2703
    %2735 = vmatprep.subr.mxu0 0.0
    %2736 = vmatpush1.msra.mxu0 %v2708
    %2737 = vmatprep.subr.mxu0 0.0
    %2738 = vmatpush1.msra.mxu0 %v2713
    %2739 = vmatprep.subr.mxu0 0.0
    %2740 = vmatpush1.msra.mxu0 0.0
    %2741 = vmatprep.subr.mxu0 0.0
    %2742 = vmatpush1.msra.mxu0 0.0
    %2743 = vmatprep.subr.mxu0 0.0
    %2744 = vmatpush1.msra.mxu0 0.0
    %2745 = vmatprep.subr.mxu0 0.0
    %2746 = vmatpush1.msra.mxu0 0.0
    %2747 = vmatprep.subr.mxu0 0.0
    %2748 = vmatpush1.msra.mxu0 0.0
    %2749 = vmatprep.subr.mxu0 0.0
    %2750 = vmatpush1.msra.mxu0 0.0
    %2751 = vmatprep.subr.mxu0 0.0
    %2752 = vmatpush1.msra.mxu0 0.0
    %2753 = vmatprep.subr.mxu0 0.0
    %2754 = vmatpush1.msra.mxu0 0.0
    %2755 = vmatprep.subr.mxu0 0.0
    %2756 = vmatpush1.msra.mxu0 0.0
    %2757 = vmatprep.subr.mxu0 0.0
    %2758 = vmatpush1.msra.mxu0 0.0
    %2759 = vmatprep.subr.mxu0 0.0
    %2760 = vmatpush1.msra.mxu0 0.0
    %2761 = vmatprep.subr.mxu0 0.0
    %2762 = vmatpush1.msra.mxu0 0.0
    %2763 = vmatprep.subr.mxu0 0.0
    %2764 = vmatpush1.msra.mxu0 0.0
    %2765 = vmatprep.subr.mxu0 0.0
    %2766 = vmatpush1.msra.mxu0 0.0
    %2767 = vmatprep.subr.mxu0 0.0
    %2768 = vmatpush1.msra.mxu0 0.0
    %2769 = vmatprep.subr.mxu0 0.0
    %2770 = vmatpush1.msra.mxu0 0.0
    %2771 = vmatprep.subr.mxu0 0.0
    %2772 = vmatpush1.msra.mxu0 0.0
    %2773 = vmatprep.subr.mxu0 0.0
    %2774 = vmatpush1.msra.mxu0 0.0
    %2775 = vmatprep.subr.mxu0 0.0
    %2776 = vmatpush1.msra.mxu0 0.0
    %2777 = vmatprep.subr.mxu0 0.0
    %2778 = vmatpush1.msra.mxu0 0.0
    %2779 = vmatprep.subr.mxu0 0.0
    %2780 = vmatpush1.msra.mxu0 0.0
    %2781 = vmatprep.subr.mxu0 0.0
    %2782 = vmatpush1.msra.mxu0 0.0
    %2783 = vmatprep.subr.mxu0 0.0
    %2784 = vmatpush1.msra.mxu0 0.0
    %2785 = vmatprep.subr.mxu0 0.0
    %2786 = vmatpush1.msra.mxu0 0.0
    %2787 = vmatprep.subr.mxu0 0.0
    %2788 = vmatpush1.msra.mxu0 0.0
    %2789 = vmatprep.subr.mxu0 0.0
    %2790 = vmatpush1.msra.mxu0 0.0
    %2791 = vmatprep.subr.mxu0 0.0
    %2792 = vmatpush1.msra.mxu0 0.0
    %2793 = vmatprep.subr.mxu0 0.0
    %2794 = vmatpush1.msra.mxu0 0.0
    %2795 = vmatprep.subr.mxu0 0.0
    %2796 = vmatpush1.msra.mxu0 0.0
    %2797 = vmatprep.mubr.f32.mxu0 0.0
    %2798 = vmatmul.mubr.f32.gmra.mrb[0].mxu0 %v2725
    %v2799 = vpop.f32.mrb[0].mxu0
    %v2800 = vadd.f32 %v2721, %v2799
    %v2801 = vpop.f32.mrb[0].mxu0
    %2802 = vmatprep.mubr.f32.mxu0 0.0
    %2803 = vmatmul.mubr.f32.gmra.mrb[0].mxu0 %v2728
    %v2804 = vpop.f32.mrb[0].mxu0
    %v2805 = vadd.f32 %v2721, %v2804
    %v2806 = vpop.f32.mrb[0].mxu0
    %2807 = vmatprep.mubr.f32.mxu0 0.0
    %2808 = vmatmul.mubr.f32.gmra.mrb[0].mxu0 %v2731
    %v2809 = vpop.f32.mrb[0].mxu0
    %v2810 = vadd.f32 %v2721, %v2809
    %v2811 = vpop.f32.mrb[0].mxu0
    %2812 = vdwg.mxu0
    %v2813 = vmax.f32 %v2800, 0.0
    %v2814 = vmax.f32 %v2805, 0.0
    %v2815 = vmax.f32 %v2810, 0.0
    %v2816 = vld [vmem:[%s45] sm:$0xff]
    %v2817 = vld [vmem:[%s45 + $0x8] sm:$0xff]
    %v2818 = vld [vmem:[%s45 + $0x10] sm:$0xff]
    %v2819 = vld [vmem:[%s45 + $0x18] sm:$0xff]
    %v2821 = vsel %vm2626, %v2813, 0
    %v2824 = vsel %vm2626, %v2814, 0
    %v2827 = vsel %vm2626, %v2815, 0
    %2829 = vmatprep.subr.mxu0 0.0
    %2830 = vmatpush1.msra.mxu0 %v2816
    %2831 = vmatprep.subr.mxu0 0.0
    %2832 = vmatpush1.msra.mxu0 0.0
    %2833 = vmatprep.subr.mxu0 0.0
    %2834 = vmatpush1.msra.mxu0 0.0
    %2835 = vmatprep.subr.mxu0 0.0
    %2836 = vmatpush1.msra.mxu0 0.0
    %2837 = vmatprep.subr.mxu0 0.0
    %2838 = vmatpush1.msra.mxu0 0.0
    %2839 = vmatprep.subr.mxu0 0.0
    %2840 = vmatpush1.msra.mxu0 0.0
    %2841 = vmatprep.subr.mxu0 0.0
    %2842 = vmatpush1.msra.mxu0 0.0
    %2843 = vmatprep.subr.mxu0 0.0
    %2844 = vmatpush1.msra.mxu0 0.0
    %2845 = vmatprep.subr.mxu0 0.0
    %2846 = vmatpush1.msra.mxu0 0.0
    %2847 = vmatprep.subr.mxu0 0.0
    %2848 = vmatpush1.msra.mxu0 0.0
    %2849 = vmatprep.subr.mxu0 0.0
    %2850 = vmatpush1.msra.mxu0 0.0
    %2851 = vmatprep.subr.mxu0 0.0
    %2852 = vmatpush1.msra.mxu0 0.0
    %2853 = vmatprep.subr.mxu0 0.0
    %2854 = vmatpush1.msra.mxu0 0.0
    %2855 = vmatprep.subr.mxu0 0.0
    %2856 = vmatpush1.msra.mxu0 0.0
    %2857 = vmatprep.subr.mxu0 0.0
    %2858 = vmatpush1.msra.mxu0 0.0
    %2859 = vmatprep.subr.mxu0 0.0
    %2860 = vmatpush1.msra.mxu0 0.0
    %2861 = vmatprep.subr.mxu0 0.0
    %2862 = vmatpush1.msra.mxu0 0.0
    %2863 = vmatprep.subr.mxu0 0.0
    %2864 = vmatpush1.msra.mxu0 0.0
    %2865 = vmatprep.subr.mxu0 0.0
    %2866 = vmatpush1.msra.mxu0 0.0
    %2867 = vmatprep.subr.mxu0 0.0
    %2868 = vmatpush1.msra.mxu0 0.0
    %2869 = vmatprep.subr.mxu0 0.0
    %2870 = vmatpush1.msra.mxu0 0.0
    %2871 = vmatprep.subr.mxu0 0.0
    %2872 = vmatpush1.msra.mxu0 0.0
    %2873 = vmatprep.subr.mxu0 0.0
    %2874 = vmatpush1.msra.mxu0 0.0
    %2875 = vmatprep.subr.mxu0 0.0
    %2876 = vmatpush1.msra.mxu0 0.0
    %2877 = vmatprep.subr.mxu0 0.0
    %2878 = vmatpush1.msra.mxu0 0.0
    %2879 = vmatprep.subr.mxu0 0.0
    %2880 = vmatpush1.msra.mxu0 0.0
    %2881 = vmatprep.subr.mxu0 0.0
    %2882 = vmatpush1.msra.mxu0 0.0
    %2883 = vmatprep.subr.mxu0 0.0
    %2884 = vmatpush1.msra.mxu0 0.0
    %2885 = vmatprep.subr.mxu0 0.0
    %2886 = vmatpush1.msra.mxu0 0.0
    %2887 = vmatprep.subr.mxu0 0.0
    %2888 = vmatpush1.msra.mxu0 0.0
    %2889 = vmatprep.subr.mxu0 0.0
    %2890 = vmatpush1.msra.mxu0 0.0
    %2891 = vmatprep.subr.mxu0 0.0
    %2892 = vmatpush1.msra.mxu0 0.0
    %2893 = vmatprep.mubr.f32.mxu0 0.0
    %2894 = vmatmul.mubr.f32.gmra.mrb[0].mxu0 %v2821
    %v2895 = vpop.f32.mrb[0].mxu0
    %v2896 = vadd.f32 0.0, %v2895
    %v2897 = vpop.f32.mrb[0].mxu0
    %2898 = vmatprep.mubr.f32.mxu0 0.0
    %2899 = vmatmul.mubr.f32.gmra.mrb[0].mxu0 %v2824
    %v2900 = vpop.f32.mrb[0].mxu0
    %v2901 = vadd.f32 0.0, %v2900
    %v2902 = vpop.f32.mrb[0].mxu0
    %2903 = vmatprep.mubr.f32.mxu0 0.0
    %2904 = vmatmul.mubr.f32.gmra.mrb[0].mxu0 %v2827
    %v2905 = vpop.f32.mrb[0].mxu0
    %v2906 = vadd.f32 0.0, %v2905
    %v2907 = vpop.f32.mrb[0].mxu0
    %2908 = vdwg.mxu0
    %2909 = vmatprep.subr.mxu0 0.0
    %2910 = vmatpush1.msra.mxu0 %v2817
    %2911 = vmatprep.subr.mxu0 0.0
    %2912 = vmatpush1.msra.mxu0 0.0
    %2913 = vmatprep.subr.mxu0 0.0
    %2914 = vmatpush1.msra.mxu0 0.0
    %2915 = vmatprep.subr.mxu0 0.0
    %2916 = vmatpush1.msra.mxu0 0.0
    %2917 = vmatprep.subr.mxu0 0.0
    %2918 = vmatpush1.msra.mxu0 0.0
    %2919 = vmatprep.subr.mxu0 0.0
    %2920 = vmatpush1.msra.mxu0 0.0
    %2921 = vmatprep.subr.mxu0 0.0
    %2922 = vmatpush1.msra.mxu0 0.0
    %2923 = vmatprep.subr.mxu0 0.0
    %2924 = vmatpush1.msra.mxu0 0.0
    %2925 = vmatprep.subr.mxu0 0.0
    %2926 = vmatpush1.msra.mxu0 0.0
    %2927 = vmatprep.subr.mxu0 0.0
    %2928 = vmatpush1.msra.mxu0 0.0
    %2929 = vmatprep.subr.mxu0 0.0
    %2930 = vmatpush1.msra.mxu0 0.0
    %2931 = vmatprep.subr.mxu0 0.0
    %2932 = vmatpush1.msra.mxu0 0.0
    %2933 = vmatprep.subr.mxu0 0.0
    %2934 = vmatpush1.msra.mxu0 0.0
    %2935 = vmatprep.subr.mxu0 0.0
    %2936 = vmatpush1.msra.mxu0 0.0
    %2937 = vmatprep.subr.mxu0 0.0
    %2938 = vmatpush1.msra.mxu0 0.0
    %2939 = vmatprep.subr.mxu0 0.0
    %2940 = vmatpush1.msra.mxu0 0.0
    %2941 = vmatprep.subr.mxu0 0.0
    %2942 = vmatpush1.msra.mxu0 0.0
    %2943 = vmatprep.subr.mxu0 0.0
    %2944 = vmatpush1.msra.mxu0 0.0
    %2945 = vmatprep.subr.mxu0 0.0
    %2946 = vmatpush1.msra.mxu0 0.0
    %2947 = vmatprep.subr.mxu0 0.0
    %2948 = vmatpush1.msra.mxu0 0.0
    %2949 = vmatprep.subr.mxu0 0.0
    %2950 = vmatpush1.msra.mxu0 0.0
    %2951 = vmatprep.subr.mxu0 0.0
    %2952 = vmatpush1.msra.mxu0 0.0
    %2953 = vmatprep.subr.mxu0 0.0
    %2954 = vmatpush1.msra.mxu0 0.0
    %2955 = vmatprep.subr.mxu0 0.0
    %2956 = vmatpush1.msra.mxu0 0.0
    %2957 = vmatprep.subr.mxu0 0.0
    %2958 = vmatpush1.msra.mxu0 0.0
    %2959 = vmatprep.subr.mxu0 0.0
    %2960 = vmatpush1.msra.mxu0 0.0
    %2961 = vmatprep.subr.mxu0 0.0
    %2962 = vmatpush1.msra.mxu0 0.0
    %2963 = vmatprep.subr.mxu0 0.0
    %2964 = vmatpush1.msra.mxu0 0.0
    %2965 = vmatprep.subr.mxu0 0.0
    %2966 = vmatpush1.msra.mxu0 0.0
    %2967 = vmatprep.subr.mxu0 0.0
    %2968 = vmatpush1.msra.mxu0 0.0
    %2969 = vmatprep.subr.mxu0 0.0
    %2970 = vmatpush1.msra.mxu0 0.0
    %2971 = vmatprep.subr.mxu0 0.0
    %2972 = vmatpush1.msra.mxu0 0.0
    %2973 = vmatprep.mubr.f32.mxu0 0.0
    %2974 = vmatmul.mubr.f32.gmra.mrb[0].mxu0 %v2821
    %v2975 = vpop.f32.mrb[0].mxu0
    %v2976 = vadd.f32 0.0, %v2975
    %v2977 = vpop.f32.mrb[0].mxu0
    %2978 = vmatprep.mubr.f32.mxu0 0.0
    %2979 = vmatmul.mubr.f32.gmra.mrb[0].mxu0 %v2824
    %v2980 = vpop.f32.mrb[0].mxu0
    %v2981 = vadd.f32 0.0, %v2980
    %v2982 = vpop.f32.mrb[0].mxu0
    %2983 = vmatprep.mubr.f32.mxu0 0.0
    %2984 = vmatmul.mubr.f32.gmra.mrb[0].mxu0 %v2827
    %v2985 = vpop.f32.mrb[0].mxu0
    %v2986 = vadd.f32 0.0, %v2985
    %v2987 = vpop.f32.mrb[0].mxu0
    %2988 = vdwg.mxu0
    %2989 = vmatprep.subr.mxu0 0.0
    %2990 = vmatpush1.msra.mxu0 %v2818
    %2991 = vmatprep.subr.mxu0 0.0
    %2992 = vmatpush1.msra.mxu0 0.0
    %2993 = vmatprep.subr.mxu0 0.0
    %2994 = vmatpush1.msra.mxu0 0.0
    %2995 = vmatprep.subr.mxu0 0.0
    %2996 = vmatpush1.msra.mxu0 0.0
    %2997 = vmatprep.subr.mxu0 0.0
    %2998 = vmatpush1.msra.mxu0 0.0
    %2999 = vmatprep.subr.mxu0 0.0
    %3000 = vmatpush1.msra.mxu0 0.0
    %3001 = vmatprep.subr.mxu0 0.0
    %3002 = vmatpush1.msra.mxu0 0.0
    %3003 = vmatprep.subr.mxu0 0.0
    %3004 = vmatpush1.msra.mxu0 0.0
    %3005 = vmatprep.subr.mxu0 0.0
    %3006 = vmatpush1.msra.mxu0 0.0
    %3007 = vmatprep.subr.mxu0 0.0
    %3008 = vmatpush1.msra.mxu0 0.0
    %3009 = vmatprep.subr.mxu0 0.0
    %3010 = vmatpush1.msra.mxu0 0.0
    %3011 = vmatprep.subr.mxu0 0.0
    %3012 = vmatpush1.msra.mxu0 0.0
    %3013 = vmatprep.subr.mxu0 0.0
    %3014 = vmatpush1.msra.mxu0 0.0
    %3015 = vmatprep.subr.mxu0 0.0
    %3016 = vmatpush1.msra.mxu0 0.0
    %3017 = vmatprep.subr.mxu0 0.0
    %3018 = vmatpush1.msra.mxu0 0.0
    %3019 = vmatprep.subr.mxu0 0.0
    %3020 = vmatpush1.msra.mxu0 0.0
    %3021 = vmatprep.subr.mxu0 0.0
    %3022 = vmatpush1.msra.mxu0 0.0
    %3023 = vmatprep.subr.mxu0 0.0
    %3024 = vmatpush1.msra.mxu0 0.0
    %3025 = vmatprep.subr.mxu0 0.0
    %3026 = vmatpush1.msra.mxu0 0.0
    %3027 = vmatprep.subr.mxu0 0.0
    %3028 = vmatpush1.msra.mxu0 0.0
    %3029 = vmatprep.subr.mxu0 0.0
    %3030 = vmatpush1.msra.mxu0 0.0
    %3031 = vmatprep.subr.mxu0 0.0
    %3032 = vmatpush1.msra.mxu0 0.0
    %3033 = vmatprep.subr.mxu0 0.0
    %3034 = vmatpush1.msra.mxu0 0.0
    %3035 = vmatprep.subr.mxu0 0.0
    %3036 = vmatpush1.msra.mxu0 0.0
    %3037 = vmatprep.subr.mxu0 0.0
    %3038 = vmatpush1.msra.mxu0 0.0
    %3039 = vmatprep.subr.mxu0 0.0
    %3040 = vmatpush1.msra.mxu0 0.0
    %3041 = vmatprep.subr.mxu0 0.0
    %3042 = vmatpush1.msra.mxu0 0.0
    %3043 = vmatprep.subr.mxu0 0.0
    %3044 = vmatpush1.msra.mxu0 0.0
    %3045 = vmatprep.subr.mxu0 0.0
    %3046 = vmatpush1.msra.mxu0 0.0
    %3047 = vmatprep.subr.mxu0 0.0
    %3048 = vmatpush1.msra.mxu0 0.0
    %3049 = vmatprep.subr.mxu0 0.0
    %3050 = vmatpush1.msra.mxu0 0.0
    %3051 = vmatprep.subr.mxu0 0.0
    %3052 = vmatpush1.msra.mxu0 0.0
    %3053 = vmatprep.mubr.f32.mxu0 0.0
    %3054 = vmatmul.mubr.f32.gmra.mrb[0].mxu0 %v2821
    %v3055 = vpop.f32.mrb[0].mxu0
    %v3056 = vadd.f32 0.0, %v3055
    %v3057 = vpop.f32.mrb[0].mxu0
    %3058 = vmatprep.mubr.f32.mxu0 0.0
    %3059 = vmatmul.mubr.f32.gmra.mrb[0].mxu0 %v2824
    %v3060 = vpop.f32.mrb[0].mxu0
    %v3061 = vadd.f32 0.0, %v3060
    %v3062 = vpop.f32.mrb[0].mxu0
    %3063 = vmatprep.mubr.f32.mxu0 0.0
    %3064 = vmatmul.mubr.f32.gmra.mrb[0].mxu0 %v2827
    %v3065 = vpop.f32.mrb[0].mxu0
    %v3066 = vadd.f32 0.0, %v3065
    %v3067 = vpop.f32.mrb[0].mxu0
    %3068 = vdwg.mxu0
    %3069 = vmatprep.subr.mxu0 0.0
    %3070 = vmatpush1.msra.mxu0 %v2819
    %3071 = vmatprep.subr.mxu0 0.0
    %3072 = vmatpush1.msra.mxu0 0.0
    %3073 = vmatprep.subr.mxu0 0.0
    %3074 = vmatpush1.msra.mxu0 0.0
    %3075 = vmatprep.subr.mxu0 0.0
    %3076 = vmatpush1.msra.mxu0 0.0
    %3077 = vmatprep.subr.mxu0 0.0
    %3078 = vmatpush1.msra.mxu0 0.0
    %3079 = vmatprep.subr.mxu0 0.0
    %3080 = vmatpush1.msra.mxu0 0.0
    %3081 = vmatprep.subr.mxu0 0.0
    %3082 = vmatpush1.msra.mxu0 0.0
    %3083 = vmatprep.subr.mxu0 0.0
    %3084 = vmatpush1.msra.mxu0 0.0
    %3085 = vmatprep.subr.mxu0 0.0
    %3086 = vmatpush1.msra.mxu0 0.0
    %3087 = vmatprep.subr.mxu0 0.0
    %3088 = vmatpush1.msra.mxu0 0.0
    %3089 = vmatprep.subr.mxu0 0.0
    %3090 = vmatpush1.msra.mxu0 0.0
    %3091 = vmatprep.subr.mxu0 0.0
    %3092 = vmatpush1.msra.mxu0 0.0
    %3093 = vmatprep.subr.mxu0 0.0
    %3094 = vmatpush1.msra.mxu0 0.0
    %3095 = vmatprep.subr.mxu0 0.0
    %3096 = vmatpush1.msra.mxu0 0.0
    %3097 = vmatprep.subr.mxu0 0.0
    %3098 = vmatpush1.msra.mxu0 0.0
    %3099 = vmatprep.subr.mxu0 0.0
    %3100 = vmatpush1.msra.mxu0 0.0
    %3101 = vmatprep.subr.mxu0 0.0
    %3102 = vmatpush1.msra.mxu0 0.0
    %3103 = vmatprep.subr.mxu0 0.0
    %3104 = vmatpush1.msra.mxu0 0.0
    %3105 = vmatprep.subr.mxu0 0.0
    %3106 = vmatpush1.msra.mxu0 0.0
    %3107 = vmatprep.subr.mxu0 0.0
    %3108 = vmatpush1.msra.mxu0 0.0
    %3109 = vmatprep.subr.mxu0 0.0
    %3110 = vmatpush1.msra.mxu0 0.0
    %3111 = vmatprep.subr.mxu0 0.0
    %3112 = vmatpush1.msra.mxu0 0.0
    %3113 = vmatprep.subr.mxu0 0.0
    %3114 = vmatpush1.msra.mxu0 0.0
    %3115 = vmatprep.subr.mxu0 0.0
    %3116 = vmatpush1.msra.mxu0 0.0
    %3117 = vmatprep.subr.mxu0 0.0
    %3118 = vmatpush1.msra.mxu0 0.0
    %3119 = vmatprep.subr.mxu0 0.0
    %3120 = vmatpush1.msra.mxu0 0.0
    %3121 = vmatprep.subr.mxu0 0.0
    %3122 = vmatpush1.msra.mxu0 0.0
    %3123 = vmatprep.subr.mxu0 0.0
    %3124 = vmatpush1.msra.mxu0 0.0
    %3125 = vmatprep.subr.mxu0 0.0
    %3126 = vmatpush1.msra.mxu0 0.0
    %3127 = vmatprep.subr.mxu0 0.0
    %3128 = vmatpush1.msra.mxu0 0.0
    %3129 = vmatprep.subr.mxu0 0.0
    %3130 = vmatpush1.msra.mxu0 0.0
    %3131 = vmatprep.subr.mxu0 0.0
    %3132 = vmatpush1.msra.mxu0 0.0
    %3133 = vmatprep.mubr.f32.mxu0 0.0
    %3134 = vmatmul.mubr.f32.gmra.mrb[0].mxu0 %v2821
    %v3135 = vpop.f32.mrb[0].mxu0
    %v3136 = vadd.f32 0.0, %v3135
    %v3137 = vpop.f32.mrb[0].mxu0
    %3138 = vmatprep.mubr.f32.mxu0 0.0
    %3139 = vmatmul.mubr.f32.gmra.mrb[0].mxu0 %v2824
    %v3140 = vpop.f32.mrb[0].mxu0
    %v3141 = vadd.f32 0.0, %v3140
    %v3142 = vpop.f32.mrb[0].mxu0
    %3143 = vmatprep.mubr.f32.mxu0 0.0
    %3144 = vmatmul.mubr.f32.gmra.mrb[0].mxu0 %v2827
    %v3145 = vpop.f32.mrb[0].mxu0
    %v3146 = vadd.f32 0.0, %v3145
    %v3147 = vpop.f32.mrb[0].mxu0
    %3148 = vdwg.mxu0
    %v3149 = vld [vmem:[#allocation21] sm:$0x1]
    %v3150 = vld [vmem:[#allocation21 + $0x1] sm:$0x1]
    %v3151 = vld [vmem:[#allocation21 + $0x2] sm:$0x1]
    %v3152 = vld [vmem:[#allocation21 + $0x3] sm:$0x1]
    %v3154 = vlaneseq
    %v3155 = vshrl.u32 %v3154, 7
    %v3156 = vsub.s32 0, %v3155
    %v3157 = vrot.slane %v3149, %v3156
    %v3159 = vmul.f32 %v2896, %v3157
    %v3160 = vmul.f32 %v2901, %v3157
    %v3161 = vmul.f32 %v2906, %v3157
    %v3162 = vsel %vm2626, %v3159, 0.0
    %3163 = vadd.xlane.f32.xlu0 %v3162
    %v3164 = vpop.xlane.xlu0 %3163
    %v3165 = vsel %vm2626, %v3160, 0.0
    %3166 = vadd.xlane.f32.xlu0 %v3165
    %v3167 = vpop.xlane.xlu0 %3166
    %v3168 = vsel %vm2626, %v3161, 0.0
    %3169 = vadd.xlane.f32.xlu0 %v3168
    %v3170 = vpop.xlane.xlu0 %3169
    %v3172 = vlaneseq
    %v3173 = vshrl.u32 %v3172, 7
    %v3174 = vsub.s32 0, %v3173
    %v3175 = vrot.slane %v3150, %v3174
    %v3177 = vmul.f32 %v2976, %v3175
    %v3178 = vmul.f32 %v2981, %v3175
    %v3179 = vmul.f32 %v2986, %v3175
    %v3180 = vsel %vm2626, %v3177, 0.0
    %3181 = vadd.xlane.f32.xlu0 %v3180
    %v3182 = vpop.xlane.xlu0 %3181
    %v3183 = vsel %vm2626, %v3178, 0.0
    %3184 = vadd.xlane.f32.xlu0 %v3183
    %v3185 = vpop.xlane.xlu0 %3184
    %v3186 = vsel %vm2626, %v3179, 0.0
    %3187 = vadd.xlane.f32.xlu0 %v3186
    %v3188 = vpop.xlane.xlu0 %3187
    %v3190 = vlaneseq
    %v3191 = vshrl.u32 %v3190, 7
    %v3192 = vsub.s32 0, %v3191
    %v3193 = vrot.slane %v3151, %v3192
    %v3195 = vmul.f32 %v3056, %v3193
    %v3196 = vmul.f32 %v3061, %v3193
    %v3197 = vmul.f32 %v3066, %v3193
    %v3198 = vsel %vm2626, %v3195, 0.0
    %3199 = vadd.xlane.f32.xlu0 %v3198
    %v3200 = vpop.xlane.xlu0 %3199
    %v3201 = vsel %vm2626, %v3196, 0.0
    %3202 = vadd.xlane.f32.xlu0 %v3201
    %v3203 = vpop.xlane.xlu0 %3202
    %v3204 = vsel %vm2626, %v3197, 0.0
    %3205 = vadd.xlane.f32.xlu0 %v3204
    %v3206 = vpop.xlane.xlu0 %3205
    %v3208 = vlaneseq
    %v3209 = vshrl.u32 %v3208, 7
    %v3210 = vsub.s32 0, %v3209
    %v3211 = vrot.slane %v3152, %v3210
    %v3213 = vmul.f32 %v3136, %v3211
    %v3214 = vmul.f32 %v3141, %v3211
    %v3215 = vmul.f32 %v3146, %v3211
    %v3216 = vsel %vm2626, %v3213, 0.0
    %3217 = vadd.xlane.f32.xlu0 %v3216
    %v3218 = vpop.xlane.xlu0 %3217
    %v3219 = vsel %vm2626, %v3214, 0.0
    %3220 = vadd.xlane.f32.xlu0 %v3219
    %v3221 = vpop.xlane.xlu0 %3220
    %v3222 = vsel %vm2626, %v3215, 0.0
    %3223 = vadd.xlane.f32.xlu0 %v3222
    %v3224 = vpop.xlane.xlu0 %3223
    %v3225 = vld [vmem:[#allocation22] sm:$0x1]
    %v3226 = vld [vmem:[#allocation22 + $0x1] sm:$0x1]
    %v3227 = vld [vmem:[#allocation22 + $0x2] sm:$0x1]
    %v3228 = vld [vmem:[#allocation22 + $0x3] sm:$0x1]
    %v3230 = vsel %vm2626, %v3225, 0
    %v3233 = vsel %vm2626, %v2896, 0
    %v3236 = vsel %vm2626, %v2901, 0
    %v3239 = vsel %vm2626, %v2906, 0
    %3241 = vmatprep.subr.mxu0 0.0
    %3242 = vmatpush1.xpose.msra.mxu0 %v3233
    %3243 = vmatprep.subr.mxu0 0.0
    %3244 = vmatpush1.xpose.msra.mxu0 %v3236
    %3245 = vmatprep.subr.mxu0 0.0
    %3246 = vmatpush1.xpose.msra.mxu0 %v3239
    %3247 = vmatprep.subr.mxu0 0.0
    %3248 = vmatpush1.xpose.msra.mxu0 0.0
    %3249 = vmatprep.subr.mxu0 0.0
    %3250 = vmatpush1.xpose.msra.mxu0 0.0
    %3251 = vmatprep.subr.mxu0 0.0
    %3252 = vmatpush1.xpose.msra.mxu0 0.0
    %3253 = vmatprep.subr.mxu0 0.0
    %3254 = vmatpush1.xpose.msra.mxu0 0.0
    %3255 = vmatprep.subr.mxu0 0.0
    %3256 = vmatpush1.xpose.msra.mxu0 0.0
    %3257 = vmatprep.subr.mxu0 0.0
    %3258 = vmatpush1.xpose.msra.mxu0 0.0
    %3259 = vmatprep.subr.mxu0 0.0
    %3260 = vmatpush1.xpose.msra.mxu0 0.0
    %3261 = vmatprep.subr.mxu0 0.0
    %3262 = vmatpush1.xpose.msra.mxu0 0.0
    %3263 = vmatprep.subr.mxu0 0.0
    %3264 = vmatpush1.xpose.msra.mxu0 0.0
    %3265 = vmatprep.subr.mxu0 0.0
    %3266 = vmatpush1.xpose.msra.mxu0 0.0
    %3267 = vmatprep.subr.mxu0 0.0
    %3268 = vmatpush1.xpose.msra.mxu0 0.0
    %3269 = vmatprep.subr.mxu0 0.0
    %3270 = vmatpush1.xpose.msra.mxu0 0.0
    %3271 = vmatprep.subr.mxu0 0.0
    %3272 = vmatpush1.xpose.msra.mxu0 0.0
    %3273 = vmatprep.subr.mxu0 0.0
    %3274 = vmatpush1.xpose.msra.mxu0 0.0
    %3275 = vmatprep.subr.mxu0 0.0
    %3276 = vmatpush1.xpose.msra.mxu0 0.0
    %3277 = vmatprep.subr.mxu0 0.0
    %3278 = vmatpush1.xpose.msra.mxu0 0.0
    %3279 = vmatprep.subr.mxu0 0.0
    %3280 = vmatpush1.xpose.msra.mxu0 0.0
    %3281 = vmatprep.subr.mxu0 0.0
    %3282 = vmatpush1.xpose.msra.mxu0 0.0
    %3283 = vmatprep.subr.mxu0 0.0
    %3284 = vmatpush1.xpose.msra.mxu0 0.0
    %3285 = vmatprep.subr.mxu0 0.0
    %3286 = vmatpush1.xpose.msra.mxu0 0.0
    %3287 = vmatprep.subr.mxu0 0.0
    %3288 = vmatpush1.xpose.msra.mxu0 0.0
    %3289 = vmatprep.subr.mxu0 0.0
    %3290 = vmatpush1.xpose.msra.mxu0 0.0
    %3291 = vmatprep.subr.mxu0 0.0
    %3292 = vmatpush1.xpose.msra.mxu0 0.0
    %3293 = vmatprep.subr.mxu0 0.0
    %3294 = vmatpush1.xpose.msra.mxu0 0.0
    %3295 = vmatprep.subr.mxu0 0.0
    %3296 = vmatpush1.xpose.msra.mxu0 0.0
    %3297 = vmatprep.subr.mxu0 0.0
    %3298 = vmatpush1.xpose.msra.mxu0 0.0
    %3299 = vmatprep.subr.mxu0 0.0
    %3300 = vmatpush1.xpose.msra.mxu0 0.0
    %3301 = vmatprep.subr.mxu0 0.0
    %3302 = vmatpush1.xpose.msra.mxu0 0.0
    %3303 = vmatprep.subr.mxu0 0.0
    %3304 = vmatpush1.xpose.msra.mxu0 0.0
    %3305 = vmatprep.mubr.f32.mxu0 0.0
    %3306 = vmatmul.mubr.f32.gmra.mrb[0].mxu0 %v3230
    %v3307 = vpop.f32.mrb[0].mxu0
    %v3308 = vadd.f32 0.0, %v3307
    %v3309 = vpop.f32.mrb[0].mxu0
    %3310 = vdwg.mxu0
    %v3312 = vsel %vm2626, %v3226, 0
    %v3315 = vsel %vm2626, %v2976, 0
    %v3318 = vsel %vm2626, %v2981, 0
    %v3321 = vsel %vm2626, %v2986, 0
    %3323 = vmatprep.subr.mxu0 0.0
    %3324 = vmatpush1.xpose.msra.mxu0 %v3315
    %3325 = vmatprep.subr.mxu0 0.0
    %3326 = vmatpush1.xpose.msra.mxu0 %v3318
    %3327 = vmatprep.subr.mxu0 0.0
    %3328 = vmatpush1.xpose.msra.mxu0 %v3321
    %3329 = vmatprep.subr.mxu0 0.0
    %3330 = vmatpush1.xpose.msra.mxu0 0.0
    %3331 = vmatprep.subr.mxu0 0.0
    %3332 = vmatpush1.xpose.msra.mxu0 0.0
    %3333 = vmatprep.subr.mxu0 0.0
    %3334 = vmatpush1.xpose.msra.mxu0 0.0
    %3335 = vmatprep.subr.mxu0 0.0
    %3336 = vmatpush1.xpose.msra.mxu0 0.0
    %3337 = vmatprep.subr.mxu0 0.0
    %3338 = vmatpush1.xpose.msra.mxu0 0.0
    %3339 = vmatprep.subr.mxu0 0.0
    %3340 = vmatpush1.xpose.msra.mxu0 0.0
    %3341 = vmatprep.subr.mxu0 0.0
    %3342 = vmatpush1.xpose.msra.mxu0 0.0
    %3343 = vmatprep.subr.mxu0 0.0
    %3344 = vmatpush1.xpose.msra.mxu0 0.0
    %3345 = vmatprep.subr.mxu0 0.0
    %3346 = vmatpush1.xpose.msra.mxu0 0.0
    %3347 = vmatprep.subr.mxu0 0.0
    %3348 = vmatpush1.xpose.msra.mxu0 0.0
    %3349 = vmatprep.subr.mxu0 0.0
    %3350 = vmatpush1.xpose.msra.mxu0 0.0
    %3351 = vmatprep.subr.mxu0 0.0
    %3352 = vmatpush1.xpose.msra.mxu0 0.0
    %3353 = vmatprep.subr.mxu0 0.0
    %3354 = vmatpush1.xpose.msra.mxu0 0.0
    %3355 = vmatprep.subr.mxu0 0.0
    %3356 = vmatpush1.xpose.msra.mxu0 0.0
    %3357 = vmatprep.subr.mxu0 0.0
    %3358 = vmatpush1.xpose.msra.mxu0 0.0
    %3359 = vmatprep.subr.mxu0 0.0
    %3360 = vmatpush1.xpose.msra.mxu0 0.0
    %3361 = vmatprep.subr.mxu0 0.0
    %3362 = vmatpush1.xpose.msra.mxu0 0.0
    %3363 = vmatprep.subr.mxu0 0.0
    %3364 = vmatpush1.xpose.msra.mxu0 0.0
    %3365 = vmatprep.subr.mxu0 0.0
    %3366 = vmatpush1.xpose.msra.mxu0 0.0
    %3367 = vmatprep.subr.mxu0 0.0
    %3368 = vmatpush1.xpose.msra.mxu0 0.0
    %3369 = vmatprep.subr.mxu0 0.0
    %3370 = vmatpush1.xpose.msra.mxu0 0.0
    %3371 = vmatprep.subr.mxu0 0.0
    %3372 = vmatpush1.xpose.msra.mxu0 0.0
    %3373 = vmatprep.subr.mxu0 0.0
    %3374 = vmatpush1.xpose.msra.mxu0 0.0
    %3375 = vmatprep.subr.mxu0 0.0
    %3376 = vmatpush1.xpose.msra.mxu0 0.0
    %3377 = vmatprep.subr.mxu0 0.0
    %3378 = vmatpush1.xpose.msra.mxu0 0.0
    %3379 = vmatprep.subr.mxu0 0.0
    %3380 = vmatpush1.xpose.msra.mxu0 0.0
    %3381 = vmatprep.subr.mxu0 0.0
    %3382 = vmatpush1.xpose.msra.mxu0 0.0
    %3383 = vmatprep.subr.mxu0 0.0
    %3384 = vmatpush1.xpose.msra.mxu0 0.0
    %3385 = vmatprep.subr.mxu0 0.0
    %3386 = vmatpush1.xpose.msra.mxu0 0.0
    %3387 = vmatprep.mubr.f32.mxu0 0.0
    %3388 = vmatmul.mubr.f32.gmra.mrb[0].mxu0 %v3312
    %v3389 = vpop.f32.mrb[0].mxu0
    %v3390 = vadd.f32 0.0, %v3389
    %v3391 = vpop.f32.mrb[0].mxu0
    %3392 = vdwg.mxu0
    %v3394 = vsel %vm2626, %v3227, 0
    %v3397 = vsel %vm2626, %v3056, 0
    %v3400 = vsel %vm2626, %v3061, 0
    %v3403 = vsel %vm2626, %v3066, 0
    %3405 = vmatprep.subr.mxu0 0.0
    %3406 = vmatpush1.xpose.msra.mxu0 %v3397
    %3407 = vmatprep.subr.mxu0 0.0
    %3408 = vmatpush1.xpose.msra.mxu0 %v3400
    %3409 = vmatprep.subr.mxu0 0.0
    %3410 = vmatpush1.xpose.msra.mxu0 %v3403
    %3411 = vmatprep.subr.mxu0 0.0
    %3412 = vmatpush1.xpose.msra.mxu0 0.0
    %3413 = vmatprep.subr.mxu0 0.0
    %3414 = vmatpush1.xpose.msra.mxu0 0.0
    %3415 = vmatprep.subr.mxu0 0.0
    %3416 = vmatpush1.xpose.msra.mxu0 0.0
    %3417 = vmatprep.subr.mxu0 0.0
    %3418 = vmatpush1.xpose.msra.mxu0 0.0
    %3419 = vmatprep.subr.mxu0 0.0
    %3420 = vmatpush1.xpose.msra.mxu0 0.0
    %3421 = vmatprep.subr.mxu0 0.0
    %3422 = vmatpush1.xpose.msra.mxu0 0.0
    %3423 = vmatprep.subr.mxu0 0.0
    %3424 = vmatpush1.xpose.msra.mxu0 0.0
    %3425 = vmatprep.subr.mxu0 0.0
    %3426 = vmatpush1.xpose.msra.mxu0 0.0
    %3427 = vmatprep.subr.mxu0 0.0
    %3428 = vmatpush1.xpose.msra.mxu0 0.0
    %3429 = vmatprep.subr.mxu0 0.0
    %3430 = vmatpush1.xpose.msra.mxu0 0.0
    %3431 = vmatprep.subr.mxu0 0.0
    %3432 = vmatpush1.xpose.msra.mxu0 0.0
    %3433 = vmatprep.subr.mxu0 0.0
    %3434 = vmatpush1.xpose.msra.mxu0 0.0
    %3435 = vmatprep.subr.mxu0 0.0
    %3436 = vmatpush1.xpose.msra.mxu0 0.0
    %3437 = vmatprep.subr.mxu0 0.0
    %3438 = vmatpush1.xpose.msra.mxu0 0.0
    %3439 = vmatprep.subr.mxu0 0.0
    %3440 = vmatpush1.xpose.msra.mxu0 0.0
    %3441 = vmatprep.subr.mxu0 0.0
    %3442 = vmatpush1.xpose.msra.mxu0 0.0
    %3443 = vmatprep.subr.mxu0 0.0
    %3444 = vmatpush1.xpose.msra.mxu0 0.0
    %3445 = vmatprep.subr.mxu0 0.0
    %3446 = vmatpush1.xpose.msra.mxu0 0.0
    %3447 = vmatprep.subr.mxu0 0.0
    %3448 = vmatpush1.xpose.msra.mxu0 0.0
    %3449 = vmatprep.subr.mxu0 0.0
    %3450 = vmatpush1.xpose.msra.mxu0 0.0
    %3451 = vmatprep.subr.mxu0 0.0
    %3452 = vmatpush1.xpose.msra.mxu0 0.0
    %3453 = vmatprep.subr.mxu0 0.0
    %3454 = vmatpush1.xpose.msra.mxu0 0.0
    %3455 = vmatprep.subr.mxu0 0.0
    %3456 = vmatpush1.xpose.msra.mxu0 0.0
    %3457 = vmatprep.subr.mxu0 0.0
    %3458 = vmatpush1.xpose.msra.mxu0 0.0
    %3459 = vmatprep.subr.mxu0 0.0
    %3460 = vmatpush1.xpose.msra.mxu0 0.0
    %3461 = vmatprep.subr.mxu0 0.0
    %3462 = vmatpush1.xpose.msra.mxu0 0.0
    %3463 = vmatprep.subr.mxu0 0.0
    %3464 = vmatpush1.xpose.msra.mxu0 0.0
    %3465 = vmatprep.subr.mxu0 0.0
    %3466 = vmatpush1.xpose.msra.mxu0 0.0
    %3467 = vmatprep.subr.mxu0 0.0
    %3468 = vmatpush1.xpose.msra.mxu0 0.0
    %3469 = vmatprep.mubr.f32.mxu0 0.0
    %3470 = vmatmul.mubr.f32.gmra.mrb[0].mxu0 %v3394
    %v3471 = vpop.f32.mrb[0].mxu0
    %v3472 = vadd.f32 0.0, %v3471
    %v3473 = vpop.f32.mrb[0].mxu0
    %3474 = vdwg.mxu0
    %v3476 = vsel %vm2626, %v3228, 0
    %v3479 = vsel %vm2626, %v3136, 0
    %v3482 = vsel %vm2626, %v3141, 0
    %v3485 = vsel %vm2626, %v3146, 0
    %3487 = vmatprep.subr.mxu0 0.0
    %3488 = vmatpush1.xpose.msra.mxu0 %v3479
    %3489 = vmatprep.subr.mxu0 0.0
    %3490 = vmatpush1.xpose.msra.mxu0 %v3482
    %3491 = vmatprep.subr.mxu0 0.0
    %3492 = vmatpush1.xpose.msra.mxu0 %v3485
    %3493 = vmatprep.subr.mxu0 0.0
    %3494 = vmatpush1.xpose.msra.mxu0 0.0
    %3495 = vmatprep.subr.mxu0 0.0
    %3496 = vmatpush1.xpose.msra.mxu0 0.0
    %3497 = vmatprep.subr.mxu0 0.0
    %3498 = vmatpush1.xpose.msra.mxu0 0.0
    %3499 = vmatprep.subr.mxu0 0.0
    %3500 = vmatpush1.xpose.msra.mxu0 0.0
    %3501 = vmatprep.subr.mxu0 0.0
    %3502 = vmatpush1.xpose.msra.mxu0 0.0
    %3503 = vmatprep.subr.mxu0 0.0
    %3504 = vmatpush1.xpose.msra.mxu0 0.0
    %3505 = vmatprep.subr.mxu0 0.0
    %3506 = vmatpush1.xpose.msra.mxu0 0.0
    %3507 = vmatprep.subr.mxu0 0.0
    %3508 = vmatpush1.xpose.msra.mxu0 0.0
    %3509 = vmatprep.subr.mxu0 0.0
    %3510 = vmatpush1.xpose.msra.mxu0 0.0
    %3511 = vmatprep.subr.mxu0 0.0
    %3512 = vmatpush1.xpose.msra.mxu0 0.0
    %3513 = vmatprep.subr.mxu0 0.0
    %3514 = vmatpush1.xpose.msra.mxu0 0.0
    %3515 = vmatprep.subr.mxu0 0.0
    %3516 = vmatpush1.xpose.msra.mxu0 0.0
    %3517 = vmatprep.subr.mxu0 0.0
    %3518 = vmatpush1.xpose.msra.mxu0 0.0
    %3519 = vmatprep.subr.mxu0 0.0
    %3520 = vmatpush1.xpose.msra.mxu0 0.0
    %3521 = vmatprep.subr.mxu0 0.0
    %3522 = vmatpush1.xpose.msra.mxu0 0.0
    %3523 = vmatprep.subr.mxu0 0.0
    %3524 = vmatpush1.xpose.msra.mxu0 0.0
    %3525 = vmatprep.subr.mxu0 0.0
    %3526 = vmatpush1.xpose.msra.mxu0 0.0
    %3527 = vmatprep.subr.mxu0 0.0
    %3528 = vmatpush1.xpose.msra.mxu0 0.0
    %3529 = vmatprep.subr.mxu0 0.0
    %3530 = vmatpush1.xpose.msra.mxu0 0.0
    %3531 = vmatprep.subr.mxu0 0.0
    %3532 = vmatpush1.xpose.msra.mxu0 0.0
    %3533 = vmatprep.subr.mxu0 0.0
    %3534 = vmatpush1.xpose.msra.mxu0 0.0
    %3535 = vmatprep.subr.mxu0 0.0
    %3536 = vmatpush1.xpose.msra.mxu0 0.0
    %3537 = vmatprep.subr.mxu0 0.0
    %3538 = vmatpush1.xpose.msra.mxu0 0.0
    %3539 = vmatprep.subr.mxu0 0.0
    %3540 = vmatpush1.xpose.msra.mxu0 0.0
    %3541 = vmatprep.subr.mxu0 0.0
    %3542 = vmatpush1.xpose.msra.mxu0 0.0
    %3543 = vmatprep.subr.mxu0 0.0
    %3544 = vmatpush1.xpose.msra.mxu0 0.0
    %3545 = vmatprep.subr.mxu0 0.0
    %3546 = vmatpush1.xpose.msra.mxu0 0.0
    %3547 = vmatprep.subr.mxu0 0.0
    %3548 = vmatpush1.xpose.msra.mxu0 0.0
    %3549 = vmatprep.subr.mxu0 0.0
    %3550 = vmatpush1.xpose.msra.mxu0 0.0
    %3551 = vmatprep.mubr.f32.mxu0 0.0
    %3552 = vmatmul.mubr.f32.gmra.mrb[0].mxu0 %v3476
    %v3553 = vpop.f32.mrb[0].mxu0
    %v3554 = vadd.f32 0.0, %v3553
    %v3555 = vpop.f32.mrb[0].mxu0
    %3556 = vdwg.mxu0
    %3558 = vset.pattern.permute.xlu0 0
    %3559 = vperm.xlu0 %3558, %v3164
    %v3560 = vpop.permute.xlu0 %3559
    %3563 = vset.pattern.permute.xlu0 0
    %3564 = vperm.xlu0 %3563, %v3167
    %v3565 = vpop.permute.xlu0 %3564
    %3568 = vset.pattern.permute.xlu0 0
    %3569 = vperm.xlu0 %3568, %v3170
    %v3570 = vpop.permute.xlu0 %3569
    %3573 = vset.pattern.permute.xlu0 0
    %3574 = vperm.xlu0 %3573, %v3182
    %v3575 = vpop.permute.xlu0 %3574
    %3578 = vset.pattern.permute.xlu0 0
    %3579 = vperm.xlu0 %3578, %v3185
    %v3580 = vpop.permute.xlu0 %3579
    %3583 = vset.pattern.permute.xlu0 0
    %3584 = vperm.xlu0 %3583, %v3188
    %v3585 = vpop.permute.xlu0 %3584
    %3588 = vset.pattern.permute.xlu0 0
    %3589 = vperm.xlu0 %3588, %v3200
    %v3590 = vpop.permute.xlu0 %3589
    %3593 = vset.pattern.permute.xlu0 0
    %3594 = vperm.xlu0 %3593, %v3203
    %v3595 = vpop.permute.xlu0 %3594
    %3598 = vset.pattern.permute.xlu0 0
    %3599 = vperm.xlu0 %3598, %v3206
    %v3600 = vpop.permute.xlu0 %3599
    %3603 = vset.pattern.permute.xlu0 0
    %3604 = vperm.xlu0 %3603, %v3218
    %v3605 = vpop.permute.xlu0 %3604
    %3608 = vset.pattern.permute.xlu0 0
    %3609 = vperm.xlu0 %3608, %v3221
    %v3610 = vpop.permute.xlu0 %3609
    %3613 = vset.pattern.permute.xlu0 0
    %3614 = vperm.xlu0 %3613, %v3224
    %v3615 = vpop.permute.xlu0 %3614
    %v3617 = vlaneseq
    %v3618 = vshrl.u32 %v3617, 7
    %v3619 = vsub.s32 0, %v3618
    %v3620 = vrot.slane %v3308, %v3619
    %v3621 = vlaneseq
    %v3622 = vshrl.u32 %v3621, 7
    %v3623 = vsub.s32 0, %v3622
    %v3624 = vrot.slane %v3390, %v3623
    %v3625 = vlaneseq
    %v3626 = vshrl.u32 %v3625, 7
    %v3627 = vsub.s32 0, %v3626
    %v3628 = vrot.slane %v3472, %v3627
    %v3629 = vlaneseq
    %v3630 = vshrl.u32 %v3629, 7
    %v3631 = vsub.s32 0, %v3630
    %v3632 = vrot.slane %v3554, %v3631
    %v3633 = vadd.f32 %v3560, %v3620
    %v3634 = vadd.f32 %v3565, %v3620
    %v3635 = vadd.f32 %v3570, %v3620
    %v3636 = vadd.f32 %v3575, %v3624
    %v3637 = vadd.f32 %v3580, %v3624
    %v3638 = vadd.f32 %v3585, %v3624
    %v3639 = vadd.f32 %v3590, %v3628
    %v3640 = vadd.f32 %v3595, %v3628
    %v3641 = vadd.f32 %v3600, %v3628
    %v3642 = vadd.f32 %v3605, %v3632
    %v3643 = vadd.f32 %v3610, %v3632
    %v3644 = vadd.f32 %v3615, %v3632
    %v3645 = vld [vmem:[%s51] sm:$0x1]
    %v3646 = vld [vmem:[%s51 + $0x1] sm:$0x1]
    %v3647 = vld [vmem:[%s51 + $0x2] sm:$0x1]
    %v3648 = vld [vmem:[%s51 + $0x3] sm:$0x1]
    %v3653 = vlaneseq
    %v3654 = vshrl.u32 %v3653, 7
    %v3655 = vsub.s32 0, %v3654
    %v3656 = vrot.slane %v3645, %v3655
    %v3657 = vlaneseq
    %v3658 = vshrl.u32 %v3657, 7
    %v3659 = vsub.s32 0, %v3658
    %v3660 = vrot.slane %v3646, %v3659
    %v3661 = vlaneseq
    %v3662 = vshrl.u32 %v3661, 7
    %v3663 = vsub.s32 0, %v3662
    %v3664 = vrot.slane %v3647, %v3663
    %v3665 = vlaneseq
    %v3666 = vshrl.u32 %v3665, 7
    %v3667 = vsub.s32 0, %v3666
    %v3668 = vrot.slane %v3648, %v3667
    %3669 = vset.pattern.permute.xlu0 0
    %3670 = vperm.xlu0 %3669, %v3656
    %v3671 = vpop.permute.xlu0 %3670
    %3673 = vset.pattern.permute.xlu0 0
    %3674 = vperm.xlu0 %3673, %v3660
    %v3675 = vpop.permute.xlu0 %3674
    %3677 = vset.pattern.permute.xlu0 0
    %3678 = vperm.xlu0 %3677, %v3664
    %v3679 = vpop.permute.xlu0 %3678
    %3681 = vset.pattern.permute.xlu0 0
    %3682 = vperm.xlu0 %3681, %v3668
    %v3683 = vpop.permute.xlu0 %3682
    %v3685 = vmul.f32 %v3671, %v2619
    %v3686 = vmul.f32 %v3671, %v2620
    %v3687 = vmul.f32 %v3671, %v2621
    %v3688 = vmul.f32 %v3675, %v2619
    %v3689 = vmul.f32 %v3675, %v2620
    %v3690 = vmul.f32 %v3675, %v2621
    %v3691 = vmul.f32 %v3679, %v2619
    %v3692 = vmul.f32 %v3679, %v2620
    %v3693 = vmul.f32 %v3679, %v2621
    %v3694 = vmul.f32 %v3683, %v2619
    %v3695 = vmul.f32 %v3683, %v2620
    %v3696 = vmul.f32 %v3683, %v2621
    %v3697 = vadd.f32 %v3633, %v3685
    %v3698 = vadd.f32 %v3634, %v3686
    %v3699 = vadd.f32 %v3635, %v3687
    %v3700 = vadd.f32 %v3636, %v3688
    %v3701 = vadd.f32 %v3637, %v3689
    %v3702 = vadd.f32 %v3638, %v3690
    %v3703 = vadd.f32 %v3639, %v3691
    %v3704 = vadd.f32 %v3640, %v3692
    %v3705 = vadd.f32 %v3641, %v3693
    %v3706 = vadd.f32 %v3642, %v3694
    %v3707 = vadd.f32 %v3643, %v3695
    %v3708 = vadd.f32 %v3644, %v3696
    %vm3709 = vcmp.gt.f32.partialorder %v3697, 0.0
    %vm3710 = vcmp.gt.f32.partialorder %v3698, 0.0
    %vm3711 = vcmp.gt.f32.partialorder %v3699, 0.0
    %vm3712 = vcmp.gt.f32.partialorder %v3700, 0.0
    %vm3713 = vcmp.gt.f32.partialorder %v3701, 0.0
    %vm3714 = vcmp.gt.f32.partialorder %v3702, 0.0
    %vm3715 = vcmp.gt.f32.partialorder %v3703, 0.0
    %vm3716 = vcmp.gt.f32.partialorder %v3704, 0.0
    %vm3717 = vcmp.gt.f32.partialorder %v3705, 0.0
    %vm3718 = vcmp.gt.f32.partialorder %v3706, 0.0
    %vm3719 = vcmp.gt.f32.partialorder %v3707, 0.0
    %vm3720 = vcmp.gt.f32.partialorder %v3708, 0.0
    %v3721 = vmul.f32 %v3697, 0.2
    %v3722 = vmul.f32 %v3698, 0.2
    %v3723 = vmul.f32 %v3699, 0.2
    %v3724 = vmul.f32 %v3700, 0.2
    %v3725 = vmul.f32 %v3701, 0.2
    %v3726 = vmul.f32 %v3702, 0.2
    %v3727 = vmul.f32 %v3703, 0.2
    %v3728 = vmul.f32 %v3704, 0.2
    %v3729 = vmul.f32 %v3705, 0.2
    %v3730 = vmul.f32 %v3706, 0.2
    %v3731 = vmul.f32 %v3707, 0.2
    %v3732 = vmul.f32 %v3708, 0.2
    %v3733 = vsel %vm3709, %v3697, %v3721
    %v3734 = vsel %vm3710, %v3698, %v3722
    %v3735 = vsel %vm3711, %v3699, %v3723
    %v3736 = vsel %vm3712, %v3700, %v3724
    %v3737 = vsel %vm3713, %v3701, %v3725
    %v3738 = vsel %vm3714, %v3702, %v3726
    %v3739 = vsel %vm3715, %v3703, %v3727
    %v3740 = vsel %vm3716, %v3704, %v3728
    %v3741 = vsel %vm3717, %v3705, %v3729
    %v3742 = vsel %vm3718, %v3706, %v3730
    %v3743 = vsel %vm3719, %v3707, %v3731
    %v3744 = vsel %vm3720, %v3708, %v3732
    %vm3745 = vcmp.gt.f32.partialorder %v2622, 0.0
    %vm3746 = vcmp.gt.f32.partialorder %v2623, 0.0
    %vm3747 = vcmp.gt.f32.partialorder %v2624, 0.0
    %v3748 = vsel %vm3745, 1, 0
    %v3749 = vsel %vm3746, 1, 0
    %v3750 = vsel %vm3747, 1, 0
    %vm3751 = vcmp.eq.s32.totalorder %v3748, 1
    %vm3752 = vcmp.eq.s32.totalorder %v3749, 1
    %vm3753 = vcmp.eq.s32.totalorder %v3750, 1
    %v3754 = vsel %vm3751, %v3733, -1e+30
    %v3755 = vsel %vm3752, %v3734, -1e+30
    %v3756 = vsel %vm3753, %v3735, -1e+30
    %v3757 = vsel %vm3751, %v3736, -1e+30
    %v3758 = vsel %vm3752, %v3737, -1e+30
    %v3759 = vsel %vm3753, %v3738, -1e+30
    %v3760 = vsel %vm3751, %v3739, -1e+30
    %v3761 = vsel %vm3752, %v3740, -1e+30
    %v3762 = vsel %vm3753, %v3741, -1e+30
    %v3763 = vsel %vm3751, %v3742, -1e+30
    %v3764 = vsel %vm3752, %v3743, -1e+30
    %v3765 = vsel %vm3753, %v3744, -1e+30
    %v3766 = vsel %vm2723, %v3754, -inf
    %3767 = vmax.xlane.f32.xlu0 %v3766
    %v3768 = vpop.xlane.xlu0 %3767
    %v3769 = vsel %vm2723, %v3755, -inf
    %3770 = vmax.xlane.f32.xlu0 %v3769
    %v3771 = vpop.xlane.xlu0 %3770
    %v3772 = vsel %vm2723, %v3756, -inf
    %3773 = vmax.xlane.f32.xlu0 %v3772
    %v3774 = vpop.xlane.xlu0 %3773
    %v3775 = vsel %vm2723, %v3757, -inf
    %3776 = vmax.xlane.f32.xlu0 %v3775
    %v3777 = vpop.xlane.xlu0 %3776
    %v3778 = vsel %vm2723, %v3758, -inf
    %3779 = vmax.xlane.f32.xlu0 %v3778
    %v3780 = vpop.xlane.xlu0 %3779
    %v3781 = vsel %vm2723, %v3759, -inf
    %3782 = vmax.xlane.f32.xlu0 %v3781
    %v3783 = vpop.xlane.xlu0 %3782
    %v3784 = vsel %vm2723, %v3760, -inf
    %3785 = vmax.xlane.f32.xlu0 %v3784
    %v3786 = vpop.xlane.xlu0 %3785
    %v3787 = vsel %vm2723, %v3761, -inf
    %3788 = vmax.xlane.f32.xlu0 %v3787
    %v3789 = vpop.xlane.xlu0 %3788
    %v3790 = vsel %vm2723, %v3762, -inf
    %3791 = vmax.xlane.f32.xlu0 %v3790
    %v3792 = vpop.xlane.xlu0 %3791
    %v3793 = vsel %vm2723, %v3763, -inf
    %3794 = vmax.xlane.f32.xlu0 %v3793
    %v3795 = vpop.xlane.xlu0 %3794
    %v3796 = vsel %vm2723, %v3764, -inf
    %3797 = vmax.xlane.f32.xlu0 %v3796
    %v3798 = vpop.xlane.xlu0 %3797
    %v3799 = vsel %vm2723, %v3765, -inf
    %3800 = vmax.xlane.f32.xlu0 %v3799
    %v3801 = vpop.xlane.xlu0 %3800
    %v3802 = vsub.f32 %v3754, %v3768
    %v3803 = vsub.f32 %v3755, %v3771
    %v3804 = vsub.f32 %v3756, %v3774
    %v3805 = vsub.f32 %v3757, %v3777
    %v3806 = vsub.f32 %v3758, %v3780
    %v3807 = vsub.f32 %v3759, %v3783
    %v3808 = vsub.f32 %v3760, %v3786
    %v3809 = vsub.f32 %v3761, %v3789
    %v3810 = vsub.f32 %v3762, %v3792
    %v3811 = vsub.f32 %v3763, %v3795
    %v3812 = vsub.f32 %v3764, %v3798
    %v3813 = vsub.f32 %v3765, %v3801
    %v3814 = vmul.f32 %v3802, 1.442695
    %v3815 = vpow.pop %v3814
    %v3816 = vmul.f32 %v3803, 1.442695
    %v3817 = vpow.pop %v3816
    %v3818 = vmul.f32 %v3804, 1.442695
    %v3819 = vpow.pop %v3818
    %v3820 = vmul.f32 %v3805, 1.442695
    %v3821 = vpow.pop %v3820
    %v3822 = vmul.f32 %v3806, 1.442695
    %v3823 = vpow.pop %v3822
    %v3824 = vmul.f32 %v3807, 1.442695
    %v3825 = vpow.pop %v3824
    %v3826 = vmul.f32 %v3808, 1.442695
    %v3827 = vpow.pop %v3826
    %v3828 = vmul.f32 %v3809, 1.442695
    %v3829 = vpow.pop %v3828
    %v3830 = vmul.f32 %v3810, 1.442695
    %v3831 = vpow.pop %v3830
    %v3832 = vmul.f32 %v3811, 1.442695
    %v3833 = vpow.pop %v3832
    %v3834 = vmul.f32 %v3812, 1.442695
    %v3835 = vpow.pop %v3834
    %v3836 = vmul.f32 %v3813, 1.442695
    %v3837 = vpow.pop %v3836
    %v3838 = vsel %vm2723, %v3815, 0.0
    %3839 = vadd.xlane.f32.xlu0 %v3838
    %v3840 = vpop.xlane.xlu0 %3839
    %v3841 = vsel %vm2723, %v3817, 0.0
    %3842 = vadd.xlane.f32.xlu0 %v3841
    %v3843 = vpop.xlane.xlu0 %3842
    %v3844 = vsel %vm2723, %v3819, 0.0
    %3845 = vadd.xlane.f32.xlu0 %v3844
    %v3846 = vpop.xlane.xlu0 %3845
    %v3847 = vsel %vm2723, %v3821, 0.0
    %3848 = vadd.xlane.f32.xlu0 %v3847
    %v3849 = vpop.xlane.xlu0 %3848
    %v3850 = vsel %vm2723, %v3823, 0.0
    %3851 = vadd.xlane.f32.xlu0 %v3850
    %v3852 = vpop.xlane.xlu0 %3851
    %v3853 = vsel %vm2723, %v3825, 0.0
    %3854 = vadd.xlane.f32.xlu0 %v3853
    %v3855 = vpop.xlane.xlu0 %3854
    %v3856 = vsel %vm2723, %v3827, 0.0
    %3857 = vadd.xlane.f32.xlu0 %v3856
    %v3858 = vpop.xlane.xlu0 %3857
    %v3859 = vsel %vm2723, %v3829, 0.0
    %3860 = vadd.xlane.f32.xlu0 %v3859
    %v3861 = vpop.xlane.xlu0 %3860
    %v3862 = vsel %vm2723, %v3831, 0.0
    %3863 = vadd.xlane.f32.xlu0 %v3862
    %v3864 = vpop.xlane.xlu0 %3863
    %v3865 = vsel %vm2723, %v3833, 0.0
    %3866 = vadd.xlane.f32.xlu0 %v3865
    %v3867 = vpop.xlane.xlu0 %3866
    %v3868 = vsel %vm2723, %v3835, 0.0
    %3869 = vadd.xlane.f32.xlu0 %v3868
    %v3870 = vpop.xlane.xlu0 %3869
    %v3871 = vsel %vm2723, %v3837, 0.0
    %3872 = vadd.xlane.f32.xlu0 %v3871
    %v3873 = vpop.xlane.xlu0 %3872
    %v3874 = vmul.f32 %v3840, 4.0
    %v3875 = vmul.f32 %v3843, 4.0
    %v3876 = vmul.f32 %v3846, 4.0
    %v3877 = vmul.f32 %v3849, 4.0
    %v3878 = vmul.f32 %v3852, 4.0
    %v3879 = vmul.f32 %v3855, 4.0
    %v3880 = vmul.f32 %v3858, 4.0
    %v3881 = vmul.f32 %v3861, 4.0
    %v3882 = vmul.f32 %v3864, 4.0
    %v3883 = vmul.f32 %v3867, 4.0
    %v3884 = vmul.f32 %v3870, 4.0
    %v3885 = vmul.f32 %v3873, 4.0
    %v3886 = vrcp.pop %v3874
    %v3887 = vrcp.pop %v3875
    %v3888 = vrcp.pop %v3876
    %v3889 = vrcp.pop %v3877
    %v3890 = vrcp.pop %v3878
    %v3891 = vrcp.pop %v3879
    %v3892 = vrcp.pop %v3880
    %v3893 = vrcp.pop %v3881
    %v3894 = vrcp.pop %v3882
    %v3895 = vrcp.pop %v3883
    %v3896 = vrcp.pop %v3884
    %v3897 = vrcp.pop %v3885
    %v3898 = vmul.f32 %v3815, %v3886
    %v3899 = vmul.f32 %v3817, %v3887
    %v3900 = vmul.f32 %v3819, %v3888
    %v3901 = vmul.f32 %v3821, %v3889
    %v3902 = vmul.f32 %v3823, %v3890
    %v3903 = vmul.f32 %v3825, %v3891
    %v3904 = vmul.f32 %v3827, %v3892
    %v3905 = vmul.f32 %v3829, %v3893
    %v3906 = vmul.f32 %v3831, %v3894
    %v3907 = vmul.f32 %v3833, %v3895
    %v3908 = vmul.f32 %v3835, %v3896
    %v3909 = vmul.f32 %v3837, %v3897
    %v3911 = vsel %vm2723, %v3898, 0
    %v3914 = vsel %vm2723, %v3899, 0
    %v3917 = vsel %vm2723, %v3900, 0
    %3919 = vmatprep.subr.mxu0 0.0
    %3920 = vmatpush1.msra.mxu0 %v2896
    %3921 = vmatprep.subr.mxu0 0.0
    %3922 = vmatpush1.msra.mxu0 %v2901
    %3923 = vmatprep.subr.mxu0 0.0
    %3924 = vmatpush1.msra.mxu0 %v2906
    %3925 = vmatprep.subr.mxu0 0.0
    %3926 = vmatpush1.msra.mxu0 0.0
    %3927 = vmatprep.subr.mxu0 0.0
    %3928 = vmatpush1.msra.mxu0 0.0
    %3929 = vmatprep.subr.mxu0 0.0
    %3930 = vmatpush1.msra.mxu0 0.0
    %3931 = vmatprep.subr.mxu0 0.0
    %3932 = vmatpush1.msra.mxu0 0.0
    %3933 = vmatprep.subr.mxu0 0.0
    %3934 = vmatpush1.msra.mxu0 0.0
    %3935 = vmatprep.subr.mxu0 0.0
    %3936 = vmatpush1.msra.mxu0 0.0
    %3937 = vmatprep.subr.mxu0 0.0
    %3938 = vmatpush1.msra.mxu0 0.0
    %3939 = vmatprep.subr.mxu0 0.0
    %3940 = vmatpush1.msra.mxu0 0.0
    %3941 = vmatprep.subr.mxu0 0.0
    %3942 = vmatpush1.msra.mxu0 0.0
    %3943 = vmatprep.subr.mxu0 0.0
    %3944 = vmatpush1.msra.mxu0 0.0
    %3945 = vmatprep.subr.mxu0 0.0
    %3946 = vmatpush1.msra.mxu0 0.0
    %3947 = vmatprep.subr.mxu0 0.0
    %3948 = vmatpush1.msra.mxu0 0.0
    %3949 = vmatprep.subr.mxu0 0.0
    %3950 = vmatpush1.msra.mxu0 0.0
    %3951 = vmatprep.subr.mxu0 0.0
    %3952 = vmatpush1.msra.mxu0 0.0
    %3953 = vmatprep.subr.mxu0 0.0
    %3954 = vmatpush1.msra.mxu0 0.0
    %3955 = vmatprep.subr.mxu0 0.0
    %3956 = vmatpush1.msra.mxu0 0.0
    %3957 = vmatprep.subr.mxu0 0.0
    %3958 = vmatpush1.msra.mxu0 0.0
    %3959 = vmatprep.subr.mxu0 0.0
    %3960 = vmatpush1.msra.mxu0 0.0
    %3961 = vmatprep.subr.mxu0 0.0
    %3962 = vmatpush1.msra.mxu0 0.0
    %3963 = vmatprep.subr.mxu0 0.0
    %3964 = vmatpush1.msra.mxu0 0.0
    %3965 = vmatprep.subr.mxu0 0.0
    %3966 = vmatpush1.msra.mxu0 0.0
    %3967 = vmatprep.subr.mxu0 0.0
    %3968 = vmatpush1.msra.mxu0 0.0
    %3969 = vmatprep.subr.mxu0 0.0
    %3970 = vmatpush1.msra.mxu0 0.0
    %3971 = vmatprep.subr.mxu0 0.0
    %3972 = vmatpush1.msra.mxu0 0.0
    %3973 = vmatprep.subr.mxu0 0.0
    %3974 = vmatpush1.msra.mxu0 0.0
    %3975 = vmatprep.subr.mxu0 0.0
    %3976 = vmatpush1.msra.mxu0 0.0
    %3977 = vmatprep.subr.mxu0 0.0
    %3978 = vmatpush1.msra.mxu0 0.0
    %3979 = vmatprep.subr.mxu0 0.0
    %3980 = vmatpush1.msra.mxu0 0.0
    %3981 = vmatprep.subr.mxu0 0.0
    %3982 = vmatpush1.msra.mxu0 0.0
    %3983 = vmatprep.mubr.f32.mxu0 0.0
    %3984 = vmatmul.mubr.f32.gmra.mrb[0].mxu0 %v3911
    %v3985 = vpop.f32.mrb[0].mxu0
    %v3986 = vadd.f32 0.0, %v3985
    %v3987 = vpop.f32.mrb[0].mxu0
    %3988 = vmatprep.mubr.f32.mxu0 0.0
    %3989 = vmatmul.mubr.f32.gmra.mrb[0].mxu0 %v3914
    %v3990 = vpop.f32.mrb[0].mxu0
    %v3991 = vadd.f32 0.0, %v3990
    %v3992 = vpop.f32.mrb[0].mxu0
    %3993 = vmatprep.mubr.f32.mxu0 0.0
    %3994 = vmatmul.mubr.f32.gmra.mrb[0].mxu0 %v3917
    %v3995 = vpop.f32.mrb[0].mxu0
    %v3996 = vadd.f32 0.0, %v3995
    %v3997 = vpop.f32.mrb[0].mxu0
    %3998 = vdwg.mxu0
    %v4000 = vsel %vm2723, %v3901, 0
    %v4003 = vsel %vm2723, %v3902, 0
    %v4006 = vsel %vm2723, %v3903, 0
    %4008 = vmatprep.subr.mxu0 0.0
    %4009 = vmatpush1.msra.mxu0 %v2976
    %4010 = vmatprep.subr.mxu0 0.0
    %4011 = vmatpush1.msra.mxu0 %v2981
    %4012 = vmatprep.subr.mxu0 0.0
    %4013 = vmatpush1.msra.mxu0 %v2986
    %4014 = vmatprep.subr.mxu0 0.0
    %4015 = vmatpush1.msra.mxu0 0.0
    %4016 = vmatprep.subr.mxu0 0.0
    %4017 = vmatpush1.msra.mxu0 0.0
    %4018 = vmatprep.subr.mxu0 0.0
    %4019 = vmatpush1.msra.mxu0 0.0
    %4020 = vmatprep.subr.mxu0 0.0
    %4021 = vmatpush1.msra.mxu0 0.0
    %4022 = vmatprep.subr.mxu0 0.0
    %4023 = vmatpush1.msra.mxu0 0.0
    %4024 = vmatprep.subr.mxu0 0.0
    %4025 = vmatpush1.msra.mxu0 0.0
    %4026 = vmatprep.subr.mxu0 0.0
    %4027 = vmatpush1.msra.mxu0 0.0
    %4028 = vmatprep.subr.mxu0 0.0
    %4029 = vmatpush1.msra.mxu0 0.0
    %4030 = vmatprep.subr.mxu0 0.0
    %4031 = vmatpush1.msra.mxu0 0.0
    %4032 = vmatprep.subr.mxu0 0.0
    %4033 = vmatpush1.msra.mxu0 0.0
    %4034 = vmatprep.subr.mxu0 0.0
    %4035 = vmatpush1.msra.mxu0 0.0
    %4036 = vmatprep.subr.mxu0 0.0
    %4037 = vmatpush1.msra.mxu0 0.0
    %4038 = vmatprep.subr.mxu0 0.0
    %4039 = vmatpush1.msra.mxu0 0.0
    %4040 = vmatprep.subr.mxu0 0.0
    %4041 = vmatpush1.msra.mxu0 0.0
    %4042 = vmatprep.subr.mxu0 0.0
    %4043 = vmatpush1.msra.mxu0 0.0
    %4044 = vmatprep.subr.mxu0 0.0
    %4045 = vmatpush1.msra.mxu0 0.0
    %4046 = vmatprep.subr.mxu0 0.0
    %4047 = vmatpush1.msra.mxu0 0.0
    %4048 = vmatprep.subr.mxu0 0.0
    %4049 = vmatpush1.msra.mxu0 0.0
    %4050 = vmatprep.subr.mxu0 0.0
    %4051 = vmatpush1.msra.mxu0 0.0
    %4052 = vmatprep.subr.mxu0 0.0
    %4053 = vmatpush1.msra.mxu0 0.0
    %4054 = vmatprep.subr.mxu0 0.0
    %4055 = vmatpush1.msra.mxu0 0.0
    %4056 = vmatprep.subr.mxu0 0.0
    %4057 = vmatpush1.msra.mxu0 0.0
    %4058 = vmatprep.subr.mxu0 0.0
    %4059 = vmatpush1.msra.mxu0 0.0
    %4060 = vmatprep.subr.mxu0 0.0
    %4061 = vmatpush1.msra.mxu0 0.0
    %4062 = vmatprep.subr.mxu0 0.0
    %4063 = vmatpush1.msra.mxu0 0.0
    %4064 = vmatprep.subr.mxu0 0.0
    %4065 = vmatpush1.msra.mxu0 0.0
    %4066 = vmatprep.subr.mxu0 0.0
    %4067 = vmatpush1.msra.mxu0 0.0
    %4068 = vmatprep.subr.mxu0 0.0
    %4069 = vmatpush1.msra.mxu0 0.0
    %4070 = vmatprep.subr.mxu0 0.0
    %4071 = vmatpush1.msra.mxu0 0.0
    %4072 = vmatprep.mubr.f32.mxu0 0.0
    %4073 = vmatmul.mubr.f32.gmra.mrb[0].mxu0 %v4000
    %v4074 = vpop.f32.mrb[0].mxu0
    %v4075 = vadd.f32 0.0, %v4074
    %v4076 = vpop.f32.mrb[0].mxu0
    %4077 = vmatprep.mubr.f32.mxu0 0.0
    %4078 = vmatmul.mubr.f32.gmra.mrb[0].mxu0 %v4003
    %v4079 = vpop.f32.mrb[0].mxu0
    %v4080 = vadd.f32 0.0, %v4079
    %v4081 = vpop.f32.mrb[0].mxu0
    %4082 = vmatprep.mubr.f32.mxu0 0.0
    %4083 = vmatmul.mubr.f32.gmra.mrb[0].mxu0 %v4006
    %v4084 = vpop.f32.mrb[0].mxu0
    %v4085 = vadd.f32 0.0, %v4084
    %v4086 = vpop.f32.mrb[0].mxu0
    %4087 = vdwg.mxu0
    %v4089 = vsel %vm2723, %v3904, 0
    %v4092 = vsel %vm2723, %v3905, 0
    %v4095 = vsel %vm2723, %v3906, 0
    %4097 = vmatprep.subr.mxu0 0.0
    %4098 = vmatpush1.msra.mxu0 %v3056
    %4099 = vmatprep.subr.mxu0 0.0
    %4100 = vmatpush1.msra.mxu0 %v3061
    %4101 = vmatprep.subr.mxu0 0.0
    %4102 = vmatpush1.msra.mxu0 %v3066
    %4103 = vmatprep.subr.mxu0 0.0
    %4104 = vmatpush1.msra.mxu0 0.0
    %4105 = vmatprep.subr.mxu0 0.0
    %4106 = vmatpush1.msra.mxu0 0.0
    %4107 = vmatprep.subr.mxu0 0.0
    %4108 = vmatpush1.msra.mxu0 0.0
    %4109 = vmatprep.subr.mxu0 0.0
    %4110 = vmatpush1.msra.mxu0 0.0
    %4111 = vmatprep.subr.mxu0 0.0
    %4112 = vmatpush1.msra.mxu0 0.0
    %4113 = vmatprep.subr.mxu0 0.0
    %4114 = vmatpush1.msra.mxu0 0.0
    %4115 = vmatprep.subr.mxu0 0.0
    %4116 = vmatpush1.msra.mxu0 0.0
    %4117 = vmatprep.subr.mxu0 0.0
    %4118 = vmatpush1.msra.mxu0 0.0
    %4119 = vmatprep.subr.mxu0 0.0
    %4120 = vmatpush1.msra.mxu0 0.0
    %4121 = vmatprep.subr.mxu0 0.0
    %4122 = vmatpush1.msra.mxu0 0.0
    %4123 = vmatprep.subr.mxu0 0.0
    %4124 = vmatpush1.msra.mxu0 0.0
    %4125 = vmatprep.subr.mxu0 0.0
    %4126 = vmatpush1.msra.mxu0 0.0
    %4127 = vmatprep.subr.mxu0 0.0
    %4128 = vmatpush1.msra.mxu0 0.0
    %4129 = vmatprep.subr.mxu0 0.0
    %4130 = vmatpush1.msra.mxu0 0.0
    %4131 = vmatprep.subr.mxu0 0.0
    %4132 = vmatpush1.msra.mxu0 0.0
    %4133 = vmatprep.subr.mxu0 0.0
    %4134 = vmatpush1.msra.mxu0 0.0
    %4135 = vmatprep.subr.mxu0 0.0
    %4136 = vmatpush1.msra.mxu0 0.0
    %4137 = vmatprep.subr.mxu0 0.0
    %4138 = vmatpush1.msra.mxu0 0.0
    %4139 = vmatprep.subr.mxu0 0.0
    %4140 = vmatpush1.msra.mxu0 0.0
    %4141 = vmatprep.subr.mxu0 0.0
    %4142 = vmatpush1.msra.mxu0 0.0
    %4143 = vmatprep.subr.mxu0 0.0
    %4144 = vmatpush1.msra.mxu0 0.0
    %4145 = vmatprep.subr.mxu0 0.0
    %4146 = vmatpush1.msra.mxu0 0.0
    %4147 = vmatprep.subr.mxu0 0.0
    %4148 = vmatpush1.msra.mxu0 0.0
    %4149 = vmatprep.subr.mxu0 0.0
    %4150 = vmatpush1.msra.mxu0 0.0
    %4151 = vmatprep.subr.mxu0 0.0
    %4152 = vmatpush1.msra.mxu0 0.0
    %4153 = vmatprep.subr.mxu0 0.0
    %4154 = vmatpush1.msra.mxu0 0.0
    %4155 = vmatprep.subr.mxu0 0.0
    %4156 = vmatpush1.msra.mxu0 0.0
    %4157 = vmatprep.subr.mxu0 0.0
    %4158 = vmatpush1.msra.mxu0 0.0
    %4159 = vmatprep.subr.mxu0 0.0
    %4160 = vmatpush1.msra.mxu0 0.0
    %4161 = vmatprep.mubr.f32.mxu0 0.0
    %4162 = vmatmul.mubr.f32.gmra.mrb[0].mxu0 %v4089
    %v4163 = vpop.f32.mrb[0].mxu0
    %v4164 = vadd.f32 0.0, %v4163
    %v4165 = vpop.f32.mrb[0].mxu0
    %4166 = vmatprep.mubr.f32.mxu0 0.0
    %4167 = vmatmul.mubr.f32.gmra.mrb[0].mxu0 %v4092
    %v4168 = vpop.f32.mrb[0].mxu0
    %v4169 = vadd.f32 0.0, %v4168
    %v4170 = vpop.f32.mrb[0].mxu0
    %4171 = vmatprep.mubr.f32.mxu0 0.0
    %4172 = vmatmul.mubr.f32.gmra.mrb[0].mxu0 %v4095
    %v4173 = vpop.f32.mrb[0].mxu0
    %v4174 = vadd.f32 0.0, %v4173
    %v4175 = vpop.f32.mrb[0].mxu0
    %4176 = vdwg.mxu0
    %v4178 = vsel %vm2723, %v3907, 0
    %v4181 = vsel %vm2723, %v3908, 0
    %v4184 = vsel %vm2723, %v3909, 0
    %4186 = vmatprep.subr.mxu0 0.0
    %4187 = vmatpush1.msra.mxu0 %v3136
    %4188 = vmatprep.subr.mxu0 0.0
    %4189 = vmatpush1.msra.mxu0 %v3141
    %4190 = vmatprep.subr.mxu0 0.0
    %4191 = vmatpush1.msra.mxu0 %v3146
    %4192 = vmatprep.subr.mxu0 0.0
    %4193 = vmatpush1.msra.mxu0 0.0
    %4194 = vmatprep.subr.mxu0 0.0
    %4195 = vmatpush1.msra.mxu0 0.0
    %4196 = vmatprep.subr.mxu0 0.0
    %4197 = vmatpush1.msra.mxu0 0.0
    %4198 = vmatprep.subr.mxu0 0.0
    %4199 = vmatpush1.msra.mxu0 0.0
    %4200 = vmatprep.subr.mxu0 0.0
    %4201 = vmatpush1.msra.mxu0 0.0
    %4202 = vmatprep.subr.mxu0 0.0
    %4203 = vmatpush1.msra.mxu0 0.0
    %4204 = vmatprep.subr.mxu0 0.0
    %4205 = vmatpush1.msra.mxu0 0.0
    %4206 = vmatprep.subr.mxu0 0.0
    %4207 = vmatpush1.msra.mxu0 0.0
    %4208 = vmatprep.subr.mxu0 0.0
    %4209 = vmatpush1.msra.mxu0 0.0
    %4210 = vmatprep.subr.mxu0 0.0
    %4211 = vmatpush1.msra.mxu0 0.0
    %4212 = vmatprep.subr.mxu0 0.0
    %4213 = vmatpush1.msra.mxu0 0.0
    %4214 = vmatprep.subr.mxu0 0.0
    %4215 = vmatpush1.msra.mxu0 0.0
    %4216 = vmatprep.subr.mxu0 0.0
    %4217 = vmatpush1.msra.mxu0 0.0
    %4218 = vmatprep.subr.mxu0 0.0
    %4219 = vmatpush1.msra.mxu0 0.0
    %4220 = vmatprep.subr.mxu0 0.0
    %4221 = vmatpush1.msra.mxu0 0.0
    %4222 = vmatprep.subr.mxu0 0.0
    %4223 = vmatpush1.msra.mxu0 0.0
    %4224 = vmatprep.subr.mxu0 0.0
    %4225 = vmatpush1.msra.mxu0 0.0
    %4226 = vmatprep.subr.mxu0 0.0
    %4227 = vmatpush1.msra.mxu0 0.0
    %4228 = vmatprep.subr.mxu0 0.0
    %4229 = vmatpush1.msra.mxu0 0.0
    %4230 = vmatprep.subr.mxu0 0.0
    %4231 = vmatpush1.msra.mxu0 0.0
    %4232 = vmatprep.subr.mxu0 0.0
    %4233 = vmatpush1.msra.mxu0 0.0
    %4234 = vmatprep.subr.mxu0 0.0
    %4235 = vmatpush1.msra.mxu0 0.0
    %4236 = vmatprep.subr.mxu0 0.0
    %4237 = vmatpush1.msra.mxu0 0.0
    %4238 = vmatprep.subr.mxu0 0.0
    %4239 = vmatpush1.msra.mxu0 0.0
    %4240 = vmatprep.subr.mxu0 0.0
    %4241 = vmatpush1.msra.mxu0 0.0
    %4242 = vmatprep.subr.mxu0 0.0
    %4243 = vmatpush1.msra.mxu0 0.0
    %4244 = vmatprep.subr.mxu0 0.0
    %4245 = vmatpush1.msra.mxu0 0.0
    %4246 = vmatprep.subr.mxu0 0.0
    %4247 = vmatpush1.msra.mxu0 0.0
    %4248 = vmatprep.subr.mxu0 0.0
    %4249 = vmatpush1.msra.mxu0 0.0
    %4250 = vmatprep.mubr.f32.mxu0 0.0
    %4251 = vmatmul.mubr.f32.gmra.mrb[0].mxu0 %v4178
    %v4252 = vpop.f32.mrb[0].mxu0
    %v4253 = vadd.f32 0.0, %v4252
    %v4254 = vpop.f32.mrb[0].mxu0
    %4255 = vmatprep.mubr.f32.mxu0 0.0
    %4256 = vmatmul.mubr.f32.gmra.mrb[0].mxu0 %v4181
    %v4257 = vpop.f32.mrb[0].mxu0
    %v4258 = vadd.f32 0.0, %v4257
    %v4259 = vpop.f32.mrb[0].mxu0
    %4260 = vmatprep.mubr.f32.mxu0 0.0
    %4261 = vmatmul.mubr.f32.gmra.mrb[0].mxu0 %v4184
    %v4262 = vpop.f32.mrb[0].mxu0
    %v4263 = vadd.f32 0.0, %v4262
    %v4264 = vpop.f32.mrb[0].mxu0
    %4265 = vdwg.mxu0
    %v4266 = vsel %vm2626, %v3986, 0.0
    %v4267 = vsel %vm2626, %v4075, 0.0
    %v4268 = vadd.f32 %v4266, %v4267
    %v4269 = vsel %vm2626, %v4164, 0.0
    %v4270 = vadd.f32 %v4268, %v4269
    %v4271 = vsel %vm2626, %v4253, 0.0
    %v4272 = vadd.f32 %v4270, %v4271
    %v4273 = vsel %vm2626, %v3991, 0.0
    %v4274 = vsel %vm2626, %v4080, 0.0
    %v4275 = vadd.f32 %v4273, %v4274
    %v4276 = vsel %vm2626, %v4169, 0.0
    %v4277 = vadd.f32 %v4275, %v4276
    %v4278 = vsel %vm2626, %v4258, 0.0
    %v4279 = vadd.f32 %v4277, %v4278
    %v4280 = vsel %vm2626, %v3996, 0.0
    %v4281 = vsel %vm2626, %v4085, 0.0
    %v4282 = vadd.f32 %v4280, %v4281
    %v4283 = vsel %vm2626, %v4174, 0.0
    %v4284 = vadd.f32 %v4282, %v4283
    %v4285 = vsel %vm2626, %v4263, 0.0
    %v4286 = vadd.f32 %v4284, %v4285
    %v4287 = vld [vmem:[%s53] sm:$0x1]
    %v4289 = vlaneseq
    %v4290 = vshrl.u32 %v4289, 7
    %v4291 = vsub.s32 0, %v4290
    %v4292 = vrot.slane %v4287, %v4291
    %v4294 = vadd.f32 %v4272, %v4292
    %v4295 = vadd.f32 %v4279, %v4292
    %v4296 = vadd.f32 %v4286, %v4292
    %v4297 = vmax.f32 %v4294, 0.0
    %v4298 = vmax.f32 %v4295, 0.0
    %v4299 = vmax.f32 %v4296, 0.0
    %v4300 = vld [vmem:[%s55] sm:$0xff]
    %v4302 = vsel %vm2626, %v4297, 0
    %v4305 = vsel %vm2626, %v4298, 0
    %v4308 = vsel %vm2626, %v4299, 0
    %4310 = vmatprep.subr.mxu0 0.0
    %4311 = vmatpush1.msra.mxu0 %v4300
    %4312 = vmatprep.subr.mxu0 0.0
    %4313 = vmatpush1.msra.mxu0 0.0
    %4314 = vmatprep.subr.mxu0 0.0
    %4315 = vmatpush1.msra.mxu0 0.0
    %4316 = vmatprep.subr.mxu0 0.0
    %4317 = vmatpush1.msra.mxu0 0.0
    %4318 = vmatprep.subr.mxu0 0.0
    %4319 = vmatpush1.msra.mxu0 0.0
    %4320 = vmatprep.subr.mxu0 0.0
    %4321 = vmatpush1.msra.mxu0 0.0
    %4322 = vmatprep.subr.mxu0 0.0
    %4323 = vmatpush1.msra.mxu0 0.0
    %4324 = vmatprep.subr.mxu0 0.0
    %4325 = vmatpush1.msra.mxu0 0.0
    %4326 = vmatprep.subr.mxu0 0.0
    %4327 = vmatpush1.msra.mxu0 0.0
    %4328 = vmatprep.subr.mxu0 0.0
    %4329 = vmatpush1.msra.mxu0 0.0
    %4330 = vmatprep.subr.mxu0 0.0
    %4331 = vmatpush1.msra.mxu0 0.0
    %4332 = vmatprep.subr.mxu0 0.0
    %4333 = vmatpush1.msra.mxu0 0.0
    %4334 = vmatprep.subr.mxu0 0.0
    %4335 = vmatpush1.msra.mxu0 0.0
    %4336 = vmatprep.subr.mxu0 0.0
    %4337 = vmatpush1.msra.mxu0 0.0
    %4338 = vmatprep.subr.mxu0 0.0
    %4339 = vmatpush1.msra.mxu0 0.0
    %4340 = vmatprep.subr.mxu0 0.0
    %4341 = vmatpush1.msra.mxu0 0.0
    %4342 = vmatprep.subr.mxu0 0.0
    %4343 = vmatpush1.msra.mxu0 0.0
    %4344 = vmatprep.subr.mxu0 0.0
    %4345 = vmatpush1.msra.mxu0 0.0
    %4346 = vmatprep.subr.mxu0 0.0
    %4347 = vmatpush1.msra.mxu0 0.0
    %4348 = vmatprep.subr.mxu0 0.0
    %4349 = vmatpush1.msra.mxu0 0.0
    %4350 = vmatprep.subr.mxu0 0.0
    %4351 = vmatpush1.msra.mxu0 0.0
    %4352 = vmatprep.subr.mxu0 0.0
    %4353 = vmatpush1.msra.mxu0 0.0
    %4354 = vmatprep.subr.mxu0 0.0
    %4355 = vmatpush1.msra.mxu0 0.0
    %4356 = vmatprep.subr.mxu0 0.0
    %4357 = vmatpush1.msra.mxu0 0.0
    %4358 = vmatprep.subr.mxu0 0.0
    %4359 = vmatpush1.msra.mxu0 0.0
    %4360 = vmatprep.subr.mxu0 0.0
    %4361 = vmatpush1.msra.mxu0 0.0
    %4362 = vmatprep.subr.mxu0 0.0
    %4363 = vmatpush1.msra.mxu0 0.0
    %4364 = vmatprep.subr.mxu0 0.0
    %4365 = vmatpush1.msra.mxu0 0.0
    %4366 = vmatprep.subr.mxu0 0.0
    %4367 = vmatpush1.msra.mxu0 0.0
    %4368 = vmatprep.subr.mxu0 0.0
    %4369 = vmatpush1.msra.mxu0 0.0
    %4370 = vmatprep.subr.mxu0 0.0
    %4371 = vmatpush1.msra.mxu0 0.0
    %4372 = vmatprep.subr.mxu0 0.0
    %4373 = vmatpush1.msra.mxu0 0.0
    %4374 = vmatprep.mubr.f32.mxu0 0.0
    %4375 = vmatmul.mubr.f32.gmra.mrb[0].mxu0 %v4302
    %v4376 = vpop.f32.mrb[0].mxu0
    %v4377 = vadd.f32 0.0, %v4376
    %v4378 = vpop.f32.mrb[0].mxu0
    %4379 = vmatprep.mubr.f32.mxu0 0.0
    %4380 = vmatmul.mubr.f32.gmra.mrb[0].mxu0 %v4305
    %v4381 = vpop.f32.mrb[0].mxu0
    %v4382 = vadd.f32 0.0, %v4381
    %v4383 = vpop.f32.mrb[0].mxu0
    %4384 = vmatprep.mubr.f32.mxu0 0.0
    %4385 = vmatmul.mubr.f32.gmra.mrb[0].mxu0 %v4308
    %v4386 = vpop.f32.mrb[0].mxu0
    %v4387 = vadd.f32 0.0, %v4386
    %v4388 = vpop.f32.mrb[0].mxu0
    %4389 = vdwg.mxu0
    %v4390 = vld [vmem:[%s57] sm:$0x1]
    %v4392 = vlaneseq
    %v4393 = vshrl.u32 %v4392, 7
    %v4394 = vsub.s32 0, %v4393
    %v4395 = vrot.slane %v4390, %v4394
    %4397 = vmatprep.subr.mxu0 0.0
    %4398 = vmatpush1.msra.mxu0 %v4377
    %4399 = vmatprep.subr.mxu0 0.0
    %4400 = vmatpush1.msra.mxu0 %v4382
    %4401 = vmatprep.subr.mxu0 0.0
    %4402 = vmatpush1.msra.mxu0 %v4387
    %4403 = vmatprep.subr.mxu0 0.0
    %4404 = vmatpush1.msra.mxu0 0.0
    %4405 = vmatprep.subr.mxu0 0.0
    %4406 = vmatpush1.msra.mxu0 0.0
    %4407 = vmatprep.subr.mxu0 0.0
    %4408 = vmatpush1.msra.mxu0 0.0
    %4409 = vmatprep.subr.mxu0 0.0
    %4410 = vmatpush1.msra.mxu0 0.0
    %4411 = vmatprep.subr.mxu0 0.0
    %4412 = vmatpush1.msra.mxu0 0.0
    %4413 = vmatprep.subr.mxu0 0.0
    %4414 = vmatpush1.msra.mxu0 0.0
    %4415 = vmatprep.subr.mxu0 0.0
    %4416 = vmatpush1.msra.mxu0 0.0
    %4417 = vmatprep.subr.mxu0 0.0
    %4418 = vmatpush1.msra.mxu0 0.0
    %4419 = vmatprep.subr.mxu0 0.0
    %4420 = vmatpush1.msra.mxu0 0.0
    %4421 = vmatprep.subr.mxu0 0.0
    %4422 = vmatpush1.msra.mxu0 0.0
    %4423 = vmatprep.subr.mxu0 0.0
    %4424 = vmatpush1.msra.mxu0 0.0
    %4425 = vmatprep.subr.mxu0 0.0
    %4426 = vmatpush1.msra.mxu0 0.0
    %4427 = vmatprep.subr.mxu0 0.0
    %4428 = vmatpush1.msra.mxu0 0.0
    %4429 = vmatprep.subr.mxu0 0.0
    %4430 = vmatpush1.msra.mxu0 0.0
    %4431 = vmatprep.subr.mxu0 0.0
    %4432 = vmatpush1.msra.mxu0 0.0
    %4433 = vmatprep.subr.mxu0 0.0
    %4434 = vmatpush1.msra.mxu0 0.0
    %4435 = vmatprep.subr.mxu0 0.0
    %4436 = vmatpush1.msra.mxu0 0.0
    %4437 = vmatprep.subr.mxu0 0.0
    %4438 = vmatpush1.msra.mxu0 0.0
    %4439 = vmatprep.subr.mxu0 0.0
    %4440 = vmatpush1.msra.mxu0 0.0
    %4441 = vmatprep.subr.mxu0 0.0
    %4442 = vmatpush1.msra.mxu0 0.0
    %4443 = vmatprep.subr.mxu0 0.0
    %4444 = vmatpush1.msra.mxu0 0.0
    %4445 = vmatprep.subr.mxu0 0.0
    %4446 = vmatpush1.msra.mxu0 0.0
    %4447 = vmatprep.subr.mxu0 0.0
    %4448 = vmatpush1.msra.mxu0 0.0
    %4449 = vmatprep.subr.mxu0 0.0
    %4450 = vmatpush1.msra.mxu0 0.0
    %4451 = vmatprep.subr.mxu0 0.0
    %4452 = vmatpush1.msra.mxu0 0.0
    %4453 = vmatprep.subr.mxu0 0.0
    %4454 = vmatpush1.msra.mxu0 0.0
    %4455 = vmatprep.subr.mxu0 0.0
    %4456 = vmatpush1.msra.mxu0 0.0
    %4457 = vmatprep.subr.mxu0 0.0
    %4458 = vmatpush1.msra.mxu0 0.0
    %4459 = vmatprep.subr.mxu0 0.0
    %4460 = vmatpush1.msra.mxu0 0.0
    %4461 = vmatprep.mubr.f32.mxu0 0.0
    %4462 = vmatmul.mubr.f32.gmra.mrb[0].mxu0 %v2725
    %v4463 = vpop.f32.mrb[0].mxu0
    %v4464 = vadd.f32 %v4395, %v4463
    %v4465 = vpop.f32.mrb[0].mxu0
    %4466 = vmatprep.mubr.f32.mxu0 0.0
    %4467 = vmatmul.mubr.f32.gmra.mrb[0].mxu0 %v2728
    %v4468 = vpop.f32.mrb[0].mxu0
    %v4469 = vadd.f32 %v4395, %v4468
    %v4470 = vpop.f32.mrb[0].mxu0
    %4471 = vmatprep.mubr.f32.mxu0 0.0
    %4472 = vmatmul.mubr.f32.gmra.mrb[0].mxu0 %v2731
    %v4473 = vpop.f32.mrb[0].mxu0
    %v4474 = vadd.f32 %v4395, %v4473
    %v4475 = vpop.f32.mrb[0].mxu0
    %4476 = vdwg.mxu0
    %v4477 = vmax.f32 %v4464, 0.0
    %v4478 = vmax.f32 %v4469, 0.0
    %v4479 = vmax.f32 %v4474, 0.0
    %v4480 = vld [vmem:[%s59] sm:$0xff]
    %v4481 = vld [vmem:[%s61] sm:$0xff]
    %v4483 = vsel %vm2626, %v4477, 0
    %v4486 = vsel %vm2626, %v4478, 0
    %v4489 = vsel %vm2626, %v4479, 0
    %4491 = vmatprep.subr.mxu0 0.0
    %4492 = vmatpush1.msra.mxu0 %v4481
    %4493 = vmatprep.subr.mxu0 0.0
    %4494 = vmatpush1.msra.mxu0 0.0
    %4495 = vmatprep.subr.mxu0 0.0
    %4496 = vmatpush1.msra.mxu0 0.0
    %4497 = vmatprep.subr.mxu0 0.0
    %4498 = vmatpush1.msra.mxu0 0.0
    %4499 = vmatprep.subr.mxu0 0.0
    %4500 = vmatpush1.msra.mxu0 0.0
    %4501 = vmatprep.subr.mxu0 0.0
    %4502 = vmatpush1.msra.mxu0 0.0
    %4503 = vmatprep.subr.mxu0 0.0
    %4504 = vmatpush1.msra.mxu0 0.0
    %4505 = vmatprep.subr.mxu0 0.0
    %4506 = vmatpush1.msra.mxu0 0.0
    %4507 = vmatprep.subr.mxu0 0.0
    %4508 = vmatpush1.msra.mxu0 0.0
    %4509 = vmatprep.subr.mxu0 0.0
    %4510 = vmatpush1.msra.mxu0 0.0
    %4511 = vmatprep.subr.mxu0 0.0
    %4512 = vmatpush1.msra.mxu0 0.0
    %4513 = vmatprep.subr.mxu0 0.0
    %4514 = vmatpush1.msra.mxu0 0.0
    %4515 = vmatprep.subr.mxu0 0.0
    %4516 = vmatpush1.msra.mxu0 0.0
    %4517 = vmatprep.subr.mxu0 0.0
    %4518 = vmatpush1.msra.mxu0 0.0
    %4519 = vmatprep.subr.mxu0 0.0
    %4520 = vmatpush1.msra.mxu0 0.0
    %4521 = vmatprep.subr.mxu0 0.0
    %4522 = vmatpush1.msra.mxu0 0.0
    %4523 = vmatprep.subr.mxu0 0.0
    %4524 = vmatpush1.msra.mxu0 0.0
    %4525 = vmatprep.subr.mxu0 0.0
    %4526 = vmatpush1.msra.mxu0 0.0
    %4527 = vmatprep.subr.mxu0 0.0
    %4528 = vmatpush1.msra.mxu0 0.0
    %4529 = vmatprep.subr.mxu0 0.0
    %4530 = vmatpush1.msra.mxu0 0.0
    %4531 = vmatprep.subr.mxu0 0.0
    %4532 = vmatpush1.msra.mxu0 0.0
    %4533 = vmatprep.subr.mxu0 0.0
    %4534 = vmatpush1.msra.mxu0 0.0
    %4535 = vmatprep.subr.mxu0 0.0
    %4536 = vmatpush1.msra.mxu0 0.0
    %4537 = vmatprep.subr.mxu0 0.0
    %4538 = vmatpush1.msra.mxu0 0.0
    %4539 = vmatprep.subr.mxu0 0.0
    %4540 = vmatpush1.msra.mxu0 0.0
    %4541 = vmatprep.subr.mxu0 0.0
    %4542 = vmatpush1.msra.mxu0 0.0
    %4543 = vmatprep.subr.mxu0 0.0
    %4544 = vmatpush1.msra.mxu0 0.0
    %4545 = vmatprep.subr.mxu0 0.0
    %4546 = vmatpush1.msra.mxu0 0.0
    %4547 = vmatprep.subr.mxu0 0.0
    %4548 = vmatpush1.msra.mxu0 0.0
    %4549 = vmatprep.subr.mxu0 0.0
    %4550 = vmatpush1.msra.mxu0 0.0
    %4551 = vmatprep.subr.mxu0 0.0
    %4552 = vmatpush1.msra.mxu0 0.0
    %4553 = vmatprep.subr.mxu0 0.0
    %4554 = vmatpush1.msra.mxu0 0.0
    %4555 = vmatprep.mubr.f32.mxu0 0.0
    %4556 = vmatmul.mubr.f32.gmra.mrb[0].mxu0 %v4483
    %v4557 = vpop.f32.mrb[0].mxu0
    %v4558 = vadd.f32 0.0, %v4557
    %v4559 = vpop.f32.mrb[0].mxu0
    %4560 = vmatprep.mubr.f32.mxu0 0.0
    %4561 = vmatmul.mubr.f32.gmra.mrb[0].mxu0 %v4486
    %v4562 = vpop.f32.mrb[0].mxu0
    %v4563 = vadd.f32 0.0, %v4562
    %v4564 = vpop.f32.mrb[0].mxu0
    %4565 = vmatprep.mubr.f32.mxu0 0.0
    %4566 = vmatmul.mubr.f32.gmra.mrb[0].mxu0 %v4489
    %v4567 = vpop.f32.mrb[0].mxu0
    %v4568 = vadd.f32 0.0, %v4567
    %v4569 = vpop.f32.mrb[0].mxu0
    %4570 = vdwg.mxu0
    %4571 = vmatprep.subr.mxu0 0.0
    %4572 = vmatpush1.msra.mxu0 %v4480
    %4573 = vmatprep.subr.mxu0 0.0
    %4574 = vmatpush1.msra.mxu0 0.0
    %4575 = vmatprep.subr.mxu0 0.0
    %4576 = vmatpush1.msra.mxu0 0.0
    %4577 = vmatprep.subr.mxu0 0.0
    %4578 = vmatpush1.msra.mxu0 0.0
    %4579 = vmatprep.subr.mxu0 0.0
    %4580 = vmatpush1.msra.mxu0 0.0
    %4581 = vmatprep.subr.mxu0 0.0
    %4582 = vmatpush1.msra.mxu0 0.0
    %4583 = vmatprep.subr.mxu0 0.0
    %4584 = vmatpush1.msra.mxu0 0.0
    %4585 = vmatprep.subr.mxu0 0.0
    %4586 = vmatpush1.msra.mxu0 0.0
    %4587 = vmatprep.subr.mxu0 0.0
    %4588 = vmatpush1.msra.mxu0 0.0
    %4589 = vmatprep.subr.mxu0 0.0
    %4590 = vmatpush1.msra.mxu0 0.0
    %4591 = vmatprep.subr.mxu0 0.0
    %4592 = vmatpush1.msra.mxu0 0.0
    %4593 = vmatprep.subr.mxu0 0.0
    %4594 = vmatpush1.msra.mxu0 0.0
    %4595 = vmatprep.subr.mxu0 0.0
    %4596 = vmatpush1.msra.mxu0 0.0
    %4597 = vmatprep.subr.mxu0 0.0
    %4598 = vmatpush1.msra.mxu0 0.0
    %4599 = vmatprep.subr.mxu0 0.0
    %4600 = vmatpush1.msra.mxu0 0.0
    %4601 = vmatprep.subr.mxu0 0.0
    %4602 = vmatpush1.msra.mxu0 0.0
    %4603 = vmatprep.subr.mxu0 0.0
    %4604 = vmatpush1.msra.mxu0 0.0
    %4605 = vmatprep.subr.mxu0 0.0
    %4606 = vmatpush1.msra.mxu0 0.0
    %4607 = vmatprep.subr.mxu0 0.0
    %4608 = vmatpush1.msra.mxu0 0.0
    %4609 = vmatprep.subr.mxu0 0.0
    %4610 = vmatpush1.msra.mxu0 0.0
    %4611 = vmatprep.subr.mxu0 0.0
    %4612 = vmatpush1.msra.mxu0 0.0
    %4613 = vmatprep.subr.mxu0 0.0
    %4614 = vmatpush1.msra.mxu0 0.0
    %4615 = vmatprep.subr.mxu0 0.0
    %4616 = vmatpush1.msra.mxu0 0.0
    %4617 = vmatprep.subr.mxu0 0.0
    %4618 = vmatpush1.msra.mxu0 0.0
    %4619 = vmatprep.subr.mxu0 0.0
    %4620 = vmatpush1.msra.mxu0 0.0
    %4621 = vmatprep.subr.mxu0 0.0
    %4622 = vmatpush1.msra.mxu0 0.0
    %4623 = vmatprep.subr.mxu0 0.0
    %4624 = vmatpush1.msra.mxu0 0.0
    %4625 = vmatprep.subr.mxu0 0.0
    %4626 = vmatpush1.msra.mxu0 0.0
    %4627 = vmatprep.subr.mxu0 0.0
    %4628 = vmatpush1.msra.mxu0 0.0
    %4629 = vmatprep.subr.mxu0 0.0
    %4630 = vmatpush1.msra.mxu0 0.0
    %4631 = vmatprep.subr.mxu0 0.0
    %4632 = vmatpush1.msra.mxu0 0.0
    %4633 = vmatprep.subr.mxu0 0.0
    %4634 = vmatpush1.msra.mxu0 0.0
    %4635 = vmatprep.mubr.f32.mxu0 0.0
    %4636 = vmatmul.mubr.f32.gmra.mrb[0].mxu0 %v2821
    %v4637 = vpop.f32.mrb[0].mxu0
    %v4638 = vadd.f32 %v4558, %v4637
    %v4639 = vpop.f32.mrb[0].mxu0
    %4640 = vmatprep.mubr.f32.mxu0 0.0
    %4641 = vmatmul.mubr.f32.gmra.mrb[0].mxu0 %v2824
    %v4642 = vpop.f32.mrb[0].mxu0
    %v4643 = vadd.f32 %v4563, %v4642
    %v4644 = vpop.f32.mrb[0].mxu0
    %4645 = vmatprep.mubr.f32.mxu0 0.0
    %4646 = vmatmul.mubr.f32.gmra.mrb[0].mxu0 %v2827
    %v4647 = vpop.f32.mrb[0].mxu0
    %v4648 = vadd.f32 %v4568, %v4647
    %v4649 = vpop.f32.mrb[0].mxu0
    %4650 = vdwg.mxu0
    %v4651 = vld [vmem:[%s63] sm:$0x1]
    %v4653 = vlaneseq
    %v4654 = vshrl.u32 %v4653, 7
    %v4655 = vsub.s32 0, %v4654
    %v4656 = vrot.slane %v4651, %v4655
    %v4658 = vadd.f32 %v4638, %v4656
    %v4659 = vadd.f32 %v4643, %v4656
    %v4660 = vadd.f32 %v4648, %v4656
    %v4662 = vsel %vm2626, %v2609, 0
    %v4665 = vsel %vm2626, %v2610, 0
    %v4668 = vsel %vm2626, %v2611, 0
    %v4671 = vsel %vm2626, %v2612, 0
    %v4674 = vsel %vm2626, %v4658, 0
    %v4677 = vsel %vm2626, %v4659, 0
    %v4680 = vsel %vm2626, %v4660, 0
    %4682 = vmatprep.subr.mxu0 0.0
    %4683 = vmatpush1.xpose.msra.mxu0 %v4674
    %4684 = vmatprep.subr.mxu0 0.0
    %4685 = vmatpush1.xpose.msra.mxu0 %v4677
    %4686 = vmatprep.subr.mxu0 0.0
    %4687 = vmatpush1.xpose.msra.mxu0 %v4680
    %4688 = vmatprep.subr.mxu0 0.0
    %4689 = vmatpush1.xpose.msra.mxu0 0.0
    %4690 = vmatprep.subr.mxu0 0.0
    %4691 = vmatpush1.xpose.msra.mxu0 0.0
    %4692 = vmatprep.subr.mxu0 0.0
    %4693 = vmatpush1.xpose.msra.mxu0 0.0
    %4694 = vmatprep.subr.mxu0 0.0
    %4695 = vmatpush1.xpose.msra.mxu0 0.0
    %4696 = vmatprep.subr.mxu0 0.0
    %4697 = vmatpush1.xpose.msra.mxu0 0.0
    %4698 = vmatprep.subr.mxu0 0.0
    %4699 = vmatpush1.xpose.msra.mxu0 0.0
    %4700 = vmatprep.subr.mxu0 0.0
    %4701 = vmatpush1.xpose.msra.mxu0 0.0
    %4702 = vmatprep.subr.mxu0 0.0
    %4703 = vmatpush1.xpose.msra.mxu0 0.0
    %4704 = vmatprep.subr.mxu0 0.0
    %4705 = vmatpush1.xpose.msra.mxu0 0.0
    %4706 = vmatprep.subr.mxu0 0.0
    %4707 = vmatpush1.xpose.msra.mxu0 0.0
    %4708 = vmatprep.subr.mxu0 0.0
    %4709 = vmatpush1.xpose.msra.mxu0 0.0
    %4710 = vmatprep.subr.mxu0 0.0
    %4711 = vmatpush1.xpose.msra.mxu0 0.0
    %4712 = vmatprep.subr.mxu0 0.0
    %4713 = vmatpush1.xpose.msra.mxu0 0.0
    %4714 = vmatprep.subr.mxu0 0.0
    %4715 = vmatpush1.xpose.msra.mxu0 0.0
    %4716 = vmatprep.subr.mxu0 0.0
    %4717 = vmatpush1.xpose.msra.mxu0 0.0
    %4718 = vmatprep.subr.mxu0 0.0
    %4719 = vmatpush1.xpose.msra.mxu0 0.0
    %4720 = vmatprep.subr.mxu0 0.0
    %4721 = vmatpush1.xpose.msra.mxu0 0.0
    %4722 = vmatprep.subr.mxu0 0.0
    %4723 = vmatpush1.xpose.msra.mxu0 0.0
    %4724 = vmatprep.subr.mxu0 0.0
    %4725 = vmatpush1.xpose.msra.mxu0 0.0
    %4726 = vmatprep.subr.mxu0 0.0
    %4727 = vmatpush1.xpose.msra.mxu0 0.0
    %4728 = vmatprep.subr.mxu0 0.0
    %4729 = vmatpush1.xpose.msra.mxu0 0.0
    %4730 = vmatprep.subr.mxu0 0.0
    %4731 = vmatpush1.xpose.msra.mxu0 0.0
    %4732 = vmatprep.subr.mxu0 0.0
    %4733 = vmatpush1.xpose.msra.mxu0 0.0
    %4734 = vmatprep.subr.mxu0 0.0
    %4735 = vmatpush1.xpose.msra.mxu0 0.0
    %4736 = vmatprep.subr.mxu0 0.0
    %4737 = vmatpush1.xpose.msra.mxu0 0.0
    %4738 = vmatprep.subr.mxu0 0.0
    %4739 = vmatpush1.xpose.msra.mxu0 0.0
    %4740 = vmatprep.subr.mxu0 0.0
    %4741 = vmatpush1.xpose.msra.mxu0 0.0
    %4742 = vmatprep.subr.mxu0 0.0
    %4743 = vmatpush1.xpose.msra.mxu0 0.0
    %4744 = vmatprep.subr.mxu0 0.0
    %4745 = vmatpush1.xpose.msra.mxu0 0.0
    %4746 = vmatprep.mubr.f32.mxu0 0.0
    %4747 = vmatmul.mubr.f32.gmra.mrb[0].mxu0 %v4662
    %v4748 = vpop.f32.mrb[0].mxu0
    %v4749 = vadd.f32 0.0, %v4748
    %v4750 = vpop.f32.mrb[0].mxu0
    %4751 = vmatprep.mubr.f32.mxu0 0.0
    %4752 = vmatmul.mubr.f32.gmra.mrb[0].mxu0 %v4665
    %v4753 = vpop.f32.mrb[0].mxu0
    %v4754 = vadd.f32 0.0, %v4753
    %v4755 = vpop.f32.mrb[0].mxu0
    %4756 = vmatprep.mubr.f32.mxu0 0.0
    %4757 = vmatmul.mubr.f32.gmra.mrb[0].mxu0 %v4668
    %v4758 = vpop.f32.mrb[0].mxu0
    %v4759 = vadd.f32 0.0, %v4758
    %v4760 = vpop.f32.mrb[0].mxu0
    %4761 = vmatprep.mubr.f32.mxu0 0.0
    %4762 = vmatmul.mubr.f32.gmra.mrb[0].mxu0 %v4671
    %v4763 = vpop.f32.mrb[0].mxu0
    %v4764 = vadd.f32 0.0, %v4763
    %v4765 = vpop.f32.mrb[0].mxu0
    %4766 = vdwg.mxu0
    %4767 = vst.msk [vmem:[%s65] sm:$0xff] %vm2723, %v4749
    %4768 = vst.msk [vmem:[%s65 + $0x8] sm:$0xff] %vm2723, %v4754
    %4769 = vst.msk [vmem:[%s65 + $0x10] sm:$0xff] %vm2723, %v4759
    %4770 = vst.msk [vmem:[%s65 + $0x18] sm:$0xff] %vm2723, %v4764
    %4771 = vst.msk [vmem:[%s67] sm:$0xff] %vm2626, %v2609
    %4772 = vst.msk [vmem:[%s67 + $0x8] sm:$0xff] %vm2626, %v2610
    %4773 = vst.msk [vmem:[%s67 + $0x10] sm:$0xff] %vm2626, %v2611
    %4774 = vst.msk [vmem:[%s67 + $0x18] sm:$0xff] %vm2626, %v2612
    %4775 = vst.msk [vmem:[%s69] sm:$0xff] %vm2626, %v4658
    %4776 = vst.msk [vmem:[%s69 + $0x8] sm:$0xff] %vm2626, %v4659
    %4777 = vst.msk [vmem:[%s69 + $0x10] sm:$0xff] %vm2626, %v4660
    // Predicated region
    $region186: #{tpu_custom_call.1} parent=1 // pred_check
      _
    $region187: #{tpu_custom_call.1} parent=1 // pred_check_branch
      %4779 = sbr.rel (0) target = $region189
    $region188: #{tpu_custom_call.1} parent=1 // pred_region
      _
    $region189: #{tpu_custom_call.1} parent=1 // pred_fallthru
      _
    // Predicated region
    $region190: #{tpu_custom_call.1} parent=1 // pred_check
      _
    $region191: #{tpu_custom_call.1} parent=1 // pred_check_branch
      %4781 = sbr.rel (0) target = $region193
    $region192: #{tpu_custom_call.1} parent=1 // pred_region
      _
    $region193: #{tpu_custom_call.1} parent=1 // pred_fallthru
      _
    // Predicated region
    $region194: #{tpu_custom_call.1} parent=1 // pred_check
      _
    $region195: #{tpu_custom_call.1} parent=1 // pred_check_branch
      %4783 = sbr.rel (0) target = $region197
    $region196: #{tpu_custom_call.1} parent=1 // pred_region
      _
    $region197: #{tpu_custom_call.1} parent=1 // pred_fallthru
      _
    // Predicated region
    $region198: #{tpu_custom_call.1} parent=1 // pred_check
      _
    $region199: #{tpu_custom_call.1} parent=1 // pred_check_branch
      %4785 = sbr.rel (0) target = $region201
    $region200: #{tpu_custom_call.1} parent=1 // pred_region
      _
    $region201: #{tpu_custom_call.1} parent=1 // pred_fallthru
      _
    // Predicated region
    $region202: #{tpu_custom_call.1} parent=1 // pred_check
      _
    $region203: #{tpu_custom_call.1} parent=1 // pred_check_branch
      %4787 = sbr.rel (0) target = $region205
    $region204: #{tpu_custom_call.1} parent=1 // pred_region
      _
    $region205: #{tpu_custom_call.1} parent=1 // pred_fallthru
      _
    // Predicated region
    $region206: #{tpu_custom_call.1} parent=1 // pred_check
      _
    $region207: #{tpu_custom_call.1} parent=1 // pred_check_branch
      %4789 = sbr.rel (0) target = $region209
    $region208: #{tpu_custom_call.1} parent=1 // pred_region
      _
    $region209: #{tpu_custom_call.1} parent=1 // pred_fallthru
      _
    %4790 = vsyncpa [#allocation3], 1
    %4791 = vsyncpa [#allocation5], 1
    %4792 = vsyncpa [#allocation8], 1
    %4793 = vsyncpa [#allocation11], 1
    %4794 = vsyncpa [#allocation14], 1
    %4795 = vsyncpa [#allocation17], 1
    %4796 = vsyncpa [#allocation20], 1
    %4797 = vsyncpa [#allocation23], 1

</llo_original>
